<compile_context>
chip_gen: v6e
topology: v6e:2x2x1
jax: 0.10.0
libtpu: 0.0.40
codegen_flags: <defaults>
</compile_context>

<pallas_src>
import numpy as np
import jax
import jax.numpy as jnp
from jax import lax
from jax.experimental import pallas as pl
from jax.experimental.pallas import tpu as pltpu


# ---------------------------------------------------------------------------
# Pallas kernels (all FLOPs of the network happen here)
# ---------------------------------------------------------------------------

def _conv_features_kernel(xe_ref, xo_ref, u1_ref, b1t_ref, t2_ref, b2t_ref,
                          o_ref):
    """Fused conv1 + ReLU + 2x2 max-pool + conv2 + ReLU for one image.

    xe/xo: even/odd input rows, (1, 16, 96) with lane layout c*32 + w.
    u1   : (6, 96, 105) Toeplitz factors, index px*3+dy; output lanes j*7+o.
    t2   : (3, 105, 208) Toeplitz factors, index dy; output lanes j*16+o.
    o    : (1, 13, 208) conv2+ReLU features, lanes j*16+o.
    """
    xe = xe_ref[0]                      # (16, 96)
    xo = xo_ref[0]                      # (16, 96)
    b1t = b1t_ref[...]                  # (1, 105)
    b2t = b2t_ref[...]                  # (1, 208)

    # rows[s][i, :] is image row 2*i + s  (s = 0..3), each (15, 96).
    rows = (xe[0:15, :], xo[0:15, :], xe[1:16, :], xo[1:16, :])

    # conv1 + ReLU + pool: pool(relu(conv)) == max over the 4 (py,px)
    # positions of relu(conv at that position); each position is a sum of
    # three row-shifted Toeplitz matmuls.
    pooled = None
    for py in range(2):
        for px in range(2):
            acc = b1t
            for dy in range(3):
                acc = acc + jnp.dot(rows[py + dy], u1_ref[px * 3 + dy],
                                    preferred_element_type=jnp.float32)
            branch = jnp.maximum(acc, 0.0)                  # (15, 105)
            pooled = branch if pooled is None else jnp.maximum(pooled, branch)

    # conv2 + ReLU on the VMEM-resident pooled map.
    acc2 = b2t
    for dy in range(3):
        acc2 = acc2 + jnp.dot(pooled[dy:dy + 13, :], t2_ref[dy],
                              preferred_element_type=jnp.float32)
    feat = jnp.maximum(acc2, 0.0)                           # (13, 208)
    o_ref[0] = feat.astype(o_ref.dtype)


def _mlp_kernel(x_ref, w1_ref, b1_ref, w2_ref, b2_ref, w3_ref, b3_ref, o_ref):
    """fc1+ReLU -> fc2+ReLU -> fc3+sigmoid (weights are full-array blocks)."""
    h = jnp.dot(x_ref[...], w1_ref[...], preferred_element_type=jnp.float32)
    h = jnp.maximum(h + b1_ref[...], 0.0)
    h = jnp.dot(h, w2_ref[...], preferred_element_type=jnp.float32)
    h = jnp.maximum(h + b2_ref[...], 0.0)
    h = jnp.dot(h, w3_ref[...], preferred_element_type=jnp.float32)
    o_ref[...] = jax.nn.sigmoid(h + b3_ref[...]).astype(o_ref.dtype)


# ---------------------------------------------------------------------------
# One-time parameter layout preparation (host side, outside the hot path)
# ---------------------------------------------------------------------------

def _round_up(n, m):
    return (n + m - 1) // m * m


def prepare_params(params):
    """Precompute all kernel-side weight layouts from PyTorch-layout params."""
    (w_c1, b_c1, w_c2, b_c2,
     w_f1, b_f1, w_f2, b_f2, w_f3, b_f3) = params

    w1 = np.asarray(w_c1, np.float32)           # (7, 3, 3, 3)  OIHW
    b1 = np.asarray(b_c1, np.float32)
    w2 = np.asarray(w_c2, np.float32)           # (16, 7, 3, 3) OIHW
    b2 = np.asarray(b_c2, np.float32)

    # conv1 row-Toeplitz factors U1[px*3+dy]: (96 -> 105) maps an input row
    # (lane = c*32 + w) to the 15 pooled-column outputs (lane = j*7 + o) for
    # pool branch px and kernel row dy.
    U1 = np.zeros((2, 3, 96, 105), np.float32)
    for px in range(2):
        for dy in range(3):
            for dx in range(3):
                for j in range(15):
                    w = 2 * j + px + dx                     # input column, <=31
                    for c in range(3):
                        U1[px, dy, c * 32 + w, j * 7:(j + 1) * 7] = w1[:, c, dy, dx]
    U1 = U1.reshape(6, 96, 105)
    b1t = np.tile(b1, 15)[None, :]                          # (1, 105)

    # conv2 row-Toeplitz factors T2[dy]: (105 -> 208), input lane jin*7+c,
    # output lane jout*16+o.
    T2 = np.zeros((3, 105, 208), np.float32)
    for dy in range(3):
        for dx in range(3):
            for jout in range(13):
                jin = jout + dx                             # <= 14
                for c in range(7):
                    T2[dy, jin * 7 + c, jout * 16:(jout + 1) * 16] = w2[:, c, dy, dx]
    b2t = np.tile(b2, 13)[None, :]                          # (1, 208)

    # fc1: fold the torch NCHW-flatten permutation into the row order so the
    # kernel-side feature layout (row i, lane j*16+o) flattens directly.
    wf1 = np.asarray(w_f1, np.float32).reshape(130, 16, 13, 13)   # [n, o, i, j]
    W1p = np.ascontiguousarray(wf1.transpose(2, 3, 1, 0)).reshape(2704, 130)
    b1p = np.asarray(b_f1, np.float32)[None, :]             # (1, 130)
    W2p = np.ascontiguousarray(np.asarray(w_f2, np.float32).T)    # (130, 72)
    b2p = np.asarray(b_f2, np.float32)[None, :]             # (1, 72)
    W3p = np.ascontiguousarray(np.asarray(w_f3, np.float32).T)    # (72, 10)
    b3p = np.asarray(b_f3, np.float32)[None, :]             # (1, 10)

    prep = (U1, b1t, T2, b2t, W1p, b1p, W2p, b2p, W3p, b3p)
    return tuple(jnp.asarray(a) for a in prep)


# ---------------------------------------------------------------------------
# Forward pass wrapper
# ---------------------------------------------------------------------------

@jax.jit
def conv_nn_forward(x_nchw, prepped):
    """Pallas implementation of ConvolutionalNN.forward.

    x_nchw: (B, 3, 32, 32) f32.  prepped: output of prepare_params().
    Returns (B, 10) f32.
    """
    (U1, b1t, T2, b2t, W1p, b1p, W2p, b2p, W3p, b3p) = prepped
    B = x_nchw.shape[0]
    assert x_nchw.shape[1:] == (3, 32, 32)
    f32 = jnp.float32

    # Input rows with lane layout c*32 + w (only a middle-dim transpose),
    # split by row parity so the kernel needs only contiguous slices.
    xr = jnp.transpose(x_nchw.astype(f32), (0, 2, 1, 3)).reshape(B, 32, 96)
    xp = xr.reshape(B, 16, 2, 96)
    xe = xp[:, :, 0, :]                                     # rows 0,2,...,30
    xo = xp[:, :, 1, :]                                     # rows 1,3,...,31

    # ---- fused conv1 + ReLU + pool + conv2 + ReLU, gridded over batch ----
    conv_cost = pl.CostEstimate(
        flops=B * (4 * 3 * 2 * 15 * 96 * 105 + 3 * 2 * 13 * 105 * 208),
        transcendentals=0,
        bytes_accessed=4 * (B * 2 * 16 * 96 + U1.size + b1t.size
                            + T2.size + b2t.size + B * 13 * 208),
    )
    feat = pl.pallas_call(
        _conv_features_kernel,
        out_shape=jax.ShapeDtypeStruct((B, 13, 208), f32),
        grid_spec=pltpu.PrefetchScalarGridSpec(
            num_scalar_prefetch=0,
            grid=(B,),
            in_specs=[
                pl.BlockSpec((1, 16, 96), lambda b: (b, 0, 0)),    # xe
                pl.BlockSpec((1, 16, 96), lambda b: (b, 0, 0)),    # xo
                pl.BlockSpec((6, 96, 105), lambda b: (0, 0, 0)),   # U1 (resident)
                pl.BlockSpec((1, 105), lambda b: (0, 0)),          # b1t
                pl.BlockSpec((3, 105, 208), lambda b: (0, 0, 0)),  # T2 (resident)
                pl.BlockSpec((1, 208), lambda b: (0, 0)),          # b2t
            ],
            out_specs=pl.BlockSpec((1, 13, 208), lambda b: (b, 0, 0)),
        ),
        compiler_params=pltpu.CompilerParams(
            dimension_semantics=("parallel",)),
        cost_estimate=conv_cost,
    )(xe, xo, U1, b1t, T2, b2t)

    # Torch's NCHW flatten permutation is folded into W1p, so this is a pure
    # row-major reshape (no transpose).
    x_fc = feat.reshape(B, 2704)

    # ---- fused fc1/fc2/fc3 + sigmoid, gridded over batch row-tiles --------
    if B <= 256:
        TB, BP = B, B
    else:
        TB = 256
        BP = _round_up(B, TB)
        x_fc = jnp.pad(x_fc, ((0, BP - B), (0, 0)))

    mlp_cost = pl.CostEstimate(
        flops=2 * BP * (2704 * 130 + 130 * 72 + 72 * 10),
        transcendentals=BP * 10,
        bytes_accessed=4 * (BP * 2704 + 2704 * 130 + 130 + 130 * 72 + 72
                            + 72 * 10 + 10 + BP * 10),
    )
    out = pl.pallas_call(
        _mlp_kernel,
        out_shape=jax.ShapeDtypeStruct((BP, 10), f32),
        grid_spec=pltpu.PrefetchScalarGridSpec(
            num_scalar_prefetch=0,
            grid=(BP // TB,),
            in_specs=[
                pl.BlockSpec((TB, 2704), lambda i: (i, 0)),
                pl.BlockSpec((2704, 130), lambda i: (0, 0)),       # resident
                pl.BlockSpec((1, 130), lambda i: (0, 0)),
                pl.BlockSpec((130, 72), lambda i: (0, 0)),
                pl.BlockSpec((1, 72), lambda i: (0, 0)),
                pl.BlockSpec((72, 10), lambda i: (0, 0)),
                pl.BlockSpec((1, 10), lambda i: (0, 0)),
            ],
            out_specs=pl.BlockSpec((TB, 10), lambda i: (i, 0)),
        ),
        compiler_params=pltpu.CompilerParams(
            dimension_semantics=("parallel",)),
        cost_estimate=mlp_cost,
    )(x_fc, W1p, b1p, W2p, b2p, W3p, b3p)

    return out[:B]


# ---------------------------------------------------------------------------
# Pure-JAX reference of the same PyTorch forward pass
# ---------------------------------------------------------------------------

def reference_forward(x, params):
    (w_c1, b_c1, w_c2, b_c2,
     w_f1, b_f1, w_f2, b_f2, w_f3, b_f3) = params
    dn = ("NCHW", "OIHW", "NCHW")
    hi = lax.Precision.HIGHEST
    out = lax.conv_general_dilated(x, w_c1, (1, 1), "VALID",
                                   dimension_numbers=dn, precision=hi)
    out = jax.nn.relu(out + b_c1[None, :, None, None])
    Bc, C, H, W = out.shape
    out = out.reshape(Bc, C, H // 2, 2, W // 2, 2).max(axis=(3, 5))   # maxpool 2x2
    out = lax.conv_general_dilated(out, w_c2, (1, 1), "VALID",
                                   dimension_numbers=dn, precision=hi)
    out = jax.nn.relu(out + b_c2[None, :, None, None])
    out = out.reshape(out.shape[0], -1)                               # torch .view(B,-1)
    out = jax.nn.relu(jnp.dot(out, w_f1.T, precision=hi) + b_f1)
    out = jax.nn.relu(jnp.dot(out, w_f2.T, precision=hi) + b_f2)
    out = jax.nn.sigmoid(jnp.dot(out, w_f3.T, precision=hi) + b_f3)
    return out


if __name__ == "__main__":
    key = jax.random.PRNGKey(0)
    ks = jax.random.split(key, 11)

    B = 2
    # Input shape implied by the module: fc1 expects 16*13*13 => 32x32 images.
    x = jax.random.normal(ks[0], (B, 3, 32, 32), dtype=jnp.float32)

    def uniform(k, shape, fan_in):
        bound = 1.0 / (fan_in ** 0.5)
        return jax.random.uniform(k, shape, jnp.float32, -bound, bound)

    params = (
        uniform(ks[1], (7, 3, 3, 3), 27),   uniform(ks[2], (7,), 27),        # conv1
        uniform(ks[3], (16, 7, 3, 3), 63),  uniform(ks[4], (16,), 63),       # conv2
        uniform(ks[5], (130, 2704), 2704),  uniform(ks[6], (130,), 2704),    # fc1
        uniform(ks[7], (72, 130), 130),     uniform(ks[8], (72,), 130),      # fc2
        uniform(ks[9], (10, 72), 72),       uniform(ks[10], (10,), 72),      # fc3
    )

    prepped = prepare_params(params)      # one-time weight layout prep

    out = conv_nn_forward(x, prepped)
    out = jax.block_until_ready(out)

    ref = reference_forward(x, params)
    assert out.shape == (B, 10)
    assert jnp.allclose(out, ref, atol=1e-4, rtol=1e-4), \
        float(jnp.max(jnp.abs(out - ref)))

    print("KERNEL_OK")
</pallas_src>

<mosaic_0001>
module attributes {stable_mosaic.version = 11 : i64} {
  func.func @_conv_features_kernel(%arg0: i32, %arg1: memref<1x16x96xf32, #tpu.memory_space<vmem>>, %arg2: memref<1x16x96xf32, #tpu.memory_space<vmem>>, %arg3: memref<6x96x105xf32, #tpu.memory_space<vmem>>, %arg4: memref<1x105xf32, #tpu.memory_space<vmem>>, %arg5: memref<3x105x208xf32, #tpu.memory_space<vmem>>, %arg6: memref<1x208xf32, #tpu.memory_space<vmem>>, %arg7: memref<1x13x208xf32, #tpu.memory_space<vmem>>) attributes {dimension_semantics = [#tpu.dimension_semantics<parallel>], iteration_bounds = array<i64: 2>, scalar_prefetch = 0 : i64, scratch_operands = 0 : i64, tpu.core_type = #tpu.core_type<tc>, window_params = [{transform_indices = @transform_0, window_bounds = array<i64: 1, 16, 96>}, {transform_indices = @transform_1, window_bounds = array<i64: 1, 16, 96>}, {pipeline_mode = #tpu.pipeline_mode<synchronous>, transform_indices = @transform_2, window_bounds = array<i64: 6, 96, 105>}, {pipeline_mode = #tpu.pipeline_mode<synchronous>, transform_indices = @transform_3, window_bounds = array<i64: 1, 105>}, {pipeline_mode = #tpu.pipeline_mode<synchronous>, transform_indices = @transform_4, window_bounds = array<i64: 3, 105, 208>}, {pipeline_mode = #tpu.pipeline_mode<synchronous>, transform_indices = @transform_5, window_bounds = array<i64: 1, 208>}, {transform_indices = @transform_6, window_bounds = array<i64: 1, 13, 208>}]} {
    %c0 = arith.constant 0 : index
    %c0_0 = arith.constant 0 : index
    %c0_1 = arith.constant 0 : index
    %0 = vector.load %arg1[%c0, %c0_0, %c0_1] : memref<1x16x96xf32, #tpu.memory_space<vmem>>, vector<1x16x96xf32>
    %1 = vector.shape_cast %0 : vector<1x16x96xf32> to vector<16x96xf32>
    %c0_2 = arith.constant 0 : index
    %c0_3 = arith.constant 0 : index
    %c0_4 = arith.constant 0 : index
    %2 = vector.load %arg2[%c0_2, %c0_3, %c0_4] : memref<1x16x96xf32, #tpu.memory_space<vmem>>, vector<1x16x96xf32>
    %3 = vector.shape_cast %2 : vector<1x16x96xf32> to vector<16x96xf32>
    %c0_5 = arith.constant 0 : index
    %c0_6 = arith.constant 0 : index
    %4 = vector.load %arg4[%c0_5, %c0_6] : memref<1x105xf32, #tpu.memory_space<vmem>>, vector<1x105xf32>
    %c0_7 = arith.constant 0 : index
    %c0_8 = arith.constant 0 : index
    %5 = vector.load %arg6[%c0_7, %c0_8] : memref<1x208xf32, #tpu.memory_space<vmem>>, vector<1x208xf32>
    %6 = vector.extract_strided_slice %1 {offsets = [0, 0], sizes = [15, 96], strides = [1, 1]} : vector<16x96xf32> to vector<15x96xf32>
    %7 = vector.extract_strided_slice %3 {offsets = [0, 0], sizes = [15, 96], strides = [1, 1]} : vector<16x96xf32> to vector<15x96xf32>
    %8 = vector.extract_strided_slice %1 {offsets = [1, 0], sizes = [15, 96], strides = [1, 1]} : vector<16x96xf32> to vector<15x96xf32>
    %9 = vector.extract_strided_slice %3 {offsets = [1, 0], sizes = [15, 96], strides = [1, 1]} : vector<16x96xf32> to vector<15x96xf32>
    %c0_9 = arith.constant 0 : index
    %c0_10 = arith.constant 0 : index
    %c0_11 = arith.constant 0 : index
    %10 = vector.load %arg3[%c0_9, %c0_10, %c0_11] : memref<6x96x105xf32, #tpu.memory_space<vmem>>, vector<1x96x105xf32>
    %11 = vector.shape_cast %10 : vector<1x96x105xf32> to vector<96x105xf32>
    %cst = arith.constant dense<0.000000e+00> : vector<15x105xf32>
    %12 = tpu.matmul %6, %11, %cst {dimension_numbers = #tpu.dot_dimension_numbers<[1], [0], [0], [1], [0, 0, 1, 1], [], []>} : vector<15x96xf32>, vector<96x105xf32>, vector<15x105xf32> -> vector<15x105xf32>
    %13 = vector.broadcast %4 : vector<1x105xf32> to vector<15x105xf32>
    %14 = arith.addf %13, %12 : vector<15x105xf32>
    %c1 = arith.constant 1 : index
    %c0_12 = arith.constant 0 : index
    %c0_13 = arith.constant 0 : index
    %15 = vector.load %arg3[%c1, %c0_12, %c0_13] : memref<6x96x105xf32, #tpu.memory_space<vmem>>, vector<1x96x105xf32>
    %16 = vector.shape_cast %15 : vector<1x96x105xf32> to vector<96x105xf32>
    %cst_14 = arith.constant dense<0.000000e+00> : vector<15x105xf32>
    %17 = tpu.matmul %7, %16, %cst_14 {dimension_numbers = #tpu.dot_dimension_numbers<[1], [0], [0], [1], [0, 0, 1, 1], [], []>} : vector<15x96xf32>, vector<96x105xf32>, vector<15x105xf32> -> vector<15x105xf32>
    %18 = arith.addf %14, %17 : vector<15x105xf32>
    %c2 = arith.constant 2 : index
    %c0_15 = arith.constant 0 : index
    %c0_16 = arith.constant 0 : index
    %19 = vector.load %arg3[%c2, %c0_15, %c0_16] : memref<6x96x105xf32, #tpu.memory_space<vmem>>, vector<1x96x105xf32>
    %20 = vector.shape_cast %19 : vector<1x96x105xf32> to vector<96x105xf32>
    %cst_17 = arith.constant dense<0.000000e+00> : vector<15x105xf32>
    %21 = tpu.matmul %8, %20, %cst_17 {dimension_numbers = #tpu.dot_dimension_numbers<[1], [0], [0], [1], [0, 0, 1, 1], [], []>} : vector<15x96xf32>, vector<96x105xf32>, vector<15x105xf32> -> vector<15x105xf32>
    %22 = arith.addf %18, %21 : vector<15x105xf32>
    %cst_18 = arith.constant 0.000000e+00 : f32
    %23 = vector.broadcast %cst_18 : f32 to vector<15x105xf32>
    %24 = arith.maximumf %22, %23 : vector<15x105xf32>
    %c3 = arith.constant 3 : index
    %c0_19 = arith.constant 0 : index
    %c0_20 = arith.constant 0 : index
    %25 = vector.load %arg3[%c3, %c0_19, %c0_20] : memref<6x96x105xf32, #tpu.memory_space<vmem>>, vector<1x96x105xf32>
    %26 = vector.shape_cast %25 : vector<1x96x105xf32> to vector<96x105xf32>
    %cst_21 = arith.constant dense<0.000000e+00> : vector<15x105xf32>
    %27 = tpu.matmul %6, %26, %cst_21 {dimension_numbers = #tpu.dot_dimension_numbers<[1], [0], [0], [1], [0, 0, 1, 1], [], []>} : vector<15x96xf32>, vector<96x105xf32>, vector<15x105xf32> -> vector<15x105xf32>
    %28 = vector.broadcast %4 : vector<1x105xf32> to vector<15x105xf32>
    %29 = arith.addf %28, %27 : vector<15x105xf32>
    %c4 = arith.constant 4 : index
    %c0_22 = arith.constant 0 : index
    %c0_23 = arith.constant 0 : index
    %30 = vector.load %arg3[%c4, %c0_22, %c0_23] : memref<6x96x105xf32, #tpu.memory_space<vmem>>, vector<1x96x105xf32>
    %31 = vector.shape_cast %30 : vector<1x96x105xf32> to vector<96x105xf32>
    %cst_24 = arith.constant dense<0.000000e+00> : vector<15x105xf32>
    %32 = tpu.matmul %7, %31, %cst_24 {dimension_numbers = #tpu.dot_dimension_numbers<[1], [0], [0], [1], [0, 0, 1, 1], [], []>} : vector<15x96xf32>, vector<96x105xf32>, vector<15x105xf32> -> vector<15x105xf32>
    %33 = arith.addf %29, %32 : vector<15x105xf32>
    %c5 = arith.constant 5 : index
    %c0_25 = arith.constant 0 : index
    %c0_26 = arith.constant 0 : index
    %34 = vector.load %arg3[%c5, %c0_25, %c0_26] : memref<6x96x105xf32, #tpu.memory_space<vmem>>, vector<1x96x105xf32>
    %35 = vector.shape_cast %34 : vector<1x96x105xf32> to vector<96x105xf32>
    %cst_27 = arith.constant dense<0.000000e+00> : vector<15x105xf32>
    %36 = tpu.matmul %8, %35, %cst_27 {dimension_numbers = #tpu.dot_dimension_numbers<[1], [0], [0], [1], [0, 0, 1, 1], [], []>} : vector<15x96xf32>, vector<96x105xf32>, vector<15x105xf32> -> vector<15x105xf32>
    %37 = arith.addf %33, %36 : vector<15x105xf32>
    %cst_28 = arith.constant 0.000000e+00 : f32
    %38 = vector.broadcast %cst_28 : f32 to vector<15x105xf32>
    %39 = arith.maximumf %37, %38 : vector<15x105xf32>
    %40 = arith.maximumf %24, %39 : vector<15x105xf32>
    %c0_29 = arith.constant 0 : index
    %c0_30 = arith.constant 0 : index
    %c0_31 = arith.constant 0 : index
    %41 = vector.load %arg3[%c0_29, %c0_30, %c0_31] : memref<6x96x105xf32, #tpu.memory_space<vmem>>, vector<1x96x105xf32>
    %42 = vector.shape_cast %41 : vector<1x96x105xf32> to vector<96x105xf32>
    %cst_32 = arith.constant dense<0.000000e+00> : vector<15x105xf32>
    %43 = tpu.matmul %7, %42, %cst_32 {dimension_numbers = #tpu.dot_dimension_numbers<[1], [0], [0], [1], [0, 0, 1, 1], [], []>} : vector<15x96xf32>, vector<96x105xf32>, vector<15x105xf32> -> vector<15x105xf32>
    %44 = vector.broadcast %4 : vector<1x105xf32> to vector<15x105xf32>
    %45 = arith.addf %44, %43 : vector<15x105xf32>
    %c1_33 = arith.constant 1 : index
    %c0_34 = arith.constant 0 : index
    %c0_35 = arith.constant 0 : index
    %46 = vector.load %arg3[%c1_33, %c0_34, %c0_35] : memref<6x96x105xf32, #tpu.memory_space<vmem>>, vector<1x96x105xf32>
    %47 = vector.shape_cast %46 : vector<1x96x105xf32> to vector<96x105xf32>
    %cst_36 = arith.constant dense<0.000000e+00> : vector<15x105xf32>
    %48 = tpu.matmul %8, %47, %cst_36 {dimension_numbers = #tpu.dot_dimension_numbers<[1], [0], [0], [1], [0, 0, 1, 1], [], []>} : vector<15x96xf32>, vector<96x105xf32>, vector<15x105xf32> -> vector<15x105xf32>
    %49 = arith.addf %45, %48 : vector<15x105xf32>
    %c2_37 = arith.constant 2 : index
    %c0_38 = arith.constant 0 : index
    %c0_39 = arith.constant 0 : index
    %50 = vector.load %arg3[%c2_37, %c0_38, %c0_39] : memref<6x96x105xf32, #tpu.memory_space<vmem>>, vector<1x96x105xf32>
    %51 = vector.shape_cast %50 : vector<1x96x105xf32> to vector<96x105xf32>
    %cst_40 = arith.constant dense<0.000000e+00> : vector<15x105xf32>
    %52 = tpu.matmul %9, %51, %cst_40 {dimension_numbers = #tpu.dot_dimension_numbers<[1], [0], [0], [1], [0, 0, 1, 1], [], []>} : vector<15x96xf32>, vector<96x105xf32>, vector<15x105xf32> -> vector<15x105xf32>
    %53 = arith.addf %49, %52 : vector<15x105xf32>
    %cst_41 = arith.constant 0.000000e+00 : f32
    %54 = vector.broadcast %cst_41 : f32 to vector<15x105xf32>
    %55 = arith.maximumf %53, %54 : vector<15x105xf32>
    %56 = arith.maximumf %40, %55 : vector<15x105xf32>
    %c3_42 = arith.constant 3 : index
    %c0_43 = arith.constant 0 : index
    %c0_44 = arith.constant 0 : index
    %57 = vector.load %arg3[%c3_42, %c0_43, %c0_44] : memref<6x96x105xf32, #tpu.memory_space<vmem>>, vector<1x96x105xf32>
    %58 = vector.shape_cast %57 : vector<1x96x105xf32> to vector<96x105xf32>
    %cst_45 = arith.constant dense<0.000000e+00> : vector<15x105xf32>
    %59 = tpu.matmul %7, %58, %cst_45 {dimension_numbers = #tpu.dot_dimension_numbers<[1], [0], [0], [1], [0, 0, 1, 1], [], []>} : vector<15x96xf32>, vector<96x105xf32>, vector<15x105xf32> -> vector<15x105xf32>
    %60 = vector.broadcast %4 : vector<1x105xf32> to vector<15x105xf32>
    %61 = arith.addf %60, %59 : vector<15x105xf32>
    %c4_46 = arith.constant 4 : index
    %c0_47 = arith.constant 0 : index
    %c0_48 = arith.constant 0 : index
    %62 = vector.load %arg3[%c4_46, %c0_47, %c0_48] : memref<6x96x105xf32, #tpu.memory_space<vmem>>, vector<1x96x105xf32>
    %63 = vector.shape_cast %62 : vector<1x96x105xf32> to vector<96x105xf32>
    %cst_49 = arith.constant dense<0.000000e+00> : vector<15x105xf32>
    %64 = tpu.matmul %8, %63, %cst_49 {dimension_numbers = #tpu.dot_dimension_numbers<[1], [0], [0], [1], [0, 0, 1, 1], [], []>} : vector<15x96xf32>, vector<96x105xf32>, vector<15x105xf32> -> vector<15x105xf32>
    %65 = arith.addf %61, %64 : vector<15x105xf32>
    %c5_50 = arith.constant 5 : index
    %c0_51 = arith.constant 0 : index
    %c0_52 = arith.constant 0 : index
    %66 = vector.load %arg3[%c5_50, %c0_51, %c0_52] : memref<6x96x105xf32, #tpu.memory_space<vmem>>, vector<1x96x105xf32>
    %67 = vector.shape_cast %66 : vector<1x96x105xf32> to vector<96x105xf32>
    %cst_53 = arith.constant dense<0.000000e+00> : vector<15x105xf32>
    %68 = tpu.matmul %9, %67, %cst_53 {dimension_numbers = #tpu.dot_dimension_numbers<[1], [0], [0], [1], [0, 0, 1, 1], [], []>} : vector<15x96xf32>, vector<96x105xf32>, vector<15x105xf32> -> vector<15x105xf32>
    %69 = arith.addf %65, %68 : vector<15x105xf32>
    %cst_54 = arith.constant 0.000000e+00 : f32
    %70 = vector.broadcast %cst_54 : f32 to vector<15x105xf32>
    %71 = arith.maximumf %69, %70 : vector<15x105xf32>
    %72 = arith.maximumf %56, %71 : vector<15x105xf32>
    %73 = vector.extract_strided_slice %72 {offsets = [0, 0], sizes = [13, 105], strides = [1, 1]} : vector<15x105xf32> to vector<13x105xf32>
    %c0_55 = arith.constant 0 : index
    %c0_56 = arith.constant 0 : index
    %c0_57 = arith.constant 0 : index
    %74 = vector.load %arg5[%c0_55, %c0_56, %c0_57] : memref<3x105x208xf32, #tpu.memory_space<vmem>>, vector<1x105x208xf32>
    %75 = vector.shape_cast %74 : vector<1x105x208xf32> to vector<105x208xf32>
    %cst_58 = arith.constant dense<0.000000e+00> : vector<13x208xf32>
    %76 = tpu.matmul %73, %75, %cst_58 {dimension_numbers = #tpu.dot_dimension_numbers<[1], [0], [0], [1], [0, 0, 1, 1], [], []>} : vector<13x105xf32>, vector<105x208xf32>, vector<13x208xf32> -> vector<13x208xf32>
    %77 = vector.broadcast %5 : vector<1x208xf32> to vector<13x208xf32>
    %78 = arith.addf %77, %76 : vector<13x208xf32>
    %79 = vector.extract_strided_slice %72 {offsets = [1, 0], sizes = [13, 105], strides = [1, 1]} : vector<15x105xf32> to vector<13x105xf32>
    %c1_59 = arith.constant 1 : index
    %c0_60 = arith.constant 0 : index
    %c0_61 = arith.constant 0 : index
    %80 = vector.load %arg5[%c1_59, %c0_60, %c0_61] : memref<3x105x208xf32, #tpu.memory_space<vmem>>, vector<1x105x208xf32>
    %81 = vector.shape_cast %80 : vector<1x105x208xf32> to vector<105x208xf32>
    %cst_62 = arith.constant dense<0.000000e+00> : vector<13x208xf32>
    %82 = tpu.matmul %79, %81, %cst_62 {dimension_numbers = #tpu.dot_dimension_numbers<[1], [0], [0], [1], [0, 0, 1, 1], [], []>} : vector<13x105xf32>, vector<105x208xf32>, vector<13x208xf32> -> vector<13x208xf32>
    %83 = arith.addf %78, %82 : vector<13x208xf32>
    %84 = vector.extract_strided_slice %72 {offsets = [2, 0], sizes = [13, 105], strides = [1, 1]} : vector<15x105xf32> to vector<13x105xf32>
    %c2_63 = arith.constant 2 : index
    %c0_64 = arith.constant 0 : index
    %c0_65 = arith.constant 0 : index
    %85 = vector.load %arg5[%c2_63, %c0_64, %c0_65] : memref<3x105x208xf32, #tpu.memory_space<vmem>>, vector<1x105x208xf32>
    %86 = vector.shape_cast %85 : vector<1x105x208xf32> to vector<105x208xf32>
    %cst_66 = arith.constant dense<0.000000e+00> : vector<13x208xf32>
    %87 = tpu.matmul %84, %86, %cst_66 {dimension_numbers = #tpu.dot_dimension_numbers<[1], [0], [0], [1], [0, 0, 1, 1], [], []>} : vector<13x105xf32>, vector<105x208xf32>, vector<13x208xf32> -> vector<13x208xf32>
    %88 = arith.addf %83, %87 : vector<13x208xf32>
    %cst_67 = arith.constant 0.000000e+00 : f32
    %89 = vector.broadcast %cst_67 : f32 to vector<13x208xf32>
    %90 = arith.maximumf %88, %89 : vector<13x208xf32>
    %c0_68 = arith.constant 0 : index
    %c0_69 = arith.constant 0 : index
    %c0_70 = arith.constant 0 : index
    %91 = vector.load %arg7[%c0_68, %c0_69, %c0_70] : memref<1x13x208xf32, #tpu.memory_space<vmem>>, vector<1x13x208xf32>
    %92 = vector.shape_cast %91 : vector<1x13x208xf32> to vector<13x208xf32>
    %93 = vector.shape_cast %90 : vector<13x208xf32> to vector<1x13x208xf32>
    tpu.vector_store %arg7[%c0_68, %c0_69, %c0_70], %93 {strides = array<i32>} : memref<1x13x208xf32, #tpu.memory_space<vmem>>, vector<1x13x208xf32>,
    return
  }
  func.func @transform_0(%arg0: i32) -> (i32, i32, i32) {
    %c0_i32 = arith.constant 0 : i32
    %c0_i32_0 = arith.constant 0 : i32
    %c0_i32_1 = arith.constant 0 : i32
    return %arg0, %c0_i32, %c0_i32_0 : i32, i32, i32
  }
  func.func @transform_1(%arg0: i32) -> (i32, i32, i32) {
    %c0_i32 = arith.constant 0 : i32
    %c0_i32_0 = arith.constant 0 : i32
    %c0_i32_1 = arith.constant 0 : i32
    return %arg0, %c0_i32, %c0_i32_0 : i32, i32, i32
  }
  func.func @transform_2(%arg0: i32) -> (i32, i32, i32) {
    %c0_i32 = arith.constant 0 : i32
    %c0_i32_0 = arith.constant 0 : i32
    %c0_i32_1 = arith.constant 0 : i32
    %c0_i32_2 = arith.constant 0 : i32
    return %c0_i32, %c0_i32_0, %c0_i32_1 : i32, i32, i32
  }
  func.func @transform_3(%arg0: i32) -> (i32, i32) {
    %c0_i32 = arith.constant 0 : i32
    %c0_i32_0 = arith.constant 0 : i32
    %c0_i32_1 = arith.constant 0 : i32
    return %c0_i32, %c0_i32_0 : i32, i32
  }
  func.func @transform_4(%arg0: i32) -> (i32, i32, i32) {
    %c0_i32 = arith.constant 0 : i32
    %c0_i32_0 = arith.constant 0 : i32
    %c0_i32_1 = arith.constant 0 : i32
    %c0_i32_2 = arith.constant 0 : i32
    return %c0_i32, %c0_i32_0, %c0_i32_1 : i32, i32, i32
  }
  func.func @transform_5(%arg0: i32) -> (i32, i32) {
    %c0_i32 = arith.constant 0 : i32
    %c0_i32_0 = arith.constant 0 : i32
    %c0_i32_1 = arith.constant 0 : i32
    return %c0_i32, %c0_i32_0 : i32, i32
  }
  func.func @transform_6(%arg0: i32) -> (i32, i32, i32) {
    %c0_i32 = arith.constant 0 : i32
    %c0_i32_0 = arith.constant 0 : i32
    %c0_i32_1 = arith.constant 0 : i32
    return %arg0, %c0_i32, %c0_i32_0 : i32, i32, i32
  }
}

module attributes {stable_mosaic.version = 11 : i64} {
  func.func @_mlp_kernel(%arg0: i32, %arg1: memref<2x2704xf32, #tpu.memory_space<vmem>>, %arg2: memref<2704x130xf32, #tpu.memory_space<vmem>>, %arg3: memref<1x130xf32, #tpu.memory_space<vmem>>, %arg4: memref<130x72xf32, #tpu.memory_space<vmem>>, %arg5: memref<1x72xf32, #tpu.memory_space<vmem>>, %arg6: memref<72x10xf32, #tpu.memory_space<vmem>>, %arg7: memref<1x10xf32, #tpu.memory_space<vmem>>, %arg8: memref<2x10xf32, #tpu.memory_space<vmem>>) attributes {dimension_semantics = [#tpu.dimension_semantics<parallel>], iteration_bounds = array<i64: 1>, scalar_prefetch = 0 : i64, scratch_operands = 0 : i64, tpu.core_type = #tpu.core_type<tc>, window_params = [{transform_indices = @transform_0, window_bounds = array<i64: 2, 2704>}, {pipeline_mode = #tpu.pipeline_mode<synchronous>, transform_indices = @transform_1, window_bounds = array<i64: 2704, 130>}, {pipeline_mode = #tpu.pipeline_mode<synchronous>, transform_indices = @transform_2, window_bounds = array<i64: 1, 130>}, {pipeline_mode = #tpu.pipeline_mode<synchronous>, transform_indices = @transform_3, window_bounds = array<i64: 130, 72>}, {pipeline_mode = #tpu.pipeline_mode<synchronous>, transform_indices = @transform_4, window_bounds = array<i64: 1, 72>}, {pipeline_mode = #tpu.pipeline_mode<synchronous>, transform_indices = @transform_5, window_bounds = array<i64: 72, 10>}, {pipeline_mode = #tpu.pipeline_mode<synchronous>, transform_indices = @transform_6, window_bounds = array<i64: 1, 10>}, {transform_indices = @transform_7, window_bounds = array<i64: 2, 10>}]} {
    %c0 = arith.constant 0 : index
    %c0_0 = arith.constant 0 : index
    %0 = vector.load %arg1[%c0, %c0_0] : memref<2x2704xf32, #tpu.memory_space<vmem>>, vector<2x2704xf32>
    %c0_1 = arith.constant 0 : index
    %c0_2 = arith.constant 0 : index
    %1 = vector.load %arg2[%c0_1, %c0_2] : memref<2704x130xf32, #tpu.memory_space<vmem>>, vector<2704x130xf32>
    %cst = arith.constant dense<0.000000e+00> : vector<2x130xf32>
    %2 = tpu.matmul %0, %1, %cst {dimension_numbers = #tpu.dot_dimension_numbers<[1], [0], [0], [1], [0, 0, 1, 1], [], []>} : vector<2x2704xf32>, vector<2704x130xf32>, vector<2x130xf32> -> vector<2x130xf32>
    %c0_3 = arith.constant 0 : index
    %c0_4 = arith.constant 0 : index
    %3 = vector.load %arg3[%c0_3, %c0_4] : memref<1x130xf32, #tpu.memory_space<vmem>>, vector<1x130xf32>
    %4 = vector.broadcast %3 : vector<1x130xf32> to vector<2x130xf32>
    %5 = arith.addf %2, %4 : vector<2x130xf32>
    %cst_5 = arith.constant 0.000000e+00 : f32
    %6 = vector.broadcast %cst_5 : f32 to vector<2x130xf32>
    %7 = arith.maximumf %5, %6 : vector<2x130xf32>
    %c0_6 = arith.constant 0 : index
    %c0_7 = arith.constant 0 : index
    %8 = vector.load %arg4[%c0_6, %c0_7] : memref<130x72xf32, #tpu.memory_space<vmem>>, vector<130x72xf32>
    %cst_8 = arith.constant dense<0.000000e+00> : vector<2x72xf32>
    %9 = tpu.matmul %7, %8, %cst_8 {dimension_numbers = #tpu.dot_dimension_numbers<[1], [0], [0], [1], [0, 0, 1, 1], [], []>} : vector<2x130xf32>, vector<130x72xf32>, vector<2x72xf32> -> vector<2x72xf32>
    %c0_9 = arith.constant 0 : index
    %c0_10 = arith.constant 0 : index
    %10 = vector.load %arg5[%c0_9, %c0_10] : memref<1x72xf32, #tpu.memory_space<vmem>>, vector<1x72xf32>
    %11 = vector.broadcast %10 : vector<1x72xf32> to vector<2x72xf32>
    %12 = arith.addf %9, %11 : vector<2x72xf32>
    %cst_11 = arith.constant 0.000000e+00 : f32
    %13 = vector.broadcast %cst_11 : f32 to vector<2x72xf32>
    %14 = arith.maximumf %12, %13 : vector<2x72xf32>
    %c0_12 = arith.constant 0 : index
    %c0_13 = arith.constant 0 : index
    %15 = vector.load %arg6[%c0_12, %c0_13] : memref<72x10xf32, #tpu.memory_space<vmem>>, vector<72x10xf32>
    %cst_14 = arith.constant dense<0.000000e+00> : vector<2x10xf32>
    %16 = tpu.matmul %14, %15, %cst_14 {dimension_numbers = #tpu.dot_dimension_numbers<[1], [0], [0], [1], [0, 0, 1, 1], [], []>} : vector<2x72xf32>, vector<72x10xf32>, vector<2x10xf32> -> vector<2x10xf32>
    %c0_15 = arith.constant 0 : index
    %c0_16 = arith.constant 0 : index
    %17 = vector.load %arg7[%c0_15, %c0_16] : memref<1x10xf32, #tpu.memory_space<vmem>>, vector<1x10xf32>
    %18 = vector.broadcast %17 : vector<1x10xf32> to vector<2x10xf32>
    %19 = arith.addf %16, %18 : vector<2x10xf32>
    %20 = arith.negf %19 : vector<2x10xf32>
    %21 = math.exp %20 : vector<2x10xf32>
    %cst_17 = arith.constant 1.000000e+00 : f32
    %22 = vector.broadcast %cst_17 : f32 to vector<2x10xf32>
    %23 = arith.addf %22, %21 : vector<2x10xf32>
    %24 = arith.divf %22, %23 : vector<2x10xf32>
    %c0_18 = arith.constant 0 : index
    %c0_19 = arith.constant 0 : index
    %25 = vector.load %arg8[%c0_18, %c0_19] : memref<2x10xf32, #tpu.memory_space<vmem>>, vector<2x10xf32>
    tpu.vector_store %arg8[%c0_18, %c0_19], %24 {strides = array<i32>} : memref<2x10xf32, #tpu.memory_space<vmem>>, vector<2x10xf32>,
    return
  }
  func.func @transform_0(%arg0: i32) -> (i32, i32) {
    %c0_i32 = arith.constant 0 : i32
    %c0_i32_0 = arith.constant 0 : i32
    return %arg0, %c0_i32 : i32, i32
  }
  func.func @transform_1(%arg0: i32) -> (i32, i32) {
    %c0_i32 = arith.constant 0 : i32
    %c0_i32_0 = arith.constant 0 : i32
    %c0_i32_1 = arith.constant 0 : i32
    return %c0_i32, %c0_i32_0 : i32, i32
  }
  func.func @transform_2(%arg0: i32) -> (i32, i32) {
    %c0_i32 = arith.constant 0 : i32
    %c0_i32_0 = arith.constant 0 : i32
    %c0_i32_1 = arith.constant 0 : i32
    return %c0_i32, %c0_i32_0 : i32, i32
  }
  func.func @transform_3(%arg0: i32) -> (i32, i32) {
    %c0_i32 = arith.constant 0 : i32
    %c0_i32_0 = arith.constant 0 : i32
    %c0_i32_1 = arith.constant 0 : i32
    return %c0_i32, %c0_i32_0 : i32, i32
  }
  func.func @transform_4(%arg0: i32) -> (i32, i32) {
    %c0_i32 = arith.constant 0 : i32
    %c0_i32_0 = arith.constant 0 : i32
    %c0_i32_1 = arith.constant 0 : i32
    return %c0_i32, %c0_i32_0 : i32, i32
  }
  func.func @transform_5(%arg0: i32) -> (i32, i32) {
    %c0_i32 = arith.constant 0 : i32
    %c0_i32_0 = arith.constant 0 : i32
    %c0_i32_1 = arith.constant 0 : i32
    return %c0_i32, %c0_i32_0 : i32, i32
  }
  func.func @transform_6(%arg0: i32) -> (i32, i32) {
    %c0_i32 = arith.constant 0 : i32
    %c0_i32_0 = arith.constant 0 : i32
    %c0_i32_1 = arith.constant 0 : i32
    return %c0_i32, %c0_i32_0 : i32, i32
  }
  func.func @transform_7(%arg0: i32) -> (i32, i32) {
    %c0_i32 = arith.constant 0 : i32
    %c0_i32_0 = arith.constant 0 : i32
    return %arg0, %c0_i32 : i32, i32
  }
}

</mosaic_0001>

<llo_original>
// kernel: conv_nn_forward.2
$region0: #{conv_nn_forward.2}
  #allocation0 [shape = 'u32[]', space=smem, size = 0x4, offset = 0x4, fixed_abs, tag = 'smem constant byte address 0x4 - core index']
  #allocation1 [shape = 'u32[144,128]{1,0:T(1,128)}', space=vmem, size = 0x12000, scoped, tag = 'internal scratch']
  %s0 = inlined_call_operand.vmem [shape: f32[2,16,96], index: 0, kind: input, shape index: {}]
  %s1 = inlined_call_operand.vmem [shape: f32[2,16,96], index: 1, kind: input, shape index: {}]
  %s2 = inlined_call_operand.hbm [shape: f32[6,96,105], index: 2, kind: input, shape index: {}]
  %s3 = inlined_call_operand.hbm [shape: f32[1,105], index: 3, kind: input, shape index: {}]
  %s4 = inlined_call_operand.vmem [shape: f32[3,105,208], index: 4, kind: input, shape index: {}]
  %s5 = inlined_call_operand.hbm [shape: f32[1,208], index: 5, kind: input, shape index: {}]
  %s6 = inlined_call_operand.vmem [shape: f32[2,13,208], index: 6, kind: output, shape index: {}]
  %s7 = sld [smem:[#allocation0]]
  $region69: #{conv_nn_forward.2} parent=0
    _
  %s9 = ssub.s32 1, %s7
  %s10 = scalar_select 0, %s9, %s7
  $region1: #{conv_nn_forward.2} parent=0
    #allocation2 [shape = 'u8[294912]{0}', space=vmem, size = 0x48000, scoped, tag = 'input window, operand 2, single buffered']
    #allocation3 [shape = 's32[2]{0}', space=sflag, size = 0x8, scoped, tag = 'scoped memory for conv_nn_forward.2']
    #allocation4 [shape = 'u8[512]{0}', space=vmem, size = 0x400, scoped, tag = 'input window, operand 3, single buffered']
    #allocation5 [shape = 's32[1]{0}', space=sflag, size = 0x4, scoped, tag = 'scoped memory for conv_nn_forward.2']
    #allocation6 [shape = 'u8[1024]{0}', space=vmem, size = 0x400, scoped, tag = 'input window, operand 5, single buffered']
    %11 = vsyncpa [#allocation3], 0
    %12 = vsyncpa [#allocation5], 0
    loop: start=0, step=1, limit=4
    $region2: #{conv_nn_forward.2} parent=1 // loop_pre_header
      _
    $region3: #{conv_nn_forward.2} parent=1 // loop_header
      %s14 = sphi 0, %s18
      %p15 = scmp.ge.s32.totalorder %s14, 4
      %s24 = sphi 0, %s26
      %s27 = sphi 0, %s24
      %s28 = sphi 0, %s27
      %s44 = sphi 0, %s28
      %s50 = sphi 0, %s52
      %s53 = sphi 0, %s50
      %s54 = sphi 0, %s53
      %s70 = sphi 0, %s54
      %s74 = sphi 0, %s74
      %s76 = sphi 0, %s74
      %s77 = sphi 0, %s76
      %s91 = sphi 0, %s77
      %s95 = sphi 0, %s95
      %s97 = sphi 0, %s95
      %s98 = sphi 0, %s97
      %s112 = sphi 0, %s98
      %s116 = sphi 0, %s116
      %s118 = sphi 0, %s116
      %s119 = sphi 0, %s118
      %s133 = sphi 0, %s119
      %s137 = sphi 0, %s137
      %s139 = sphi 0, %s137
      %s140 = sphi 0, %s139
      %s154 = sphi 0, %s140
      %s160 = sphi 0, %s162
      %s163 = sphi 0, %s160
      %s164 = sphi 0, %s163
      %s180 = sphi 0, %s164
    $region4: #{conv_nn_forward.2} parent=1 // loop_header_branch
      %17 = sbr.rel (%p15) target = $region8
    $region5: #{conv_nn_forward.2} parent=1 // loop_body
      %s19 = ssub.s32 %s14, 1
      %s20 = ssub.s32 %s14, 2
      %s21 = sadd.s32 %s14, 1
      %s22 = ssub.s32 %s14, %s21
      %p23 = scmp.eq.s32.totalorder %s22, 0
      %s25 = sadd.s32 %s24, 1
      %s26 = scalar_select %p23, %s24, %s25
      %p29 = pneg %p23
      %p30 = scmp.eq.s32.totalorder %s14, 1
      %p31 = por %p29, %p30
      %p32 = scmp.ne.s32.totalorder %s24, %s27
      %p33 = scmp.eq.s32.totalorder %s14, 0
      %p34 = por %p32, %p33
      %p35 = scmp.ne.s32.totalorder %s24, %s27
      %p36 = scmp.eq.s32.totalorder %s19, 1
      %p37 = por %p35, %p36
      %p38 = scmp.ne.s32.totalorder %s27, %s28
      %p39 = scmp.eq.s32.totalorder %s19, 0
      %p40 = por %p38, %p39
      %p41 = scmp.ne.s32.totalorder %s27, %s28
      %p42 = scmp.eq.s32.totalorder %s20, 1
      %p43 = por %p41, %p42
      %p45 = scmp.ne.s32.totalorder %s28, %s44
      %p46 = scmp.eq.s32.totalorder %s20, 0
      %p47 = por %p45, %p46
      %s48 = ssub.s32 %s14, %s21
      %p49 = scmp.eq.s32.totalorder %s48, 0
      %s51 = sadd.s32 %s50, 1
      %s52 = scalar_select %p49, %s50, %s51
      %p55 = pneg %p49
      %p56 = scmp.eq.s32.totalorder %s14, 1
      %p57 = por %p55, %p56
      %p58 = scmp.ne.s32.totalorder %s50, %s53
      %p59 = scmp.eq.s32.totalorder %s14, 0
      %p60 = por %p58, %p59
      %p61 = scmp.ne.s32.totalorder %s50, %s53
      %p62 = scmp.eq.s32.totalorder %s19, 1
      %p63 = por %p61, %p62
      %p64 = scmp.ne.s32.totalorder %s53, %s54
      %p65 = scmp.eq.s32.totalorder %s19, 0
      %p66 = por %p64, %p65
      %p67 = scmp.ne.s32.totalorder %s53, %s54
      %p68 = scmp.eq.s32.totalorder %s20, 1
      %p69 = por %p67, %p68
      %p71 = scmp.ne.s32.totalorder %s54, %s70
      %p72 = scmp.eq.s32.totalorder %s20, 0
      %p73 = por %p71, %p72
      %s75 = sadd.s32 %s74, 1
      %p78 = scmp.eq.s32.totalorder %s14, 1
      %p79 = scmp.ne.s32.totalorder %s74, %s76
      %p80 = scmp.eq.s32.totalorder %s14, 0
      %p81 = por %p79, %p80
      %p82 = scmp.ne.s32.totalorder %s74, %s76
      %p83 = scmp.eq.s32.totalorder %s19, 1
      %p84 = por %p82, %p83
      %p85 = scmp.ne.s32.totalorder %s76, %s77
      %p86 = scmp.eq.s32.totalorder %s19, 0
      %p87 = por %p85, %p86
      %p88 = scmp.ne.s32.totalorder %s76, %s77
      %p89 = scmp.eq.s32.totalorder %s20, 1
      %p90 = por %p88, %p89
      %p92 = scmp.ne.s32.totalorder %s77, %s91
      %p93 = scmp.eq.s32.totalorder %s20, 0
      %p94 = por %p92, %p93
      %s96 = sadd.s32 %s95, 1
      %p99 = scmp.eq.s32.totalorder %s14, 1
      %p100 = scmp.ne.s32.totalorder %s95, %s97
      %p101 = scmp.eq.s32.totalorder %s14, 0
      %p102 = por %p100, %p101
      %p103 = scmp.ne.s32.totalorder %s95, %s97
      %p104 = scmp.eq.s32.totalorder %s19, 1
      %p105 = por %p103, %p104
      %p106 = scmp.ne.s32.totalorder %s97, %s98
      %p107 = scmp.eq.s32.totalorder %s19, 0
      %p108 = por %p106, %p107
      %p109 = scmp.ne.s32.totalorder %s97, %s98
      %p110 = scmp.eq.s32.totalorder %s20, 1
      %p111 = por %p109, %p110
      %p113 = scmp.ne.s32.totalorder %s98, %s112
      %p114 = scmp.eq.s32.totalorder %s20, 0
      %p115 = por %p113, %p114
      %s117 = sadd.s32 %s116, 1
      %p120 = scmp.eq.s32.totalorder %s14, 1
      %p121 = scmp.ne.s32.totalorder %s116, %s118
      %p122 = scmp.eq.s32.totalorder %s14, 0
      %p123 = por %p121, %p122
      %p124 = scmp.ne.s32.totalorder %s116, %s118
      %p125 = scmp.eq.s32.totalorder %s19, 1
      %p126 = por %p124, %p125
      %p127 = scmp.ne.s32.totalorder %s118, %s119
      %p128 = scmp.eq.s32.totalorder %s19, 0
      %p129 = por %p127, %p128
      %p130 = scmp.ne.s32.totalorder %s118, %s119
      %p131 = scmp.eq.s32.totalorder %s20, 1
      %p132 = por %p130, %p131
      %p134 = scmp.ne.s32.totalorder %s119, %s133
      %p135 = scmp.eq.s32.totalorder %s20, 0
      %p136 = por %p134, %p135
      %s138 = sadd.s32 %s137, 1
      %p141 = scmp.eq.s32.totalorder %s14, 1
      %p142 = scmp.ne.s32.totalorder %s137, %s139
      %p143 = scmp.eq.s32.totalorder %s14, 0
      %p144 = por %p142, %p143
      %p145 = scmp.ne.s32.totalorder %s137, %s139
      %p146 = scmp.eq.s32.totalorder %s19, 1
      %p147 = por %p145, %p146
      %p148 = scmp.ne.s32.totalorder %s139, %s140
      %p149 = scmp.eq.s32.totalorder %s19, 0
      %p150 = por %p148, %p149
      %p151 = scmp.ne.s32.totalorder %s139, %s140
      %p152 = scmp.eq.s32.totalorder %s20, 1
      %p153 = por %p151, %p152
      %p155 = scmp.ne.s32.totalorder %s140, %s154
      %p156 = scmp.eq.s32.totalorder %s20, 0
      %p157 = por %p155, %p156
      %s158 = ssub.s32 %s14, %s21
      %p159 = scmp.eq.s32.totalorder %s158, 0
      %s161 = sadd.s32 %s160, 1
      %s162 = scalar_select %p159, %s160, %s161
      %p165 = pneg %p159
      %p166 = scmp.eq.s32.totalorder %s14, 1
      %p167 = por %p165, %p166
      %p168 = scmp.ne.s32.totalorder %s160, %s163
      %p169 = scmp.eq.s32.totalorder %s14, 0
      %p170 = por %p168, %p169
      %p171 = scmp.ne.s32.totalorder %s160, %s163
      %p172 = scmp.eq.s32.totalorder %s19, 1
      %p173 = por %p171, %p172
      %p174 = scmp.ne.s32.totalorder %s163, %s164
      %p175 = scmp.eq.s32.totalorder %s19, 0
      %p176 = por %p174, %p175
      %p177 = scmp.ne.s32.totalorder %s163, %s164
      %p178 = scmp.eq.s32.totalorder %s20, 1
      %p179 = por %p177, %p178
      %p181 = scmp.ne.s32.totalorder %s164, %s180
      %p182 = scmp.eq.s32.totalorder %s20, 0
      %p183 = por %p181, %p182
      %p184 = scmp.le.s32.totalorder 1, %s14
      %p185 = scmp.lt.s32.totalorder %s14, 3
      %p186 = pnand %p184, %p185
      %p187 = pneg %p186
      // Predicated region
      $region9: #{conv_nn_forward.2} parent=5 // pred_check
        _
      $region10: #{conv_nn_forward.2} parent=5 // pred_check_branch
        %189 = sbr.rel (%p186) target = $region12
      $region11: #{conv_nn_forward.2} parent=5 // pred_region
        %s190 = ssub.s32 %s14, 1
        // Predicated region
        $region13: #{conv_nn_forward.2} parent=11 // pred_check
          %p191 = pneg %p87
        $region14: #{conv_nn_forward.2} parent=11 // pred_check_branch
          %193 = sbr.rel (%p191) target = $region16
        $region15: #{conv_nn_forward.2} parent=11 // pred_region
          %s195 = ssub.s32 9216, 9216
          %196 = vsyncadd [#allocation3], %s195
          %s197 = sshll.u32 [#allocation2], 4
          %s198 = int_to_ptr.vmem [resolvable:$true] %s197
          %203 = dma.hbm_to_vmem [thread:$0]  %s2, 9216, %s198, [#allocation3], 128, 128, 8
        $region16: #{conv_nn_forward.2} parent=11 // pred_fallthru
          _
        // Predicated region
        $region17: #{conv_nn_forward.2} parent=11 // pred_check
          %p204 = pneg %p108
        $region18: #{conv_nn_forward.2} parent=11 // pred_check_branch
          %206 = sbr.rel (%p204) target = $region20
        $region19: #{conv_nn_forward.2} parent=11 // pred_region
          %s208 = ssub.s32 16, 16
          %209 = vsyncadd [#allocation5], %s208
          %s211 = sshll.u32 [#allocation4], 4
          %s212 = int_to_ptr.vmem [resolvable:$true] %s211
          %214 = dma.hbm_to_vmem [thread:$0]  %s3, 16, %s212, [#allocation5]
        $region20: #{conv_nn_forward.2} parent=11 // pred_fallthru
          _
        // Predicated region
        $region21: #{conv_nn_forward.2} parent=11 // pred_check
          %p215 = pneg %p129
        $region22: #{conv_nn_forward.2} parent=11 // pred_check_branch
          %217 = sbr.rel (%p215) target = $region24
        $region23: #{conv_nn_forward.2} parent=11 // pred_region
          _
        $region24: #{conv_nn_forward.2} parent=11 // pred_fallthru
          _
        // Predicated region
        $region25: #{conv_nn_forward.2} parent=11 // pred_check
          %p218 = pneg %p150
        $region26: #{conv_nn_forward.2} parent=11 // pred_check_branch
          %220 = sbr.rel (%p218) target = $region28
        $region27: #{conv_nn_forward.2} parent=11 // pred_region
          %s222 = ssub.s32 32, 32
          %223 = vsyncadd [#allocation5], %s222
          %s225 = sshll.u32 [#allocation6], 4
          %s226 = int_to_ptr.vmem [resolvable:$true] %s225
          %228 = dma.hbm_to_vmem [thread:$0]  %s5, 32, %s226, [#allocation5]
        $region28: #{conv_nn_forward.2} parent=11 // pred_fallthru
          _
      $region12: #{conv_nn_forward.2} parent=5 // pred_fallthru
        _
      %p229 = scmp.lt.s32.totalorder %s14, 2
      // Predicated region
      $region29: #{conv_nn_forward.2} parent=5 // pred_check
        %p230 = pneg %p229
      $region30: #{conv_nn_forward.2} parent=5 // pred_check_branch
        %232 = sbr.rel (%p230) target = $region32
      $region31: #{conv_nn_forward.2} parent=5 // pred_region
        // Predicated region
        $region33: #{conv_nn_forward.2} parent=31 // pred_check
          %p233 = pneg %p34
        $region34: #{conv_nn_forward.2} parent=31 // pred_check_branch
          %235 = sbr.rel (%p233) target = $region36
        $region35: #{conv_nn_forward.2} parent=31 // pred_region
          %p236 = scmp.lt.s32.totalorder %s14, 1
          %s237 = scalar_select %p236, %s14, 1
          %s238 = smul.addr %s237, 2
          %s239 = smul.addr %s238, 8
          %s240 = scalar_lea.vmem %s0, %s239
        $region36: #{conv_nn_forward.2} parent=31 // pred_fallthru
          _
        // Predicated region
        $region37: #{conv_nn_forward.2} parent=31 // pred_check
          %p241 = pneg %p60
        $region38: #{conv_nn_forward.2} parent=31 // pred_check_branch
          %243 = sbr.rel (%p241) target = $region40
        $region39: #{conv_nn_forward.2} parent=31 // pred_region
          %p244 = scmp.lt.s32.totalorder %s14, 1
          %s245 = scalar_select %p244, %s14, 1
          %s246 = smul.addr %s245, 2
          %s247 = smul.addr %s246, 8
          %s248 = scalar_lea.vmem %s1, %s247
        $region40: #{conv_nn_forward.2} parent=31 // pred_fallthru
          _
      $region32: #{conv_nn_forward.2} parent=5 // pred_fallthru
        _
      %p249 = scmp.le.s32.totalorder 1, %s14
      %p250 = scmp.lt.s32.totalorder %s14, 3
      %p251 = pnand %p249, %p250
      %p252 = pneg %p251
      // Predicated region
      $region41: #{conv_nn_forward.2} parent=5 // pred_check
        _
      $region42: #{conv_nn_forward.2} parent=5 // pred_check_branch
        %254 = sbr.rel (%p251) target = $region44
      $region43: #{conv_nn_forward.2} parent=5 // pred_region
        %s255 = ssub.s32 %s14, 1
        // Predicated region
        $region45: #{conv_nn_forward.2} parent=43 // pred_check
          %p256 = pneg %p87
        $region46: #{conv_nn_forward.2} parent=43 // pred_check_branch
          %258 = sbr.rel (%p256) target = $region48
        $region47: #{conv_nn_forward.2} parent=43 // pred_region
          %259 = dma.done [#allocation3], 9216
        $region48: #{conv_nn_forward.2} parent=43 // pred_fallthru
          _
        // Predicated region
        $region49: #{conv_nn_forward.2} parent=43 // pred_check
          %p260 = pneg %p108
        $region50: #{conv_nn_forward.2} parent=43 // pred_check_branch
          %262 = sbr.rel (%p260) target = $region52
        $region51: #{conv_nn_forward.2} parent=43 // pred_region
          %263 = dma.done [#allocation5], 16
        $region52: #{conv_nn_forward.2} parent=43 // pred_fallthru
          _
        // Predicated region
        $region53: #{conv_nn_forward.2} parent=43 // pred_check
          %p264 = pneg %p150
        $region54: #{conv_nn_forward.2} parent=43 // pred_check_branch
          %266 = sbr.rel (%p264) target = $region56
        $region55: #{conv_nn_forward.2} parent=43 // pred_region
          %267 = dma.done [#allocation5], 32
        $region56: #{conv_nn_forward.2} parent=43 // pred_fallthru
          _
        %p268 = scmp.lt.s32.totalorder %s19, 1
        %s269 = scalar_select %p268, %s19, 1
        %s270 = smul.addr %s269, 2
        %s271 = smul.addr %s270, 8
        %s272 = scalar_lea.vmem %s0, %s271
        %p273 = pneg %p40
        %p274 = pneg %p37
        %p275 = scmp.lt.s32.totalorder %s19, 1
        %s276 = scalar_select %p275, %s19, 1
        %s277 = smul.addr %s276, 2
        %s278 = smul.addr %s277, 8
        %s279 = scalar_lea.vmem %s1, %s278
        %p280 = pneg %p66
        %p281 = pneg %p63
        %p282 = pneg %p87
        %p283 = pneg %p84
        %p284 = pneg %p108
        %p285 = pneg %p105
        %p286 = pneg %p129
        %p287 = pneg %p126
        %p288 = pneg %p150
        %p289 = pneg %p147
        %p290 = pneg %p176
        %p291 = pneg %p173
        %p292 = scmp.lt.s32.totalorder %s19, 1
        %s293 = scalar_select %p292, %s19, 1
        %s294 = smul.addr %s293, 4
        %s295 = smul.addr %s294, 8
        %s296 = scalar_lea.vmem %s6, %s295
        %p297 = scmp.lt.s32.totalorder %s19, 1
        %s298 = scalar_select %p297, %s19, 1
        %s299 = smul.addr %s298, 2
        %s300 = smul.addr %s299, 8
        %s301 = scalar_lea.vmem %s0, %s300
        %p302 = scmp.lt.s32.totalorder %s19, 1
        %s303 = scalar_select %p302, %s19, 1
        %s304 = smul.addr %s303, 2
        %s305 = smul.addr %s304, 8
        %s306 = scalar_lea.vmem %s1, %s305
        %p307 = scmp.lt.s32.totalorder %s19, 1
        %s308 = scalar_select %p307, %s19, 1
        %s309 = smul.addr %s308, 4
        %s310 = smul.addr %s309, 8
        %s311 = scalar_lea.vmem %s6, %s310
        %v312 = vld [vmem:[%s301] sm:$0xff]
        %v313 = vld [vmem:[%s301 + $0x8] sm:$0xff]
        %v314 = vld [vmem:[%s306] sm:$0xff]
        %v315 = vld [vmem:[%s306 + $0x8] sm:$0xff]
        %v316 = vld [vmem:[#allocation4] sm:$0x1]
        %v317 = vld [vmem:[#allocation6] sm:$0x3]
        %v318 = vld [vmem:[#allocation2] sm:$0xff]
        %v319 = vld [vmem:[#allocation2 + $0x8] sm:$0xff]
        %v320 = vld [vmem:[#allocation2 + $0x10] sm:$0xff]
        %v321 = vld [vmem:[#allocation2 + $0x18] sm:$0xff]
        %v322 = vld [vmem:[#allocation2 + $0x20] sm:$0xff]
        %v323 = vld [vmem:[#allocation2 + $0x28] sm:$0xff]
        %v324 = vld [vmem:[#allocation2 + $0x30] sm:$0xff]
        %v325 = vld [vmem:[#allocation2 + $0x38] sm:$0xff]
        %v326 = vld [vmem:[#allocation2 + $0x40] sm:$0xff]
        %v327 = vld [vmem:[#allocation2 + $0x48] sm:$0xff]
        %v328 = vld [vmem:[#allocation2 + $0x50] sm:$0xff]
        %v329 = vld [vmem:[#allocation2 + $0x58] sm:$0xff]
        %vm330 = vcmask 785408
        %v332 = vsel %vm330, %v312, 0
        %v335 = vsel %vm330, %v313, 0
        %337 = vmatprep.subr.mxu0 0.0
        %338 = vmatpush1.msra.mxu0 0.0
        %339 = vmatprep.subr.mxu0 0.0
        %340 = vmatpush1.msra.mxu0 0.0
        %341 = vmatprep.subr.mxu0 0.0
        %342 = vmatpush1.msra.mxu0 0.0
        %343 = vmatprep.subr.mxu0 0.0
        %344 = vmatpush1.msra.mxu0 0.0
        %345 = vmatprep.subr.mxu0 0.0
        %346 = vmatpush1.msra.mxu0 %v329
        %347 = vmatprep.subr.mxu0 0.0
        %348 = vmatpush1.msra.mxu0 %v328
        %349 = vmatprep.subr.mxu0 0.0
        %350 = vmatpush1.msra.mxu0 %v327
        %351 = vmatprep.subr.mxu0 0.0
        %352 = vmatpush1.msra.mxu0 %v326
        %353 = vmatprep.subr.mxu0 0.0
        %354 = vmatpush1.msra.mxu0 %v325
        %355 = vmatprep.subr.mxu0 0.0
        %356 = vmatpush1.msra.mxu0 %v324
        %357 = vmatprep.subr.mxu0 0.0
        %358 = vmatpush1.msra.mxu0 %v323
        %359 = vmatprep.subr.mxu0 0.0
        %360 = vmatpush1.msra.mxu0 %v322
        %361 = vmatprep.subr.mxu0 0.0
        %362 = vmatpush1.msra.mxu0 %v321
        %363 = vmatprep.subr.mxu0 0.0
        %364 = vmatpush1.msra.mxu0 %v320
        %365 = vmatprep.subr.mxu0 0.0
        %366 = vmatpush1.msra.mxu0 %v319
        %367 = vmatprep.subr.mxu0 0.0
        %368 = vmatpush1.msra.mxu0 %v318
        %369 = vmatprep.subr.mxu0 0.0
        %370 = vmatpush2.msra.mxu0 0.0
        %371 = vmatprep.subr.mxu0 0.0
        %372 = vmatpush2.msra.mxu0 0.0
        %373 = vmatprep.subr.mxu0 0.0
        %374 = vmatpush2.msra.mxu0 0.0
        %375 = vmatprep.subr.mxu0 0.0
        %376 = vmatpush2.msra.mxu0 0.0
        %377 = vmatprep.subr.mxu0 0.0
        %378 = vmatpush2.msra.mxu0 0.0
        %379 = vmatprep.subr.mxu0 0.0
        %380 = vmatpush2.msra.mxu0 0.0
        %381 = vmatprep.subr.mxu0 0.0
        %382 = vmatpush2.msra.mxu0 0.0
        %383 = vmatprep.subr.mxu0 0.0
        %384 = vmatpush2.msra.mxu0 0.0
        %385 = vmatprep.subr.mxu0 0.0
        %386 = vmatpush2.msra.mxu0 0.0
        %387 = vmatprep.subr.mxu0 0.0
        %388 = vmatpush2.msra.mxu0 0.0
        %389 = vmatprep.subr.mxu0 0.0
        %390 = vmatpush2.msra.mxu0 0.0
        %391 = vmatprep.subr.mxu0 0.0
        %392 = vmatpush2.msra.mxu0 0.0
        %393 = vmatprep.subr.mxu0 0.0
        %394 = vmatpush2.msra.mxu0 0.0
        %395 = vmatprep.subr.mxu0 0.0
        %396 = vmatpush2.msra.mxu0 0.0
        %397 = vmatprep.subr.mxu0 0.0
        %398 = vmatpush2.msra.mxu0 0.0
        %399 = vmatprep.subr.mxu0 0.0
        %400 = vmatpush2.msra.mxu0 0.0
        %401 = vmatprep.mubr.f32.mxu0 0.0
        %402 = vmatmul.mubr.f32.gmra.mxu0 %v332
        %v403 = vpop.f32.mrf.mxu0
        %v404 = vadd.f32 0.0, %v403
        %v405 = vpop.f32.mrf.mxu0
        %406 = vmatprep.mubr.f32.mxu0 0.0
        %407 = vmatmul.mubr.f32.gmra.mxu0 %v335
        %v408 = vpop.f32.mrf.mxu0
        %v409 = vadd.f32 0.0, %v408
        %v410 = vpop.f32.mrf.mxu0
        %411 = vdwg.mxu0
        %v413 = vlaneseq
        %v414 = vshrl.u32 %v413, 7
        %v415 = vsub.s32 0, %v414
        %v416 = vrot.slane %v316, %v415
        %v418 = vadd.f32 %v416, %v404
        %v419 = vadd.f32 %v416, %v409
        %s420 = scalar_lea.vmem [#allocation2], 96
        %v421 = vld [vmem:[%s420] sm:$0xff]
        %v422 = vld [vmem:[%s420 + $0x8] sm:$0xff]
        %v423 = vld [vmem:[%s420 + $0x10] sm:$0xff]
        %v424 = vld [vmem:[%s420 + $0x18] sm:$0xff]
        %v425 = vld [vmem:[%s420 + $0x20] sm:$0xff]
        %v426 = vld [vmem:[%s420 + $0x28] sm:$0xff]
        %v427 = vld [vmem:[%s420 + $0x30] sm:$0xff]
        %v428 = vld [vmem:[%s420 + $0x38] sm:$0xff]
        %v429 = vld [vmem:[%s420 + $0x40] sm:$0xff]
        %v430 = vld [vmem:[%s420 + $0x48] sm:$0xff]
        %v431 = vld [vmem:[%s420 + $0x50] sm:$0xff]
        %v432 = vld [vmem:[%s420 + $0x58] sm:$0xff]
        %v434 = vsel %vm330, %v314, 0
        %v437 = vsel %vm330, %v315, 0
        %439 = vmatprep.subr.mxu0 0.0
        %440 = vmatpush1.msra.mxu0 0.0
        %441 = vmatprep.subr.mxu0 0.0
        %442 = vmatpush1.msra.mxu0 0.0
        %443 = vmatprep.subr.mxu0 0.0
        %444 = vmatpush1.msra.mxu0 0.0
        %445 = vmatprep.subr.mxu0 0.0
        %446 = vmatpush1.msra.mxu0 0.0
        %447 = vmatprep.subr.mxu0 0.0
        %448 = vmatpush1.msra.mxu0 %v432
        %449 = vmatprep.subr.mxu0 0.0
        %450 = vmatpush1.msra.mxu0 %v431
        %451 = vmatprep.subr.mxu0 0.0
        %452 = vmatpush1.msra.mxu0 %v430
        %453 = vmatprep.subr.mxu0 0.0
        %454 = vmatpush1.msra.mxu0 %v429
        %455 = vmatprep.subr.mxu0 0.0
        %456 = vmatpush1.msra.mxu0 %v428
        %457 = vmatprep.subr.mxu0 0.0
        %458 = vmatpush1.msra.mxu0 %v427
        %459 = vmatprep.subr.mxu0 0.0
        %460 = vmatpush1.msra.mxu0 %v426
        %461 = vmatprep.subr.mxu0 0.0
        %462 = vmatpush1.msra.mxu0 %v425
        %463 = vmatprep.subr.mxu0 0.0
        %464 = vmatpush1.msra.mxu0 %v424
        %465 = vmatprep.subr.mxu0 0.0
        %466 = vmatpush1.msra.mxu0 %v423
        %467 = vmatprep.subr.mxu0 0.0
        %468 = vmatpush1.msra.mxu0 %v422
        %469 = vmatprep.subr.mxu0 0.0
        %470 = vmatpush1.msra.mxu0 %v421
        %471 = vmatprep.subr.mxu0 0.0
        %472 = vmatpush2.msra.mxu0 0.0
        %473 = vmatprep.subr.mxu0 0.0
        %474 = vmatpush2.msra.mxu0 0.0
        %475 = vmatprep.subr.mxu0 0.0
        %476 = vmatpush2.msra.mxu0 0.0
        %477 = vmatprep.subr.mxu0 0.0
        %478 = vmatpush2.msra.mxu0 0.0
        %479 = vmatprep.subr.mxu0 0.0
        %480 = vmatpush2.msra.mxu0 0.0
        %481 = vmatprep.subr.mxu0 0.0
        %482 = vmatpush2.msra.mxu0 0.0
        %483 = vmatprep.subr.mxu0 0.0
        %484 = vmatpush2.msra.mxu0 0.0
        %485 = vmatprep.subr.mxu0 0.0
        %486 = vmatpush2.msra.mxu0 0.0
        %487 = vmatprep.subr.mxu0 0.0
        %488 = vmatpush2.msra.mxu0 0.0
        %489 = vmatprep.subr.mxu0 0.0
        %490 = vmatpush2.msra.mxu0 0.0
        %491 = vmatprep.subr.mxu0 0.0
        %492 = vmatpush2.msra.mxu0 0.0
        %493 = vmatprep.subr.mxu0 0.0
        %494 = vmatpush2.msra.mxu0 0.0
        %495 = vmatprep.subr.mxu0 0.0
        %496 = vmatpush2.msra.mxu0 0.0
        %497 = vmatprep.subr.mxu0 0.0
        %498 = vmatpush2.msra.mxu0 0.0
        %499 = vmatprep.subr.mxu0 0.0
        %500 = vmatpush2.msra.mxu0 0.0
        %501 = vmatprep.subr.mxu0 0.0
        %502 = vmatpush2.msra.mxu0 0.0
        %503 = vmatprep.mubr.f32.mxu0 0.0
        %504 = vmatmul.mubr.f32.gmra.mxu0 %v434
        %v505 = vpop.f32.mrf.mxu0
        %v506 = vadd.f32 0.0, %v505
        %v507 = vpop.f32.mrf.mxu0
        %508 = vmatprep.mubr.f32.mxu0 0.0
        %509 = vmatmul.mubr.f32.gmra.mxu0 %v437
        %v510 = vpop.f32.mrf.mxu0
        %v511 = vadd.f32 0.0, %v510
        %v512 = vpop.f32.mrf.mxu0
        %513 = vdwg.mxu0
        %v514 = vadd.f32 %v418, %v506
        %v515 = vadd.f32 %v419, %v511
        %s516 = scalar_lea.vmem [#allocation2], 192
        %v517 = vld [vmem:[%s516] sm:$0xff]
        %v518 = vld [vmem:[%s516 + $0x8] sm:$0xff]
        %v519 = vld [vmem:[%s516 + $0x10] sm:$0xff]
        %v520 = vld [vmem:[%s516 + $0x18] sm:$0xff]
        %v521 = vld [vmem:[%s516 + $0x20] sm:$0xff]
        %v522 = vld [vmem:[%s516 + $0x28] sm:$0xff]
        %v523 = vld [vmem:[%s516 + $0x30] sm:$0xff]
        %v524 = vld [vmem:[%s516 + $0x38] sm:$0xff]
        %v525 = vld [vmem:[%s516 + $0x40] sm:$0xff]
        %v526 = vld [vmem:[%s516 + $0x48] sm:$0xff]
        %v527 = vld [vmem:[%s516 + $0x50] sm:$0xff]
        %v528 = vld [vmem:[%s516 + $0x58] sm:$0xff]
        %vm529 = vcmask 1046528
        %v530 = vrot.slane %v312, 1
        %v531 = vrot.slane %v313, 1
        %v532 = vsel %vm529, %v530, %v531
        %v533 = vsel %vm330, %v532, 0
        %v535 = vsel %vm330, %v531, 0
        %537 = vmatprep.subr.mxu0 0.0
        %538 = vmatpush1.msra.mxu0 0.0
        %539 = vmatprep.subr.mxu0 0.0
        %540 = vmatpush1.msra.mxu0 0.0
        %541 = vmatprep.subr.mxu0 0.0
        %542 = vmatpush1.msra.mxu0 0.0
        %543 = vmatprep.subr.mxu0 0.0
        %544 = vmatpush1.msra.mxu0 0.0
        %545 = vmatprep.subr.mxu0 0.0
        %546 = vmatpush1.msra.mxu0 %v528
        %547 = vmatprep.subr.mxu0 0.0
        %548 = vmatpush1.msra.mxu0 %v527
        %549 = vmatprep.subr.mxu0 0.0
        %550 = vmatpush1.msra.mxu0 %v526
        %551 = vmatprep.subr.mxu0 0.0
        %552 = vmatpush1.msra.mxu0 %v525
        %553 = vmatprep.subr.mxu0 0.0
        %554 = vmatpush1.msra.mxu0 %v524
        %555 = vmatprep.subr.mxu0 0.0
        %556 = vmatpush1.msra.mxu0 %v523
        %557 = vmatprep.subr.mxu0 0.0
        %558 = vmatpush1.msra.mxu0 %v522
        %559 = vmatprep.subr.mxu0 0.0
        %560 = vmatpush1.msra.mxu0 %v521
        %561 = vmatprep.subr.mxu0 0.0
        %562 = vmatpush1.msra.mxu0 %v520
        %563 = vmatprep.subr.mxu0 0.0
        %564 = vmatpush1.msra.mxu0 %v519
        %565 = vmatprep.subr.mxu0 0.0
        %566 = vmatpush1.msra.mxu0 %v518
        %567 = vmatprep.subr.mxu0 0.0
        %568 = vmatpush1.msra.mxu0 %v517
        %569 = vmatprep.subr.mxu0 0.0
        %570 = vmatpush2.msra.mxu0 0.0
        %571 = vmatprep.subr.mxu0 0.0
        %572 = vmatpush2.msra.mxu0 0.0
        %573 = vmatprep.subr.mxu0 0.0
        %574 = vmatpush2.msra.mxu0 0.0
        %575 = vmatprep.subr.mxu0 0.0
        %576 = vmatpush2.msra.mxu0 0.0
        %577 = vmatprep.subr.mxu0 0.0
        %578 = vmatpush2.msra.mxu0 0.0
        %579 = vmatprep.subr.mxu0 0.0
        %580 = vmatpush2.msra.mxu0 0.0
        %581 = vmatprep.subr.mxu0 0.0
        %582 = vmatpush2.msra.mxu0 0.0
        %583 = vmatprep.subr.mxu0 0.0
        %584 = vmatpush2.msra.mxu0 0.0
        %585 = vmatprep.subr.mxu0 0.0
        %586 = vmatpush2.msra.mxu0 0.0
        %587 = vmatprep.subr.mxu0 0.0
        %588 = vmatpush2.msra.mxu0 0.0
        %589 = vmatprep.subr.mxu0 0.0
        %590 = vmatpush2.msra.mxu0 0.0
        %591 = vmatprep.subr.mxu0 0.0
        %592 = vmatpush2.msra.mxu0 0.0
        %593 = vmatprep.subr.mxu0 0.0
        %594 = vmatpush2.msra.mxu0 0.0
        %595 = vmatprep.subr.mxu0 0.0
        %596 = vmatpush2.msra.mxu0 0.0
        %597 = vmatprep.subr.mxu0 0.0
        %598 = vmatpush2.msra.mxu0 0.0
        %599 = vmatprep.subr.mxu0 0.0
        %600 = vmatpush2.msra.mxu0 0.0
        %601 = vmatprep.mubr.f32.mxu0 0.0
        %602 = vmatmul.mubr.f32.gmra.mxu0 %v533
        %v603 = vpop.f32.mrf.mxu0
        %v604 = vadd.f32 0.0, %v603
        %v605 = vpop.f32.mrf.mxu0
        %606 = vmatprep.mubr.f32.mxu0 0.0
        %607 = vmatmul.mubr.f32.gmra.mxu0 %v535
        %v608 = vpop.f32.mrf.mxu0
        %v609 = vadd.f32 0.0, %v608
        %v610 = vpop.f32.mrf.mxu0
        %611 = vdwg.mxu0
        %v612 = vadd.f32 %v514, %v604
        %v613 = vadd.f32 %v515, %v609
        %v614 = vmax.f32 %v612, 0.0
        %v615 = vmax.f32 %v613, 0.0
        %s616 = scalar_lea.vmem [#allocation2], 288
        %v617 = vld [vmem:[%s616] sm:$0xff]
        %v618 = vld [vmem:[%s616 + $0x8] sm:$0xff]
        %v619 = vld [vmem:[%s616 + $0x10] sm:$0xff]
        %v620 = vld [vmem:[%s616 + $0x18] sm:$0xff]
        %v621 = vld [vmem:[%s616 + $0x20] sm:$0xff]
        %v622 = vld [vmem:[%s616 + $0x28] sm:$0xff]
        %v623 = vld [vmem:[%s616 + $0x30] sm:$0xff]
        %v624 = vld [vmem:[%s616 + $0x38] sm:$0xff]
        %v625 = vld [vmem:[%s616 + $0x40] sm:$0xff]
        %v626 = vld [vmem:[%s616 + $0x48] sm:$0xff]
        %v627 = vld [vmem:[%s616 + $0x50] sm:$0xff]
        %v628 = vld [vmem:[%s616 + $0x58] sm:$0xff]
        %629 = vmatprep.subr.mxu0 0.0
        %630 = vmatpush1.msra.mxu0 0.0
        %631 = vmatprep.subr.mxu0 0.0
        %632 = vmatpush1.msra.mxu0 0.0
        %633 = vmatprep.subr.mxu0 0.0
        %634 = vmatpush1.msra.mxu0 0.0
        %635 = vmatprep.subr.mxu0 0.0
        %636 = vmatpush1.msra.mxu0 0.0
        %637 = vmatprep.subr.mxu0 0.0
        %638 = vmatpush1.msra.mxu0 %v628
        %639 = vmatprep.subr.mxu0 0.0
        %640 = vmatpush1.msra.mxu0 %v627
        %641 = vmatprep.subr.mxu0 0.0
        %642 = vmatpush1.msra.mxu0 %v626
        %643 = vmatprep.subr.mxu0 0.0
        %644 = vmatpush1.msra.mxu0 %v625
        %645 = vmatprep.subr.mxu0 0.0
        %646 = vmatpush1.msra.mxu0 %v624
        %647 = vmatprep.subr.mxu0 0.0
        %648 = vmatpush1.msra.mxu0 %v623
        %649 = vmatprep.subr.mxu0 0.0
        %650 = vmatpush1.msra.mxu0 %v622
        %651 = vmatprep.subr.mxu0 0.0
        %652 = vmatpush1.msra.mxu0 %v621
        %653 = vmatprep.subr.mxu0 0.0
        %654 = vmatpush1.msra.mxu0 %v620
        %655 = vmatprep.subr.mxu0 0.0
        %656 = vmatpush1.msra.mxu0 %v619
        %657 = vmatprep.subr.mxu0 0.0
        %658 = vmatpush1.msra.mxu0 %v618
        %659 = vmatprep.subr.mxu0 0.0
        %660 = vmatpush1.msra.mxu0 %v617
        %661 = vmatprep.subr.mxu0 0.0
        %662 = vmatpush2.msra.mxu0 0.0
        %663 = vmatprep.subr.mxu0 0.0
        %664 = vmatpush2.msra.mxu0 0.0
        %665 = vmatprep.subr.mxu0 0.0
        %666 = vmatpush2.msra.mxu0 0.0
        %667 = vmatprep.subr.mxu0 0.0
        %668 = vmatpush2.msra.mxu0 0.0
        %669 = vmatprep.subr.mxu0 0.0
        %670 = vmatpush2.msra.mxu0 0.0
        %671 = vmatprep.subr.mxu0 0.0
        %672 = vmatpush2.msra.mxu0 0.0
        %673 = vmatprep.subr.mxu0 0.0
        %674 = vmatpush2.msra.mxu0 0.0
        %675 = vmatprep.subr.mxu0 0.0
        %676 = vmatpush2.msra.mxu0 0.0
        %677 = vmatprep.subr.mxu0 0.0
        %678 = vmatpush2.msra.mxu0 0.0
        %679 = vmatprep.subr.mxu0 0.0
        %680 = vmatpush2.msra.mxu0 0.0
        %681 = vmatprep.subr.mxu0 0.0
        %682 = vmatpush2.msra.mxu0 0.0
        %683 = vmatprep.subr.mxu0 0.0
        %684 = vmatpush2.msra.mxu0 0.0
        %685 = vmatprep.subr.mxu0 0.0
        %686 = vmatpush2.msra.mxu0 0.0
        %687 = vmatprep.subr.mxu0 0.0
        %688 = vmatpush2.msra.mxu0 0.0
        %689 = vmatprep.subr.mxu0 0.0
        %690 = vmatpush2.msra.mxu0 0.0
        %691 = vmatprep.subr.mxu0 0.0
        %692 = vmatpush2.msra.mxu0 0.0
        %693 = vmatprep.mubr.f32.mxu0 0.0
        %694 = vmatmul.mubr.f32.gmra.mxu0 %v332
        %v695 = vpop.f32.mrf.mxu0
        %v696 = vadd.f32 0.0, %v695
        %v697 = vpop.f32.mrf.mxu0
        %698 = vmatprep.mubr.f32.mxu0 0.0
        %699 = vmatmul.mubr.f32.gmra.mxu0 %v335
        %v700 = vpop.f32.mrf.mxu0
        %v701 = vadd.f32 0.0, %v700
        %v702 = vpop.f32.mrf.mxu0
        %703 = vdwg.mxu0
        %v704 = vadd.f32 %v416, %v696
        %v705 = vadd.f32 %v416, %v701
        %s706 = scalar_lea.vmem [#allocation2], 384
        %v707 = vld [vmem:[%s706] sm:$0xff]
        %v708 = vld [vmem:[%s706 + $0x8] sm:$0xff]
        %v709 = vld [vmem:[%s706 + $0x10] sm:$0xff]
        %v710 = vld [vmem:[%s706 + $0x18] sm:$0xff]
        %v711 = vld [vmem:[%s706 + $0x20] sm:$0xff]
        %v712 = vld [vmem:[%s706 + $0x28] sm:$0xff]
        %v713 = vld [vmem:[%s706 + $0x30] sm:$0xff]
        %v714 = vld [vmem:[%s706 + $0x38] sm:$0xff]
        %v715 = vld [vmem:[%s706 + $0x40] sm:$0xff]
        %v716 = vld [vmem:[%s706 + $0x48] sm:$0xff]
        %v717 = vld [vmem:[%s706 + $0x50] sm:$0xff]
        %v718 = vld [vmem:[%s706 + $0x58] sm:$0xff]
        %719 = vmatprep.subr.mxu0 0.0
        %720 = vmatpush1.msra.mxu0 0.0
        %721 = vmatprep.subr.mxu0 0.0
        %722 = vmatpush1.msra.mxu0 0.0
        %723 = vmatprep.subr.mxu0 0.0
        %724 = vmatpush1.msra.mxu0 0.0
        %725 = vmatprep.subr.mxu0 0.0
        %726 = vmatpush1.msra.mxu0 0.0
        %727 = vmatprep.subr.mxu0 0.0
        %728 = vmatpush1.msra.mxu0 %v718
        %729 = vmatprep.subr.mxu0 0.0
        %730 = vmatpush1.msra.mxu0 %v717
        %731 = vmatprep.subr.mxu0 0.0
        %732 = vmatpush1.msra.mxu0 %v716
        %733 = vmatprep.subr.mxu0 0.0
        %734 = vmatpush1.msra.mxu0 %v715
        %735 = vmatprep.subr.mxu0 0.0
        %736 = vmatpush1.msra.mxu0 %v714
        %737 = vmatprep.subr.mxu0 0.0
        %738 = vmatpush1.msra.mxu0 %v713
        %739 = vmatprep.subr.mxu0 0.0
        %740 = vmatpush1.msra.mxu0 %v712
        %741 = vmatprep.subr.mxu0 0.0
        %742 = vmatpush1.msra.mxu0 %v711
        %743 = vmatprep.subr.mxu0 0.0
        %744 = vmatpush1.msra.mxu0 %v710
        %745 = vmatprep.subr.mxu0 0.0
        %746 = vmatpush1.msra.mxu0 %v709
        %747 = vmatprep.subr.mxu0 0.0
        %748 = vmatpush1.msra.mxu0 %v708
        %749 = vmatprep.subr.mxu0 0.0
        %750 = vmatpush1.msra.mxu0 %v707
        %751 = vmatprep.subr.mxu0 0.0
        %752 = vmatpush2.msra.mxu0 0.0
        %753 = vmatprep.subr.mxu0 0.0
        %754 = vmatpush2.msra.mxu0 0.0
        %755 = vmatprep.subr.mxu0 0.0
        %756 = vmatpush2.msra.mxu0 0.0
        %757 = vmatprep.subr.mxu0 0.0
        %758 = vmatpush2.msra.mxu0 0.0
        %759 = vmatprep.subr.mxu0 0.0
        %760 = vmatpush2.msra.mxu0 0.0
        %761 = vmatprep.subr.mxu0 0.0
        %762 = vmatpush2.msra.mxu0 0.0
        %763 = vmatprep.subr.mxu0 0.0
        %764 = vmatpush2.msra.mxu0 0.0
        %765 = vmatprep.subr.mxu0 0.0
        %766 = vmatpush2.msra.mxu0 0.0
        %767 = vmatprep.subr.mxu0 0.0
        %768 = vmatpush2.msra.mxu0 0.0
        %769 = vmatprep.subr.mxu0 0.0
        %770 = vmatpush2.msra.mxu0 0.0
        %771 = vmatprep.subr.mxu0 0.0
        %772 = vmatpush2.msra.mxu0 0.0
        %773 = vmatprep.subr.mxu0 0.0
        %774 = vmatpush2.msra.mxu0 0.0
        %775 = vmatprep.subr.mxu0 0.0
        %776 = vmatpush2.msra.mxu0 0.0
        %777 = vmatprep.subr.mxu0 0.0
        %778 = vmatpush2.msra.mxu0 0.0
        %779 = vmatprep.subr.mxu0 0.0
        %780 = vmatpush2.msra.mxu0 0.0
        %781 = vmatprep.subr.mxu0 0.0
        %782 = vmatpush2.msra.mxu0 0.0
        %783 = vmatprep.mubr.f32.mxu0 0.0
        %784 = vmatmul.mubr.f32.gmra.mxu0 %v434
        %v785 = vpop.f32.mrf.mxu0
        %v786 = vadd.f32 0.0, %v785
        %v787 = vpop.f32.mrf.mxu0
        %788 = vmatprep.mubr.f32.mxu0 0.0
        %789 = vmatmul.mubr.f32.gmra.mxu0 %v437
        %v790 = vpop.f32.mrf.mxu0
        %v791 = vadd.f32 0.0, %v790
        %v792 = vpop.f32.mrf.mxu0
        %793 = vdwg.mxu0
        %v794 = vadd.f32 %v704, %v786
        %v795 = vadd.f32 %v705, %v791
        %s796 = scalar_lea.vmem [#allocation2], 480
        %v797 = vld [vmem:[%s796] sm:$0xff]
        %v798 = vld [vmem:[%s796 + $0x8] sm:$0xff]
        %v799 = vld [vmem:[%s796 + $0x10] sm:$0xff]
        %v800 = vld [vmem:[%s796 + $0x18] sm:$0xff]
        %v801 = vld [vmem:[%s796 + $0x20] sm:$0xff]
        %v802 = vld [vmem:[%s796 + $0x28] sm:$0xff]
        %v803 = vld [vmem:[%s796 + $0x30] sm:$0xff]
        %v804 = vld [vmem:[%s796 + $0x38] sm:$0xff]
        %v805 = vld [vmem:[%s796 + $0x40] sm:$0xff]
        %v806 = vld [vmem:[%s796 + $0x48] sm:$0xff]
        %v807 = vld [vmem:[%s796 + $0x50] sm:$0xff]
        %v808 = vld [vmem:[%s796 + $0x58] sm:$0xff]
        %809 = vmatprep.subr.mxu0 0.0
        %810 = vmatpush1.msra.mxu0 0.0
        %811 = vmatprep.subr.mxu0 0.0
        %812 = vmatpush1.msra.mxu0 0.0
        %813 = vmatprep.subr.mxu0 0.0
        %814 = vmatpush1.msra.mxu0 0.0
        %815 = vmatprep.subr.mxu0 0.0
        %816 = vmatpush1.msra.mxu0 0.0
        %817 = vmatprep.subr.mxu0 0.0
        %818 = vmatpush1.msra.mxu0 %v808
        %819 = vmatprep.subr.mxu0 0.0
        %820 = vmatpush1.msra.mxu0 %v807
        %821 = vmatprep.subr.mxu0 0.0
        %822 = vmatpush1.msra.mxu0 %v806
        %823 = vmatprep.subr.mxu0 0.0
        %824 = vmatpush1.msra.mxu0 %v805
        %825 = vmatprep.subr.mxu0 0.0
        %826 = vmatpush1.msra.mxu0 %v804
        %827 = vmatprep.subr.mxu0 0.0
        %828 = vmatpush1.msra.mxu0 %v803
        %829 = vmatprep.subr.mxu0 0.0
        %830 = vmatpush1.msra.mxu0 %v802
        %831 = vmatprep.subr.mxu0 0.0
        %832 = vmatpush1.msra.mxu0 %v801
        %833 = vmatprep.subr.mxu0 0.0
        %834 = vmatpush1.msra.mxu0 %v800
        %835 = vmatprep.subr.mxu0 0.0
        %836 = vmatpush1.msra.mxu0 %v799
        %837 = vmatprep.subr.mxu0 0.0
        %838 = vmatpush1.msra.mxu0 %v798
        %839 = vmatprep.subr.mxu0 0.0
        %840 = vmatpush1.msra.mxu0 %v797
        %841 = vmatprep.subr.mxu0 0.0
        %842 = vmatpush2.msra.mxu0 0.0
        %843 = vmatprep.subr.mxu0 0.0
        %844 = vmatpush2.msra.mxu0 0.0
        %845 = vmatprep.subr.mxu0 0.0
        %846 = vmatpush2.msra.mxu0 0.0
        %847 = vmatprep.subr.mxu0 0.0
        %848 = vmatpush2.msra.mxu0 0.0
        %849 = vmatprep.subr.mxu0 0.0
        %850 = vmatpush2.msra.mxu0 0.0
        %851 = vmatprep.subr.mxu0 0.0
        %852 = vmatpush2.msra.mxu0 0.0
        %853 = vmatprep.subr.mxu0 0.0
        %854 = vmatpush2.msra.mxu0 0.0
        %855 = vmatprep.subr.mxu0 0.0
        %856 = vmatpush2.msra.mxu0 0.0
        %857 = vmatprep.subr.mxu0 0.0
        %858 = vmatpush2.msra.mxu0 0.0
        %859 = vmatprep.subr.mxu0 0.0
        %860 = vmatpush2.msra.mxu0 0.0
        %861 = vmatprep.subr.mxu0 0.0
        %862 = vmatpush2.msra.mxu0 0.0
        %863 = vmatprep.subr.mxu0 0.0
        %864 = vmatpush2.msra.mxu0 0.0
        %865 = vmatprep.subr.mxu0 0.0
        %866 = vmatpush2.msra.mxu0 0.0
        %867 = vmatprep.subr.mxu0 0.0
        %868 = vmatpush2.msra.mxu0 0.0
        %869 = vmatprep.subr.mxu0 0.0
        %870 = vmatpush2.msra.mxu0 0.0
        %871 = vmatprep.subr.mxu0 0.0
        %872 = vmatpush2.msra.mxu0 0.0
        %873 = vmatprep.mubr.f32.mxu0 0.0
        %874 = vmatmul.mubr.f32.gmra.mxu0 %v533
        %v875 = vpop.f32.mrf.mxu0
        %v876 = vadd.f32 0.0, %v875
        %v877 = vpop.f32.mrf.mxu0
        %878 = vmatprep.mubr.f32.mxu0 0.0
        %879 = vmatmul.mubr.f32.gmra.mxu0 %v535
        %v880 = vpop.f32.mrf.mxu0
        %v881 = vadd.f32 0.0, %v880
        %v882 = vpop.f32.mrf.mxu0
        %883 = vdwg.mxu0
        %v884 = vadd.f32 %v794, %v876
        %v885 = vadd.f32 %v795, %v881
        %v886 = vmax.f32 %v884, 0.0
        %v887 = vmax.f32 %v885, 0.0
        %v888 = vmax.f32 %v614, %v886
        %v889 = vmax.f32 %v615, %v887
        %890 = vmatprep.subr.mxu0 0.0
        %891 = vmatpush1.msra.mxu0 0.0
        %892 = vmatprep.subr.mxu0 0.0
        %893 = vmatpush1.msra.mxu0 0.0
        %894 = vmatprep.subr.mxu0 0.0
        %895 = vmatpush1.msra.mxu0 0.0
        %896 = vmatprep.subr.mxu0 0.0
        %897 = vmatpush1.msra.mxu0 0.0
        %898 = vmatprep.subr.mxu0 0.0
        %899 = vmatpush1.msra.mxu0 %v329
        %900 = vmatprep.subr.mxu0 0.0
        %901 = vmatpush1.msra.mxu0 %v328
        %902 = vmatprep.subr.mxu0 0.0
        %903 = vmatpush1.msra.mxu0 %v327
        %904 = vmatprep.subr.mxu0 0.0
        %905 = vmatpush1.msra.mxu0 %v326
        %906 = vmatprep.subr.mxu0 0.0
        %907 = vmatpush1.msra.mxu0 %v325
        %908 = vmatprep.subr.mxu0 0.0
        %909 = vmatpush1.msra.mxu0 %v324
        %910 = vmatprep.subr.mxu0 0.0
        %911 = vmatpush1.msra.mxu0 %v323
        %912 = vmatprep.subr.mxu0 0.0
        %913 = vmatpush1.msra.mxu0 %v322
        %914 = vmatprep.subr.mxu0 0.0
        %915 = vmatpush1.msra.mxu0 %v321
        %916 = vmatprep.subr.mxu0 0.0
        %917 = vmatpush1.msra.mxu0 %v320
        %918 = vmatprep.subr.mxu0 0.0
        %919 = vmatpush1.msra.mxu0 %v319
        %920 = vmatprep.subr.mxu0 0.0
        %921 = vmatpush1.msra.mxu0 %v318
        %922 = vmatprep.subr.mxu0 0.0
        %923 = vmatpush2.msra.mxu0 0.0
        %924 = vmatprep.subr.mxu0 0.0
        %925 = vmatpush2.msra.mxu0 0.0
        %926 = vmatprep.subr.mxu0 0.0
        %927 = vmatpush2.msra.mxu0 0.0
        %928 = vmatprep.subr.mxu0 0.0
        %929 = vmatpush2.msra.mxu0 0.0
        %930 = vmatprep.subr.mxu0 0.0
        %931 = vmatpush2.msra.mxu0 0.0
        %932 = vmatprep.subr.mxu0 0.0
        %933 = vmatpush2.msra.mxu0 0.0
        %934 = vmatprep.subr.mxu0 0.0
        %935 = vmatpush2.msra.mxu0 0.0
        %936 = vmatprep.subr.mxu0 0.0
        %937 = vmatpush2.msra.mxu0 0.0
        %938 = vmatprep.subr.mxu0 0.0
        %939 = vmatpush2.msra.mxu0 0.0
        %940 = vmatprep.subr.mxu0 0.0
        %941 = vmatpush2.msra.mxu0 0.0
        %942 = vmatprep.subr.mxu0 0.0
        %943 = vmatpush2.msra.mxu0 0.0
        %944 = vmatprep.subr.mxu0 0.0
        %945 = vmatpush2.msra.mxu0 0.0
        %946 = vmatprep.subr.mxu0 0.0
        %947 = vmatpush2.msra.mxu0 0.0
        %948 = vmatprep.subr.mxu0 0.0
        %949 = vmatpush2.msra.mxu0 0.0
        %950 = vmatprep.subr.mxu0 0.0
        %951 = vmatpush2.msra.mxu0 0.0
        %952 = vmatprep.subr.mxu0 0.0
        %953 = vmatpush2.msra.mxu0 0.0
        %954 = vmatprep.mubr.f32.mxu0 0.0
        %955 = vmatmul.mubr.f32.gmra.mxu0 %v434
        %v956 = vpop.f32.mrf.mxu0
        %v957 = vadd.f32 0.0, %v956
        %v958 = vpop.f32.mrf.mxu0
        %959 = vmatprep.mubr.f32.mxu0 0.0
        %960 = vmatmul.mubr.f32.gmra.mxu0 %v437
        %v961 = vpop.f32.mrf.mxu0
        %v962 = vadd.f32 0.0, %v961
        %v963 = vpop.f32.mrf.mxu0
        %964 = vdwg.mxu0
        %v965 = vadd.f32 %v416, %v957
        %v966 = vadd.f32 %v416, %v962
        %967 = vmatprep.subr.mxu0 0.0
        %968 = vmatpush1.msra.mxu0 0.0
        %969 = vmatprep.subr.mxu0 0.0
        %970 = vmatpush1.msra.mxu0 0.0
        %971 = vmatprep.subr.mxu0 0.0
        %972 = vmatpush1.msra.mxu0 0.0
        %973 = vmatprep.subr.mxu0 0.0
        %974 = vmatpush1.msra.mxu0 0.0
        %975 = vmatprep.subr.mxu0 0.0
        %976 = vmatpush1.msra.mxu0 %v432
        %977 = vmatprep.subr.mxu0 0.0
        %978 = vmatpush1.msra.mxu0 %v431
        %979 = vmatprep.subr.mxu0 0.0
        %980 = vmatpush1.msra.mxu0 %v430
        %981 = vmatprep.subr.mxu0 0.0
        %982 = vmatpush1.msra.mxu0 %v429
        %983 = vmatprep.subr.mxu0 0.0
        %984 = vmatpush1.msra.mxu0 %v428
        %985 = vmatprep.subr.mxu0 0.0
        %986 = vmatpush1.msra.mxu0 %v427
        %987 = vmatprep.subr.mxu0 0.0
        %988 = vmatpush1.msra.mxu0 %v426
        %989 = vmatprep.subr.mxu0 0.0
        %990 = vmatpush1.msra.mxu0 %v425
        %991 = vmatprep.subr.mxu0 0.0
        %992 = vmatpush1.msra.mxu0 %v424
        %993 = vmatprep.subr.mxu0 0.0
        %994 = vmatpush1.msra.mxu0 %v423
        %995 = vmatprep.subr.mxu0 0.0
        %996 = vmatpush1.msra.mxu0 %v422
        %997 = vmatprep.subr.mxu0 0.0
        %998 = vmatpush1.msra.mxu0 %v421
        %999 = vmatprep.subr.mxu0 0.0
        %1000 = vmatpush2.msra.mxu0 0.0
        %1001 = vmatprep.subr.mxu0 0.0
        %1002 = vmatpush2.msra.mxu0 0.0
        %1003 = vmatprep.subr.mxu0 0.0
        %1004 = vmatpush2.msra.mxu0 0.0
        %1005 = vmatprep.subr.mxu0 0.0
        %1006 = vmatpush2.msra.mxu0 0.0
        %1007 = vmatprep.subr.mxu0 0.0
        %1008 = vmatpush2.msra.mxu0 0.0
        %1009 = vmatprep.subr.mxu0 0.0
        %1010 = vmatpush2.msra.mxu0 0.0
        %1011 = vmatprep.subr.mxu0 0.0
        %1012 = vmatpush2.msra.mxu0 0.0
        %1013 = vmatprep.subr.mxu0 0.0
        %1014 = vmatpush2.msra.mxu0 0.0
        %1015 = vmatprep.subr.mxu0 0.0
        %1016 = vmatpush2.msra.mxu0 0.0
        %1017 = vmatprep.subr.mxu0 0.0
        %1018 = vmatpush2.msra.mxu0 0.0
        %1019 = vmatprep.subr.mxu0 0.0
        %1020 = vmatpush2.msra.mxu0 0.0
        %1021 = vmatprep.subr.mxu0 0.0
        %1022 = vmatpush2.msra.mxu0 0.0
        %1023 = vmatprep.subr.mxu0 0.0
        %1024 = vmatpush2.msra.mxu0 0.0
        %1025 = vmatprep.subr.mxu0 0.0
        %1026 = vmatpush2.msra.mxu0 0.0
        %1027 = vmatprep.subr.mxu0 0.0
        %1028 = vmatpush2.msra.mxu0 0.0
        %1029 = vmatprep.subr.mxu0 0.0
        %1030 = vmatpush2.msra.mxu0 0.0
        %1031 = vmatprep.mubr.f32.mxu0 0.0
        %1032 = vmatmul.mubr.f32.gmra.mxu0 %v533
        %v1033 = vpop.f32.mrf.mxu0
        %v1034 = vadd.f32 0.0, %v1033
        %v1035 = vpop.f32.mrf.mxu0
        %1036 = vmatprep.mubr.f32.mxu0 0.0
        %1037 = vmatmul.mubr.f32.gmra.mxu0 %v535
        %v1038 = vpop.f32.mrf.mxu0
        %v1039 = vadd.f32 0.0, %v1038
        %v1040 = vpop.f32.mrf.mxu0
        %1041 = vdwg.mxu0
        %v1042 = vadd.f32 %v965, %v1034
        %v1043 = vadd.f32 %v966, %v1039
        %v1044 = vrot.slane %v314, 1
        %v1045 = vrot.slane %v315, 1
        %v1046 = vsel %vm529, %v1044, %v1045
        %v1047 = vsel %vm330, %v1046, 0
        %v1049 = vsel %vm330, %v1045, 0
        %1051 = vmatprep.subr.mxu0 0.0
        %1052 = vmatpush1.msra.mxu0 0.0
        %1053 = vmatprep.subr.mxu0 0.0
        %1054 = vmatpush1.msra.mxu0 0.0
        %1055 = vmatprep.subr.mxu0 0.0
        %1056 = vmatpush1.msra.mxu0 0.0
        %1057 = vmatprep.subr.mxu0 0.0
        %1058 = vmatpush1.msra.mxu0 0.0
        %1059 = vmatprep.subr.mxu0 0.0
        %1060 = vmatpush1.msra.mxu0 %v528
        %1061 = vmatprep.subr.mxu0 0.0
        %1062 = vmatpush1.msra.mxu0 %v527
        %1063 = vmatprep.subr.mxu0 0.0
        %1064 = vmatpush1.msra.mxu0 %v526
        %1065 = vmatprep.subr.mxu0 0.0
        %1066 = vmatpush1.msra.mxu0 %v525
        %1067 = vmatprep.subr.mxu0 0.0
        %1068 = vmatpush1.msra.mxu0 %v524
        %1069 = vmatprep.subr.mxu0 0.0
        %1070 = vmatpush1.msra.mxu0 %v523
        %1071 = vmatprep.subr.mxu0 0.0
        %1072 = vmatpush1.msra.mxu0 %v522
        %1073 = vmatprep.subr.mxu0 0.0
        %1074 = vmatpush1.msra.mxu0 %v521
        %1075 = vmatprep.subr.mxu0 0.0
        %1076 = vmatpush1.msra.mxu0 %v520
        %1077 = vmatprep.subr.mxu0 0.0
        %1078 = vmatpush1.msra.mxu0 %v519
        %1079 = vmatprep.subr.mxu0 0.0
        %1080 = vmatpush1.msra.mxu0 %v518
        %1081 = vmatprep.subr.mxu0 0.0
        %1082 = vmatpush1.msra.mxu0 %v517
        %1083 = vmatprep.subr.mxu0 0.0
        %1084 = vmatpush2.msra.mxu0 0.0
        %1085 = vmatprep.subr.mxu0 0.0
        %1086 = vmatpush2.msra.mxu0 0.0
        %1087 = vmatprep.subr.mxu0 0.0
        %1088 = vmatpush2.msra.mxu0 0.0
        %1089 = vmatprep.subr.mxu0 0.0
        %1090 = vmatpush2.msra.mxu0 0.0
        %1091 = vmatprep.subr.mxu0 0.0
        %1092 = vmatpush2.msra.mxu0 0.0
        %1093 = vmatprep.subr.mxu0 0.0
        %1094 = vmatpush2.msra.mxu0 0.0
        %1095 = vmatprep.subr.mxu0 0.0
        %1096 = vmatpush2.msra.mxu0 0.0
        %1097 = vmatprep.subr.mxu0 0.0
        %1098 = vmatpush2.msra.mxu0 0.0
        %1099 = vmatprep.subr.mxu0 0.0
        %1100 = vmatpush2.msra.mxu0 0.0
        %1101 = vmatprep.subr.mxu0 0.0
        %1102 = vmatpush2.msra.mxu0 0.0
        %1103 = vmatprep.subr.mxu0 0.0
        %1104 = vmatpush2.msra.mxu0 0.0
        %1105 = vmatprep.subr.mxu0 0.0
        %1106 = vmatpush2.msra.mxu0 0.0
        %1107 = vmatprep.subr.mxu0 0.0
        %1108 = vmatpush2.msra.mxu0 0.0
        %1109 = vmatprep.subr.mxu0 0.0
        %1110 = vmatpush2.msra.mxu0 0.0
        %1111 = vmatprep.subr.mxu0 0.0
        %1112 = vmatpush2.msra.mxu0 0.0
        %1113 = vmatprep.subr.mxu0 0.0
        %1114 = vmatpush2.msra.mxu0 0.0
        %1115 = vmatprep.mubr.f32.mxu0 0.0
        %1116 = vmatmul.mubr.f32.gmra.mxu0 %v1047
        %v1117 = vpop.f32.mrf.mxu0
        %v1118 = vadd.f32 0.0, %v1117
        %v1119 = vpop.f32.mrf.mxu0
        %1120 = vmatprep.mubr.f32.mxu0 0.0
        %1121 = vmatmul.mubr.f32.gmra.mxu0 %v1049
        %v1122 = vpop.f32.mrf.mxu0
        %v1123 = vadd.f32 0.0, %v1122
        %v1124 = vpop.f32.mrf.mxu0
        %1125 = vdwg.mxu0
        %v1126 = vadd.f32 %v1042, %v1118
        %v1127 = vadd.f32 %v1043, %v1123
        %v1128 = vmax.f32 %v1126, 0.0
        %v1129 = vmax.f32 %v1127, 0.0
        %v1130 = vmax.f32 %v888, %v1128
        %v1131 = vmax.f32 %v889, %v1129
        %1132 = vmatprep.subr.mxu0 0.0
        %1133 = vmatpush1.msra.mxu0 0.0
        %1134 = vmatprep.subr.mxu0 0.0
        %1135 = vmatpush1.msra.mxu0 0.0
        %1136 = vmatprep.subr.mxu0 0.0
        %1137 = vmatpush1.msra.mxu0 0.0
        %1138 = vmatprep.subr.mxu0 0.0
        %1139 = vmatpush1.msra.mxu0 0.0
        %1140 = vmatprep.subr.mxu0 0.0
        %1141 = vmatpush1.msra.mxu0 %v628
        %1142 = vmatprep.subr.mxu0 0.0
        %1143 = vmatpush1.msra.mxu0 %v627
        %1144 = vmatprep.subr.mxu0 0.0
        %1145 = vmatpush1.msra.mxu0 %v626
        %1146 = vmatprep.subr.mxu0 0.0
        %1147 = vmatpush1.msra.mxu0 %v625
        %1148 = vmatprep.subr.mxu0 0.0
        %1149 = vmatpush1.msra.mxu0 %v624
        %1150 = vmatprep.subr.mxu0 0.0
        %1151 = vmatpush1.msra.mxu0 %v623
        %1152 = vmatprep.subr.mxu0 0.0
        %1153 = vmatpush1.msra.mxu0 %v622
        %1154 = vmatprep.subr.mxu0 0.0
        %1155 = vmatpush1.msra.mxu0 %v621
        %1156 = vmatprep.subr.mxu0 0.0
        %1157 = vmatpush1.msra.mxu0 %v620
        %1158 = vmatprep.subr.mxu0 0.0
        %1159 = vmatpush1.msra.mxu0 %v619
        %1160 = vmatprep.subr.mxu0 0.0
        %1161 = vmatpush1.msra.mxu0 %v618
        %1162 = vmatprep.subr.mxu0 0.0
        %1163 = vmatpush1.msra.mxu0 %v617
        %1164 = vmatprep.subr.mxu0 0.0
        %1165 = vmatpush2.msra.mxu0 0.0
        %1166 = vmatprep.subr.mxu0 0.0
        %1167 = vmatpush2.msra.mxu0 0.0
        %1168 = vmatprep.subr.mxu0 0.0
        %1169 = vmatpush2.msra.mxu0 0.0
        %1170 = vmatprep.subr.mxu0 0.0
        %1171 = vmatpush2.msra.mxu0 0.0
        %1172 = vmatprep.subr.mxu0 0.0
        %1173 = vmatpush2.msra.mxu0 0.0
        %1174 = vmatprep.subr.mxu0 0.0
        %1175 = vmatpush2.msra.mxu0 0.0
        %1176 = vmatprep.subr.mxu0 0.0
        %1177 = vmatpush2.msra.mxu0 0.0
        %1178 = vmatprep.subr.mxu0 0.0
        %1179 = vmatpush2.msra.mxu0 0.0
        %1180 = vmatprep.subr.mxu0 0.0
        %1181 = vmatpush2.msra.mxu0 0.0
        %1182 = vmatprep.subr.mxu0 0.0
        %1183 = vmatpush2.msra.mxu0 0.0
        %1184 = vmatprep.subr.mxu0 0.0
        %1185 = vmatpush2.msra.mxu0 0.0
        %1186 = vmatprep.subr.mxu0 0.0
        %1187 = vmatpush2.msra.mxu0 0.0
        %1188 = vmatprep.subr.mxu0 0.0
        %1189 = vmatpush2.msra.mxu0 0.0
        %1190 = vmatprep.subr.mxu0 0.0
        %1191 = vmatpush2.msra.mxu0 0.0
        %1192 = vmatprep.subr.mxu0 0.0
        %1193 = vmatpush2.msra.mxu0 0.0
        %1194 = vmatprep.subr.mxu0 0.0
        %1195 = vmatpush2.msra.mxu0 0.0
        %1196 = vmatprep.mubr.f32.mxu0 0.0
        %1197 = vmatmul.mubr.f32.gmra.mxu0 %v434
        %v1198 = vpop.f32.mrf.mxu0
        %v1199 = vadd.f32 0.0, %v1198
        %v1200 = vpop.f32.mrf.mxu0
        %1201 = vmatprep.mubr.f32.mxu0 0.0
        %1202 = vmatmul.mubr.f32.gmra.mxu0 %v437
        %v1203 = vpop.f32.mrf.mxu0
        %v1204 = vadd.f32 0.0, %v1203
        %v1205 = vpop.f32.mrf.mxu0
        %1206 = vdwg.mxu0
        %v1207 = vadd.f32 %v416, %v1199
        %v1208 = vadd.f32 %v416, %v1204
        %1209 = vmatprep.subr.mxu0 0.0
        %1210 = vmatpush1.msra.mxu0 0.0
        %1211 = vmatprep.subr.mxu0 0.0
        %1212 = vmatpush1.msra.mxu0 0.0
        %1213 = vmatprep.subr.mxu0 0.0
        %1214 = vmatpush1.msra.mxu0 0.0
        %1215 = vmatprep.subr.mxu0 0.0
        %1216 = vmatpush1.msra.mxu0 0.0
        %1217 = vmatprep.subr.mxu0 0.0
        %1218 = vmatpush1.msra.mxu0 %v718
        %1219 = vmatprep.subr.mxu0 0.0
        %1220 = vmatpush1.msra.mxu0 %v717
        %1221 = vmatprep.subr.mxu0 0.0
        %1222 = vmatpush1.msra.mxu0 %v716
        %1223 = vmatprep.subr.mxu0 0.0
        %1224 = vmatpush1.msra.mxu0 %v715
        %1225 = vmatprep.subr.mxu0 0.0
        %1226 = vmatpush1.msra.mxu0 %v714
        %1227 = vmatprep.subr.mxu0 0.0
        %1228 = vmatpush1.msra.mxu0 %v713
        %1229 = vmatprep.subr.mxu0 0.0
        %1230 = vmatpush1.msra.mxu0 %v712
        %1231 = vmatprep.subr.mxu0 0.0
        %1232 = vmatpush1.msra.mxu0 %v711
        %1233 = vmatprep.subr.mxu0 0.0
        %1234 = vmatpush1.msra.mxu0 %v710
        %1235 = vmatprep.subr.mxu0 0.0
        %1236 = vmatpush1.msra.mxu0 %v709
        %1237 = vmatprep.subr.mxu0 0.0
        %1238 = vmatpush1.msra.mxu0 %v708
        %1239 = vmatprep.subr.mxu0 0.0
        %1240 = vmatpush1.msra.mxu0 %v707
        %1241 = vmatprep.subr.mxu0 0.0
        %1242 = vmatpush2.msra.mxu0 0.0
        %1243 = vmatprep.subr.mxu0 0.0
        %1244 = vmatpush2.msra.mxu0 0.0
        %1245 = vmatprep.subr.mxu0 0.0
        %1246 = vmatpush2.msra.mxu0 0.0
        %1247 = vmatprep.subr.mxu0 0.0
        %1248 = vmatpush2.msra.mxu0 0.0
        %1249 = vmatprep.subr.mxu0 0.0
        %1250 = vmatpush2.msra.mxu0 0.0
        %1251 = vmatprep.subr.mxu0 0.0
        %1252 = vmatpush2.msra.mxu0 0.0
        %1253 = vmatprep.subr.mxu0 0.0
        %1254 = vmatpush2.msra.mxu0 0.0
        %1255 = vmatprep.subr.mxu0 0.0
        %1256 = vmatpush2.msra.mxu0 0.0
        %1257 = vmatprep.subr.mxu0 0.0
        %1258 = vmatpush2.msra.mxu0 0.0
        %1259 = vmatprep.subr.mxu0 0.0
        %1260 = vmatpush2.msra.mxu0 0.0
        %1261 = vmatprep.subr.mxu0 0.0
        %1262 = vmatpush2.msra.mxu0 0.0
        %1263 = vmatprep.subr.mxu0 0.0
        %1264 = vmatpush2.msra.mxu0 0.0
        %1265 = vmatprep.subr.mxu0 0.0
        %1266 = vmatpush2.msra.mxu0 0.0
        %1267 = vmatprep.subr.mxu0 0.0
        %1268 = vmatpush2.msra.mxu0 0.0
        %1269 = vmatprep.subr.mxu0 0.0
        %1270 = vmatpush2.msra.mxu0 0.0
        %1271 = vmatprep.subr.mxu0 0.0
        %1272 = vmatpush2.msra.mxu0 0.0
        %1273 = vmatprep.mubr.f32.mxu0 0.0
        %1274 = vmatmul.mubr.f32.gmra.mxu0 %v533
        %v1275 = vpop.f32.mrf.mxu0
        %v1276 = vadd.f32 0.0, %v1275
        %v1277 = vpop.f32.mrf.mxu0
        %1278 = vmatprep.mubr.f32.mxu0 0.0
        %1279 = vmatmul.mubr.f32.gmra.mxu0 %v535
        %v1280 = vpop.f32.mrf.mxu0
        %v1281 = vadd.f32 0.0, %v1280
        %v1282 = vpop.f32.mrf.mxu0
        %1283 = vdwg.mxu0
        %v1284 = vadd.f32 %v1207, %v1276
        %v1285 = vadd.f32 %v1208, %v1281
        %1286 = vmatprep.subr.mxu0 0.0
        %1287 = vmatpush1.msra.mxu0 0.0
        %1288 = vmatprep.subr.mxu0 0.0
        %1289 = vmatpush1.msra.mxu0 0.0
        %1290 = vmatprep.subr.mxu0 0.0
        %1291 = vmatpush1.msra.mxu0 0.0
        %1292 = vmatprep.subr.mxu0 0.0
        %1293 = vmatpush1.msra.mxu0 0.0
        %1294 = vmatprep.subr.mxu0 0.0
        %1295 = vmatpush1.msra.mxu0 %v808
        %1296 = vmatprep.subr.mxu0 0.0
        %1297 = vmatpush1.msra.mxu0 %v807
        %1298 = vmatprep.subr.mxu0 0.0
        %1299 = vmatpush1.msra.mxu0 %v806
        %1300 = vmatprep.subr.mxu0 0.0
        %1301 = vmatpush1.msra.mxu0 %v805
        %1302 = vmatprep.subr.mxu0 0.0
        %1303 = vmatpush1.msra.mxu0 %v804
        %1304 = vmatprep.subr.mxu0 0.0
        %1305 = vmatpush1.msra.mxu0 %v803
        %1306 = vmatprep.subr.mxu0 0.0
        %1307 = vmatpush1.msra.mxu0 %v802
        %1308 = vmatprep.subr.mxu0 0.0
        %1309 = vmatpush1.msra.mxu0 %v801
        %1310 = vmatprep.subr.mxu0 0.0
        %1311 = vmatpush1.msra.mxu0 %v800
        %1312 = vmatprep.subr.mxu0 0.0
        %1313 = vmatpush1.msra.mxu0 %v799
        %1314 = vmatprep.subr.mxu0 0.0
        %1315 = vmatpush1.msra.mxu0 %v798
        %1316 = vmatprep.subr.mxu0 0.0
        %1317 = vmatpush1.msra.mxu0 %v797
        %1318 = vmatprep.subr.mxu0 0.0
        %1319 = vmatpush2.msra.mxu0 0.0
        %1320 = vmatprep.subr.mxu0 0.0
        %1321 = vmatpush2.msra.mxu0 0.0
        %1322 = vmatprep.subr.mxu0 0.0
        %1323 = vmatpush2.msra.mxu0 0.0
        %1324 = vmatprep.subr.mxu0 0.0
        %1325 = vmatpush2.msra.mxu0 0.0
        %1326 = vmatprep.subr.mxu0 0.0
        %1327 = vmatpush2.msra.mxu0 0.0
        %1328 = vmatprep.subr.mxu0 0.0
        %1329 = vmatpush2.msra.mxu0 0.0
        %1330 = vmatprep.subr.mxu0 0.0
        %1331 = vmatpush2.msra.mxu0 0.0
        %1332 = vmatprep.subr.mxu0 0.0
        %1333 = vmatpush2.msra.mxu0 0.0
        %1334 = vmatprep.subr.mxu0 0.0
        %1335 = vmatpush2.msra.mxu0 0.0
        %1336 = vmatprep.subr.mxu0 0.0
        %1337 = vmatpush2.msra.mxu0 0.0
        %1338 = vmatprep.subr.mxu0 0.0
        %1339 = vmatpush2.msra.mxu0 0.0
        %1340 = vmatprep.subr.mxu0 0.0
        %1341 = vmatpush2.msra.mxu0 0.0
        %1342 = vmatprep.subr.mxu0 0.0
        %1343 = vmatpush2.msra.mxu0 0.0
        %1344 = vmatprep.subr.mxu0 0.0
        %1345 = vmatpush2.msra.mxu0 0.0
        %1346 = vmatprep.subr.mxu0 0.0
        %1347 = vmatpush2.msra.mxu0 0.0
        %1348 = vmatprep.subr.mxu0 0.0
        %1349 = vmatpush2.msra.mxu0 0.0
        %1350 = vmatprep.mubr.f32.mxu0 0.0
        %1351 = vmatmul.mubr.f32.gmra.mxu0 %v1047
        %v1352 = vpop.f32.mrf.mxu0
        %v1353 = vadd.f32 0.0, %v1352
        %v1354 = vpop.f32.mrf.mxu0
        %1355 = vmatprep.mubr.f32.mxu0 0.0
        %1356 = vmatmul.mubr.f32.gmra.mxu0 %v1049
        %v1357 = vpop.f32.mrf.mxu0
        %v1358 = vadd.f32 0.0, %v1357
        %v1359 = vpop.f32.mrf.mxu0
        %1360 = vdwg.mxu0
        %v1361 = vadd.f32 %v1284, %v1353
        %v1362 = vadd.f32 %v1285, %v1358
        %v1363 = vmax.f32 %v1361, 0.0
        %v1364 = vmax.f32 %v1362, 0.0
        %v1365 = vmax.f32 %v1130, %v1363
        %v1366 = vmax.f32 %v1131, %v1364
        %v1367 = vld [vmem:[%s4] sm:$0xff]
        %v1368 = vld [vmem:[%s4 + $0x8] sm:$0xff]
        %v1369 = vld [vmem:[%s4 + $0x10] sm:$0xff]
        %v1370 = vld [vmem:[%s4 + $0x18] sm:$0xff]
        %v1371 = vld [vmem:[%s4 + $0x20] sm:$0xff]
        %v1372 = vld [vmem:[%s4 + $0x28] sm:$0xff]
        %v1373 = vld [vmem:[%s4 + $0x30] sm:$0xff]
        %v1374 = vld [vmem:[%s4 + $0x38] sm:$0xff]
        %v1375 = vld [vmem:[%s4 + $0x40] sm:$0xff]
        %v1376 = vld [vmem:[%s4 + $0x48] sm:$0xff]
        %v1377 = vld [vmem:[%s4 + $0x50] sm:$0xff]
        %v1378 = vld [vmem:[%s4 + $0x58] sm:$0xff]
        %v1379 = vld [vmem:[%s4 + $0x60] sm:$0xff]
        %v1380 = vld [vmem:[%s4 + $0x68] sm:$0xff]
        %v1381 = vld [vmem:[%s4 + $0x70] sm:$0xff]
        %v1382 = vld [vmem:[%s4 + $0x78] sm:$0xff]
        %v1383 = vld [vmem:[%s4 + $0x80] sm:$0xff]
        %v1384 = vld [vmem:[%s4 + $0x88] sm:$0xff]
        %v1385 = vld [vmem:[%s4 + $0x90] sm:$0xff]
        %v1386 = vld [vmem:[%s4 + $0x98] sm:$0xff]
        %v1387 = vld [vmem:[%s4 + $0xa0] sm:$0xff]
        %v1388 = vld [vmem:[%s4 + $0xa8] sm:$0xff]
        %v1389 = vld [vmem:[%s4 + $0xb0] sm:$0xff]
        %v1390 = vld [vmem:[%s4 + $0xb8] sm:$0xff]
        %v1391 = vld [vmem:[%s4 + $0xc0] sm:$0xff]
        %v1392 = vld [vmem:[%s4 + $0xc8] sm:$0xff]
        %v1393 = vld [vmem:[%s4 + $0xd0] sm:$0x1]
        %v1394 = vld [vmem:[%s4 + $0xd8] sm:$0x1]
        %vm1395 = vcmask 859136
        %v1397 = vsel %vm1395, %v1365, 0
        %v1400 = vsel %vm1395, %v1366, 0
        %vm1402 = vcmask 1040384
        %v1404 = vsel %vm1402, %v1393, 0
        %v1407 = vsel %vm1402, %v1394, 0
        %1409 = vmatprep.subr.mxu0 0.0
        %1410 = vmatpush1.msra.mxu0 0.0
        %1411 = vmatprep.subr.mxu0 0.0
        %1412 = vmatpush1.msra.mxu0 0.0
        %1413 = vmatprep.subr.mxu0 %v1407
        %1414 = vmatpush1.msra.mxu0 %v1404
        %1415 = vmatprep.subr.mxu0 %v1392
        %1416 = vmatpush1.msra.mxu0 %v1391
        %1417 = vmatprep.subr.mxu0 %v1390
        %1418 = vmatpush1.msra.mxu0 %v1389
        %1419 = vmatprep.subr.mxu0 %v1388
        %1420 = vmatpush1.msra.mxu0 %v1387
        %1421 = vmatprep.subr.mxu0 %v1386
        %1422 = vmatpush1.msra.mxu0 %v1385
        %1423 = vmatprep.subr.mxu0 %v1384
        %1424 = vmatpush1.msra.mxu0 %v1383
        %1425 = vmatprep.subr.mxu0 %v1382
        %1426 = vmatpush1.msra.mxu0 %v1381
        %1427 = vmatprep.subr.mxu0 %v1380
        %1428 = vmatpush1.msra.mxu0 %v1379
        %1429 = vmatprep.subr.mxu0 %v1378
        %1430 = vmatpush1.msra.mxu0 %v1377
        %1431 = vmatprep.subr.mxu0 %v1376
        %1432 = vmatpush1.msra.mxu0 %v1375
        %1433 = vmatprep.subr.mxu0 %v1374
        %1434 = vmatpush1.msra.mxu0 %v1373
        %1435 = vmatprep.subr.mxu0 %v1372
        %1436 = vmatpush1.msra.mxu0 %v1371
        %1437 = vmatprep.subr.mxu0 %v1370
        %1438 = vmatpush1.msra.mxu0 %v1369
        %1439 = vmatprep.subr.mxu0 %v1368
        %1440 = vmatpush1.msra.mxu0 %v1367
        %1441 = vmatprep.subr.mxu0 0.0
        %1442 = vmatpush2.msra.mxu0 0.0
        %1443 = vmatprep.subr.mxu0 0.0
        %1444 = vmatpush2.msra.mxu0 0.0
        %1445 = vmatprep.subr.mxu0 0.0
        %1446 = vmatpush2.msra.mxu0 0.0
        %1447 = vmatprep.subr.mxu0 0.0
        %1448 = vmatpush2.msra.mxu0 0.0
        %1449 = vmatprep.subr.mxu0 0.0
        %1450 = vmatpush2.msra.mxu0 0.0
        %1451 = vmatprep.subr.mxu0 0.0
        %1452 = vmatpush2.msra.mxu0 0.0
        %1453 = vmatprep.subr.mxu0 0.0
        %1454 = vmatpush2.msra.mxu0 0.0
        %1455 = vmatprep.subr.mxu0 0.0
        %1456 = vmatpush2.msra.mxu0 0.0
        %1457 = vmatprep.subr.mxu0 0.0
        %1458 = vmatpush2.msra.mxu0 0.0
        %1459 = vmatprep.subr.mxu0 0.0
        %1460 = vmatpush2.msra.mxu0 0.0
        %1461 = vmatprep.subr.mxu0 0.0
        %1462 = vmatpush2.msra.mxu0 0.0
        %1463 = vmatprep.subr.mxu0 0.0
        %1464 = vmatpush2.msra.mxu0 0.0
        %1465 = vmatprep.subr.mxu0 0.0
        %1466 = vmatpush2.msra.mxu0 0.0
        %1467 = vmatprep.subr.mxu0 0.0
        %1468 = vmatpush2.msra.mxu0 0.0
        %1469 = vmatprep.subr.mxu0 0.0
        %1470 = vmatpush2.msra.mxu0 0.0
        %1471 = vmatprep.subr.mxu0 0.0
        %1472 = vmatpush2.msra.mxu0 0.0
        %1473 = vmatprep.mubr.f32.mxu0 0.0
        %1474 = vmatmul.mubr.f32.gmra.mxu0 %v1397
        %v1475 = vpop.f32.mrf.mxu0
        %v1476 = vadd.f32 0.0, %v1475
        %v1477 = vpop.f32.mrf.mxu0
        %v1478 = vadd.f32 0.0, %v1477
        %1479 = vmatprep.mubr.f32.mxu0 0.0
        %1480 = vmatmul.mubr.f32.gmra.mxu0 %v1400
        %v1481 = vpop.f32.mrf.mxu0
        %v1482 = vadd.f32 0.0, %v1481
        %v1483 = vpop.f32.mrf.mxu0
        %v1484 = vadd.f32 0.0, %v1483
        %1485 = vdwg.mxu0
        %v1487 = vlaneseq
        %v1488 = vshrl.u32 %v1487, 7
        %v1489 = vsub.s32 0, %v1488
        %v1490 = vrot.slane %v317, %v1489
        %v1491 = vlaneseq
        %v1492 = vshrl.u32 %v1491, 7
        %v1493 = vsub.s32 1, %v1492
        %v1494 = vrot.slane %v317, %v1493
        %v1497 = vadd.f32 %v1490, %v1476
        %v1498 = vadd.f32 %v1494, %v1478
        %v1499 = vadd.f32 %v1490, %v1482
        %v1500 = vadd.f32 %v1494, %v1484
        %s1501 = scalar_lea.vmem %s4, 224
        %v1502 = vld [vmem:[%s1501] sm:$0xff]
        %v1503 = vld [vmem:[%s1501 + $0x8] sm:$0xff]
        %v1504 = vld [vmem:[%s1501 + $0x10] sm:$0xff]
        %v1505 = vld [vmem:[%s1501 + $0x18] sm:$0xff]
        %v1506 = vld [vmem:[%s1501 + $0x20] sm:$0xff]
        %v1507 = vld [vmem:[%s1501 + $0x28] sm:$0xff]
        %v1508 = vld [vmem:[%s1501 + $0x30] sm:$0xff]
        %v1509 = vld [vmem:[%s1501 + $0x38] sm:$0xff]
        %v1510 = vld [vmem:[%s1501 + $0x40] sm:$0xff]
        %v1511 = vld [vmem:[%s1501 + $0x48] sm:$0xff]
        %v1512 = vld [vmem:[%s1501 + $0x50] sm:$0xff]
        %v1513 = vld [vmem:[%s1501 + $0x58] sm:$0xff]
        %v1514 = vld [vmem:[%s1501 + $0x60] sm:$0xff]
        %v1515 = vld [vmem:[%s1501 + $0x68] sm:$0xff]
        %v1516 = vld [vmem:[%s1501 + $0x70] sm:$0xff]
        %v1517 = vld [vmem:[%s1501 + $0x78] sm:$0xff]
        %v1518 = vld [vmem:[%s1501 + $0x80] sm:$0xff]
        %v1519 = vld [vmem:[%s1501 + $0x88] sm:$0xff]
        %v1520 = vld [vmem:[%s1501 + $0x90] sm:$0xff]
        %v1521 = vld [vmem:[%s1501 + $0x98] sm:$0xff]
        %v1522 = vld [vmem:[%s1501 + $0xa0] sm:$0xff]
        %v1523 = vld [vmem:[%s1501 + $0xa8] sm:$0xff]
        %v1524 = vld [vmem:[%s1501 + $0xb0] sm:$0xff]
        %v1525 = vld [vmem:[%s1501 + $0xb8] sm:$0xff]
        %v1526 = vld [vmem:[%s1501 + $0xc0] sm:$0xff]
        %v1527 = vld [vmem:[%s1501 + $0xc8] sm:$0xff]
        %v1528 = vld [vmem:[%s1501 + $0xd0] sm:$0x1]
        %v1529 = vld [vmem:[%s1501 + $0xd8] sm:$0x1]
        %v1530 = vrot.slane %v1365, 1
        %v1531 = vrot.slane %v1366, 1
        %v1532 = vsel %vm529, %v1530, %v1531
        %v1533 = vsel %vm1395, %v1532, 0
        %v1535 = vsel %vm1395, %v1531, 0
        %v1538 = vsel %vm1402, %v1528, 0
        %v1541 = vsel %vm1402, %v1529, 0
        %1543 = vmatprep.subr.mxu0 0.0
        %1544 = vmatpush1.msra.mxu0 0.0
        %1545 = vmatprep.subr.mxu0 0.0
        %1546 = vmatpush1.msra.mxu0 0.0
        %1547 = vmatprep.subr.mxu0 %v1541
        %1548 = vmatpush1.msra.mxu0 %v1538
        %1549 = vmatprep.subr.mxu0 %v1527
        %1550 = vmatpush1.msra.mxu0 %v1526
        %1551 = vmatprep.subr.mxu0 %v1525
        %1552 = vmatpush1.msra.mxu0 %v1524
        %1553 = vmatprep.subr.mxu0 %v1523
        %1554 = vmatpush1.msra.mxu0 %v1522
        %1555 = vmatprep.subr.mxu0 %v1521
        %1556 = vmatpush1.msra.mxu0 %v1520
        %1557 = vmatprep.subr.mxu0 %v1519
        %1558 = vmatpush1.msra.mxu0 %v1518
        %1559 = vmatprep.subr.mxu0 %v1517
        %1560 = vmatpush1.msra.mxu0 %v1516
        %1561 = vmatprep.subr.mxu0 %v1515
        %1562 = vmatpush1.msra.mxu0 %v1514
        %1563 = vmatprep.subr.mxu0 %v1513
        %1564 = vmatpush1.msra.mxu0 %v1512
        %1565 = vmatprep.subr.mxu0 %v1511
        %1566 = vmatpush1.msra.mxu0 %v1510
        %1567 = vmatprep.subr.mxu0 %v1509
        %1568 = vmatpush1.msra.mxu0 %v1508
        %1569 = vmatprep.subr.mxu0 %v1507
        %1570 = vmatpush1.msra.mxu0 %v1506
        %1571 = vmatprep.subr.mxu0 %v1505
        %1572 = vmatpush1.msra.mxu0 %v1504
        %1573 = vmatprep.subr.mxu0 %v1503
        %1574 = vmatpush1.msra.mxu0 %v1502
        %1575 = vmatprep.subr.mxu0 0.0
        %1576 = vmatpush2.msra.mxu0 0.0
        %1577 = vmatprep.subr.mxu0 0.0
        %1578 = vmatpush2.msra.mxu0 0.0
        %1579 = vmatprep.subr.mxu0 0.0
        %1580 = vmatpush2.msra.mxu0 0.0
        %1581 = vmatprep.subr.mxu0 0.0
        %1582 = vmatpush2.msra.mxu0 0.0
        %1583 = vmatprep.subr.mxu0 0.0
        %1584 = vmatpush2.msra.mxu0 0.0
        %1585 = vmatprep.subr.mxu0 0.0
        %1586 = vmatpush2.msra.mxu0 0.0
        %1587 = vmatprep.subr.mxu0 0.0
        %1588 = vmatpush2.msra.mxu0 0.0
        %1589 = vmatprep.subr.mxu0 0.0
        %1590 = vmatpush2.msra.mxu0 0.0
        %1591 = vmatprep.subr.mxu0 0.0
        %1592 = vmatpush2.msra.mxu0 0.0
        %1593 = vmatprep.subr.mxu0 0.0
        %1594 = vmatpush2.msra.mxu0 0.0
        %1595 = vmatprep.subr.mxu0 0.0
        %1596 = vmatpush2.msra.mxu0 0.0
        %1597 = vmatprep.subr.mxu0 0.0
        %1598 = vmatpush2.msra.mxu0 0.0
        %1599 = vmatprep.subr.mxu0 0.0
        %1600 = vmatpush2.msra.mxu0 0.0
        %1601 = vmatprep.subr.mxu0 0.0
        %1602 = vmatpush2.msra.mxu0 0.0
        %1603 = vmatprep.subr.mxu0 0.0
        %1604 = vmatpush2.msra.mxu0 0.0
        %1605 = vmatprep.subr.mxu0 0.0
        %1606 = vmatpush2.msra.mxu0 0.0
        %1607 = vmatprep.mubr.f32.mxu0 0.0
        %1608 = vmatmul.mubr.f32.gmra.mxu0 %v1533
        %v1609 = vpop.f32.mrf.mxu0
        %v1610 = vadd.f32 0.0, %v1609
        %v1611 = vpop.f32.mrf.mxu0
        %v1612 = vadd.f32 0.0, %v1611
        %1613 = vmatprep.mubr.f32.mxu0 0.0
        %1614 = vmatmul.mubr.f32.gmra.mxu0 %v1535
        %v1615 = vpop.f32.mrf.mxu0
        %v1616 = vadd.f32 0.0, %v1615
        %v1617 = vpop.f32.mrf.mxu0
        %v1618 = vadd.f32 0.0, %v1617
        %1619 = vdwg.mxu0
        %v1620 = vadd.f32 %v1497, %v1610
        %v1621 = vadd.f32 %v1498, %v1612
        %v1622 = vadd.f32 %v1499, %v1616
        %v1623 = vadd.f32 %v1500, %v1618
        %s1624 = scalar_lea.vmem %s4, 448
        %v1625 = vld [vmem:[%s1624] sm:$0xff]
        %v1626 = vld [vmem:[%s1624 + $0x8] sm:$0xff]
        %v1627 = vld [vmem:[%s1624 + $0x10] sm:$0xff]
        %v1628 = vld [vmem:[%s1624 + $0x18] sm:$0xff]
        %v1629 = vld [vmem:[%s1624 + $0x20] sm:$0xff]
        %v1630 = vld [vmem:[%s1624 + $0x28] sm:$0xff]
        %v1631 = vld [vmem:[%s1624 + $0x30] sm:$0xff]
        %v1632 = vld [vmem:[%s1624 + $0x38] sm:$0xff]
        %v1633 = vld [vmem:[%s1624 + $0x40] sm:$0xff]
        %v1634 = vld [vmem:[%s1624 + $0x48] sm:$0xff]
        %v1635 = vld [vmem:[%s1624 + $0x50] sm:$0xff]
        %v1636 = vld [vmem:[%s1624 + $0x58] sm:$0xff]
        %v1637 = vld [vmem:[%s1624 + $0x60] sm:$0xff]
        %v1638 = vld [vmem:[%s1624 + $0x68] sm:$0xff]
        %v1639 = vld [vmem:[%s1624 + $0x70] sm:$0xff]
        %v1640 = vld [vmem:[%s1624 + $0x78] sm:$0xff]
        %v1641 = vld [vmem:[%s1624 + $0x80] sm:$0xff]
        %v1642 = vld [vmem:[%s1624 + $0x88] sm:$0xff]
        %v1643 = vld [vmem:[%s1624 + $0x90] sm:$0xff]
        %v1644 = vld [vmem:[%s1624 + $0x98] sm:$0xff]
        %v1645 = vld [vmem:[%s1624 + $0xa0] sm:$0xff]
        %v1646 = vld [vmem:[%s1624 + $0xa8] sm:$0xff]
        %v1647 = vld [vmem:[%s1624 + $0xb0] sm:$0xff]
        %v1648 = vld [vmem:[%s1624 + $0xb8] sm:$0xff]
        %v1649 = vld [vmem:[%s1624 + $0xc0] sm:$0xff]
        %v1650 = vld [vmem:[%s1624 + $0xc8] sm:$0xff]
        %v1651 = vld [vmem:[%s1624 + $0xd0] sm:$0x1]
        %v1652 = vld [vmem:[%s1624 + $0xd8] sm:$0x1]
        %vm1653 = vcmask 1045504
        %v1654 = vrot.slane %v1365, 2
        %v1655 = vrot.slane %v1366, 2
        %v1656 = vsel %vm1653, %v1654, %v1655
        %v1657 = vsel %vm1395, %v1656, 0
        %v1659 = vsel %vm1395, %v1655, 0
        %v1662 = vsel %vm1402, %v1651, 0
        %v1665 = vsel %vm1402, %v1652, 0
        %1667 = vmatprep.subr.mxu0 0.0
        %1668 = vmatpush1.msra.mxu0 0.0
        %1669 = vmatprep.subr.mxu0 0.0
        %1670 = vmatpush1.msra.mxu0 0.0
        %1671 = vmatprep.subr.mxu0 %v1665
        %1672 = vmatpush1.msra.mxu0 %v1662
        %1673 = vmatprep.subr.mxu0 %v1650
        %1674 = vmatpush1.msra.mxu0 %v1649
        %1675 = vmatprep.subr.mxu0 %v1648
        %1676 = vmatpush1.msra.mxu0 %v1647
        %1677 = vmatprep.subr.mxu0 %v1646
        %1678 = vmatpush1.msra.mxu0 %v1645
        %1679 = vmatprep.subr.mxu0 %v1644
        %1680 = vmatpush1.msra.mxu0 %v1643
        %1681 = vmatprep.subr.mxu0 %v1642
        %1682 = vmatpush1.msra.mxu0 %v1641
        %1683 = vmatprep.subr.mxu0 %v1640
        %1684 = vmatpush1.msra.mxu0 %v1639
        %1685 = vmatprep.subr.mxu0 %v1638
        %1686 = vmatpush1.msra.mxu0 %v1637
        %1687 = vmatprep.subr.mxu0 %v1636
        %1688 = vmatpush1.msra.mxu0 %v1635
        %1689 = vmatprep.subr.mxu0 %v1634
        %1690 = vmatpush1.msra.mxu0 %v1633
        %1691 = vmatprep.subr.mxu0 %v1632
        %1692 = vmatpush1.msra.mxu0 %v1631
        %1693 = vmatprep.subr.mxu0 %v1630
        %1694 = vmatpush1.msra.mxu0 %v1629
        %1695 = vmatprep.subr.mxu0 %v1628
        %1696 = vmatpush1.msra.mxu0 %v1627
        %1697 = vmatprep.subr.mxu0 %v1626
        %1698 = vmatpush1.msra.mxu0 %v1625
        %1699 = vmatprep.subr.mxu0 0.0
        %1700 = vmatpush2.msra.mxu0 0.0
        %1701 = vmatprep.subr.mxu0 0.0
        %1702 = vmatpush2.msra.mxu0 0.0
        %1703 = vmatprep.subr.mxu0 0.0
        %1704 = vmatpush2.msra.mxu0 0.0
        %1705 = vmatprep.subr.mxu0 0.0
        %1706 = vmatpush2.msra.mxu0 0.0
        %1707 = vmatprep.subr.mxu0 0.0
        %1708 = vmatpush2.msra.mxu0 0.0
        %1709 = vmatprep.subr.mxu0 0.0
        %1710 = vmatpush2.msra.mxu0 0.0
        %1711 = vmatprep.subr.mxu0 0.0
        %1712 = vmatpush2.msra.mxu0 0.0
        %1713 = vmatprep.subr.mxu0 0.0
        %1714 = vmatpush2.msra.mxu0 0.0
        %1715 = vmatprep.subr.mxu0 0.0
        %1716 = vmatpush2.msra.mxu0 0.0
        %1717 = vmatprep.subr.mxu0 0.0
        %1718 = vmatpush2.msra.mxu0 0.0
        %1719 = vmatprep.subr.mxu0 0.0
        %1720 = vmatpush2.msra.mxu0 0.0
        %1721 = vmatprep.subr.mxu0 0.0
        %1722 = vmatpush2.msra.mxu0 0.0
        %1723 = vmatprep.subr.mxu0 0.0
        %1724 = vmatpush2.msra.mxu0 0.0
        %1725 = vmatprep.subr.mxu0 0.0
        %1726 = vmatpush2.msra.mxu0 0.0
        %1727 = vmatprep.subr.mxu0 0.0
        %1728 = vmatpush2.msra.mxu0 0.0
        %1729 = vmatprep.subr.mxu0 0.0
        %1730 = vmatpush2.msra.mxu0 0.0
        %1731 = vmatprep.mubr.f32.mxu0 0.0
        %1732 = vmatmul.mubr.f32.gmra.mxu0 %v1657
        %v1733 = vpop.f32.mrf.mxu0
        %v1734 = vadd.f32 0.0, %v1733
        %v1735 = vpop.f32.mrf.mxu0
        %v1736 = vadd.f32 0.0, %v1735
        %1737 = vmatprep.mubr.f32.mxu0 0.0
        %1738 = vmatmul.mubr.f32.gmra.mxu0 %v1659
        %v1739 = vpop.f32.mrf.mxu0
        %v1740 = vadd.f32 0.0, %v1739
        %v1741 = vpop.f32.mrf.mxu0
        %v1742 = vadd.f32 0.0, %v1741
        %1743 = vdwg.mxu0
        %v1744 = vadd.f32 %v1620, %v1734
        %v1745 = vadd.f32 %v1621, %v1736
        %v1746 = vadd.f32 %v1622, %v1740
        %v1747 = vadd.f32 %v1623, %v1742
        %v1748 = vmax.f32 %v1744, 0.0
        %v1749 = vmax.f32 %v1745, 0.0
        %v1750 = vmax.f32 %v1746, 0.0
        %v1751 = vmax.f32 %v1747, 0.0
        %1752 = vst [vmem:[%s311] sm:$0xff] %v1748
        %vm1753 = vcmask 654336
        %1754 = vst.msk [vmem:[%s311 + $0x8] sm:$0xff] %vm1753, %v1749
        %1755 = vst [vmem:[%s311 + $0x10] sm:$0x1f] %v1750
        %vm1756 = vcmask 651264
        %1757 = vst.msk [vmem:[%s311 + $0x18] sm:$0x1f] %vm1756, %v1751
        %p1758 = scmp.lt.s32.totalorder %s19, 1
        %s1759 = scalar_select %p1758, %s19, 1
        %s1760 = smul.addr %s1759, 4
        %s1761 = smul.addr %s1760, 8
        %s1762 = scalar_lea.vmem %s6, %s1761
        // Predicated region
        $region57: #{conv_nn_forward.2} parent=43 // pred_check
          %p1763 = pneg %p173
        $region58: #{conv_nn_forward.2} parent=43 // pred_check_branch
          %1765 = sbr.rel (%p1763) target = $region60
        $region59: #{conv_nn_forward.2} parent=43 // pred_region
          _
        $region60: #{conv_nn_forward.2} parent=43 // pred_fallthru
          _
      $region44: #{conv_nn_forward.2} parent=5 // pred_fallthru
        _
      %p1766 = scmp.le.s32.totalorder 2, %s14
      // Predicated region
      $region61: #{conv_nn_forward.2} parent=5 // pred_check
        %p1767 = pneg %p1766
      $region62: #{conv_nn_forward.2} parent=5 // pred_check_branch
        %1769 = sbr.rel (%p1767) target = $region64
      $region63: #{conv_nn_forward.2} parent=5 // pred_region
        %s1770 = ssub.s32 %s14, 2
        // Predicated region
        $region65: #{conv_nn_forward.2} parent=63 // pred_check
          %p1771 = pneg %p179
        $region66: #{conv_nn_forward.2} parent=63 // pred_check_branch
          %1773 = sbr.rel (%p1771) target = $region68
        $region67: #{conv_nn_forward.2} parent=63 // pred_region
          %p1774 = scmp.lt.s32.totalorder %s20, 1
          %s1775 = scalar_select %p1774, %s20, 1
          %s1776 = smul.addr %s1775, 4
          %s1777 = smul.addr %s1776, 8
          %s1778 = scalar_lea.vmem %s6, %s1777
        $region68: #{conv_nn_forward.2} parent=63 // pred_fallthru
          _
      $region64: #{conv_nn_forward.2} parent=5 // pred_fallthru
        _
    $region6: #{conv_nn_forward.2} parent=1 // loop_footer
      %s18 = sadd.s32 1, %s14
    $region7: #{conv_nn_forward.2} parent=1 // loop_footer_branch
      %13 = sbr.rel target = $region3
    $region8: #{conv_nn_forward.2} parent=1 // loop_exit
      _
    %1779 = vsyncpa [#allocation3], 1
    %s1780 = scalar_lea.sflag [#allocation3], 1
    %1781 = vsyncpa %s1780, 1
    %1782 = vsyncpa [#allocation5], 1

// kernel: conv_nn_forward.3
$region0: #{conv_nn_forward.3}
  #allocation0 [shape = 'u32[]', space=smem, size = 0x4, offset = 0x4, fixed_abs, tag = 'smem constant byte address 0x4 - core index']
  #allocation1 [shape = 'u32[144,128]{1,0:T(1,128)}', space=vmem, size = 0x12000, scoped, tag = 'internal scratch']
  %s0 = inlined_call_operand.vmem [shape: f32[2,2704], index: 0, kind: input, shape index: {}]
  %s1 = inlined_call_operand.vmem [shape: f32[2704,130], index: 1, kind: input, shape index: {}]
  %s2 = inlined_call_operand.vmem [shape: f32[1,130], index: 2, kind: input, shape index: {}]
  %s3 = inlined_call_operand.vmem [shape: f32[130,72], index: 3, kind: input, shape index: {}]
  %s4 = inlined_call_operand.vmem [shape: f32[1,72], index: 4, kind: input, shape index: {}]
  %s5 = inlined_call_operand.vmem [shape: f32[72,10], index: 5, kind: input, shape index: {}]
  %s6 = inlined_call_operand.vmem [shape: f32[1,10], index: 6, kind: input, shape index: {}]
  %s7 = inlined_call_operand.hbm [shape: f32[2,10], index: 7, kind: output, shape index: {}]
  %s8 = sld [smem:[#allocation0]]
  $region38: #{conv_nn_forward.3} parent=0
    _
  %s10 = ssub.s32 1, %s8
  %s11 = scalar_select 0, %s10, %s8
  $region1: #{conv_nn_forward.3} parent=0
    #allocation2 [shape = 'u8[1024]{0}', space=vmem, size = 0x400, scoped, tag = 'output window, operand 0, single buffered']
    #allocation3 [shape = 's32[1]{0}', space=sflag, size = 0x4, scoped, tag = 'scoped memory for conv_nn_forward.3']
    %12 = vsyncpa [#allocation3], 0
    // Predicated region
    $region2: #{conv_nn_forward.3} parent=1 // pred_check
      _
    $region3: #{conv_nn_forward.3} parent=1 // pred_check_branch
      %14 = sbr.rel (0) target = $region5
    $region4: #{conv_nn_forward.3} parent=1 // pred_region
      _
    $region5: #{conv_nn_forward.3} parent=1 // pred_fallthru
      _
    // Predicated region
    $region6: #{conv_nn_forward.3} parent=1 // pred_check
      _
    $region7: #{conv_nn_forward.3} parent=1 // pred_check_branch
      %16 = sbr.rel (0) target = $region9
    $region8: #{conv_nn_forward.3} parent=1 // pred_region
      _
    $region9: #{conv_nn_forward.3} parent=1 // pred_fallthru
      _
    // Predicated region
    $region10: #{conv_nn_forward.3} parent=1 // pred_check
      _
    $region11: #{conv_nn_forward.3} parent=1 // pred_check_branch
      %18 = sbr.rel (0) target = $region13
    $region12: #{conv_nn_forward.3} parent=1 // pred_region
      _
    $region13: #{conv_nn_forward.3} parent=1 // pred_fallthru
      _
    // Predicated region
    $region14: #{conv_nn_forward.3} parent=1 // pred_check
      _
    $region15: #{conv_nn_forward.3} parent=1 // pred_check_branch
      %20 = sbr.rel (0) target = $region17
    $region16: #{conv_nn_forward.3} parent=1 // pred_region
      _
    $region17: #{conv_nn_forward.3} parent=1 // pred_fallthru
      _
    // Predicated region
    $region18: #{conv_nn_forward.3} parent=1 // pred_check
      _
    $region19: #{conv_nn_forward.3} parent=1 // pred_check_branch
      %22 = sbr.rel (0) target = $region21
    $region20: #{conv_nn_forward.3} parent=1 // pred_region
      _
    $region21: #{conv_nn_forward.3} parent=1 // pred_fallthru
      _
    // Predicated region
    $region22: #{conv_nn_forward.3} parent=1 // pred_check
      _
    $region23: #{conv_nn_forward.3} parent=1 // pred_check_branch
      %24 = sbr.rel (0) target = $region25
    $region24: #{conv_nn_forward.3} parent=1 // pred_region
      _
    $region25: #{conv_nn_forward.3} parent=1 // pred_fallthru
      _
    // Predicated region
    $region26: #{conv_nn_forward.3} parent=1 // pred_check
      _
    $region27: #{conv_nn_forward.3} parent=1 // pred_check_branch
      %26 = sbr.rel (0) target = $region29
    $region28: #{conv_nn_forward.3} parent=1 // pred_region
      _
    $region29: #{conv_nn_forward.3} parent=1 // pred_fallthru
      _
    %v27 = vld [vmem:[%s0] sm:$0xff]
    %v28 = vld [vmem:[%s0 + $0x8] sm:$0xff]
    %v29 = vld [vmem:[%s0 + $0x10] sm:$0xff]
    %v30 = vld [vmem:[%s0 + $0x18] sm:$0xff]
    %v31 = vld [vmem:[%s0 + $0x20] sm:$0xff]
    %v32 = vld [vmem:[%s0 + $0x28] sm:$0xf]
    %v33 = vld [vmem:[%s1] sm:$0xff]
    %v34 = vld [vmem:[%s1 + $0x8] sm:$0xff]
    %v35 = vld [vmem:[%s1 + $0x10] sm:$0xff]
    %v36 = vld [vmem:[%s1 + $0x18] sm:$0xff]
    %v37 = vld [vmem:[%s1 + $0x20] sm:$0xff]
    %v38 = vld [vmem:[%s1 + $0x28] sm:$0xff]
    %v39 = vld [vmem:[%s1 + $0x30] sm:$0xff]
    %v40 = vld [vmem:[%s1 + $0x38] sm:$0xff]
    %v41 = vld [vmem:[%s1 + $0x40] sm:$0xff]
    %v42 = vld [vmem:[%s1 + $0x48] sm:$0xff]
    %v43 = vld [vmem:[%s1 + $0x50] sm:$0xff]
    %v44 = vld [vmem:[%s1 + $0x58] sm:$0xff]
    %v45 = vld [vmem:[%s1 + $0x60] sm:$0xff]
    %v46 = vld [vmem:[%s1 + $0x68] sm:$0xff]
    %v47 = vld [vmem:[%s1 + $0x70] sm:$0xff]
    %v48 = vld [vmem:[%s1 + $0x78] sm:$0xff]
    %v49 = vld [vmem:[%s1 + $0x80] sm:$0xff]
    %v50 = vld [vmem:[%s1 + $0x88] sm:$0xff]
    %v51 = vld [vmem:[%s1 + $0x90] sm:$0xff]
    %v52 = vld [vmem:[%s1 + $0x98] sm:$0xff]
    %v53 = vld [vmem:[%s1 + $0xa0] sm:$0xff]
    %v54 = vld [vmem:[%s1 + $0xa8] sm:$0xff]
    %v55 = vld [vmem:[%s1 + $0xb0] sm:$0xff]
    %v56 = vld [vmem:[%s1 + $0xb8] sm:$0xff]
    %v57 = vld [vmem:[%s1 + $0xc0] sm:$0xff]
    %v58 = vld [vmem:[%s1 + $0xc8] sm:$0xff]
    %v59 = vld [vmem:[%s1 + $0xd0] sm:$0xff]
    %v60 = vld [vmem:[%s1 + $0xd8] sm:$0xff]
    %v61 = vld [vmem:[%s1 + $0xe0] sm:$0xff]
    %v62 = vld [vmem:[%s1 + $0xe8] sm:$0xff]
    %v63 = vld [vmem:[%s1 + $0xf0] sm:$0xff]
    %v64 = vld [vmem:[%s1 + $0xf8] sm:$0xff]
    %v65 = vld [vmem:[%s1 + $0x100] sm:$0xff]
    %v66 = vld [vmem:[%s1 + $0x108] sm:$0xff]
    %v67 = vld [vmem:[%s1 + $0x110] sm:$0xff]
    %v68 = vld [vmem:[%s1 + $0x118] sm:$0xff]
    %v69 = vld [vmem:[%s1 + $0x120] sm:$0xff]
    %v70 = vld [vmem:[%s1 + $0x128] sm:$0xff]
    %v71 = vld [vmem:[%s1 + $0x130] sm:$0xff]
    %v72 = vld [vmem:[%s1 + $0x138] sm:$0xff]
    %v73 = vld [vmem:[%s1 + $0x140] sm:$0xff]
    %v74 = vld [vmem:[%s1 + $0x148] sm:$0xff]
    %v75 = vld [vmem:[%s1 + $0x150] sm:$0xff]
    %v76 = vld [vmem:[%s1 + $0x158] sm:$0xff]
    %v77 = vld [vmem:[%s1 + $0x160] sm:$0xff]
    %v78 = vld [vmem:[%s1 + $0x168] sm:$0xff]
    %v79 = vld [vmem:[%s1 + $0x170] sm:$0xff]
    %v80 = vld [vmem:[%s1 + $0x178] sm:$0xff]
    %v81 = vld [vmem:[%s1 + $0x180] sm:$0xff]
    %v82 = vld [vmem:[%s1 + $0x188] sm:$0xff]
    %v83 = vld [vmem:[%s1 + $0x190] sm:$0xff]
    %v84 = vld [vmem:[%s1 + $0x198] sm:$0xff]
    %v85 = vld [vmem:[%s1 + $0x1a0] sm:$0xff]
    %v86 = vld [vmem:[%s1 + $0x1a8] sm:$0xff]
    %v87 = vld [vmem:[%s1 + $0x1b0] sm:$0xff]
    %v88 = vld [vmem:[%s1 + $0x1b8] sm:$0xff]
    %v89 = vld [vmem:[%s1 + $0x1c0] sm:$0xff]
    %v90 = vld [vmem:[%s1 + $0x1c8] sm:$0xff]
    %v91 = vld [vmem:[%s1 + $0x1d0] sm:$0xff]
    %v92 = vld [vmem:[%s1 + $0x1d8] sm:$0xff]
    %v93 = vld [vmem:[%s1 + $0x1e0] sm:$0xff]
    %v94 = vld [vmem:[%s1 + $0x1e8] sm:$0xff]
    %v95 = vld [vmem:[%s1 + $0x1f0] sm:$0xff]
    %v96 = vld [vmem:[%s1 + $0x1f8] sm:$0xff]
    %v97 = vld [vmem:[%s1 + $0x200] sm:$0xff]
    %v98 = vld [vmem:[%s1 + $0x208] sm:$0xff]
    %v99 = vld [vmem:[%s1 + $0x210] sm:$0xff]
    %v100 = vld [vmem:[%s1 + $0x218] sm:$0xff]
    %v101 = vld [vmem:[%s1 + $0x220] sm:$0xff]
    %v102 = vld [vmem:[%s1 + $0x228] sm:$0xff]
    %v103 = vld [vmem:[%s1 + $0x230] sm:$0xff]
    %v104 = vld [vmem:[%s1 + $0x238] sm:$0xff]
    %v105 = vld [vmem:[%s1 + $0x240] sm:$0xff]
    %v106 = vld [vmem:[%s1 + $0x248] sm:$0xff]
    %v107 = vld [vmem:[%s1 + $0x250] sm:$0xff]
    %v108 = vld [vmem:[%s1 + $0x258] sm:$0xff]
    %v109 = vld [vmem:[%s1 + $0x260] sm:$0xff]
    %v110 = vld [vmem:[%s1 + $0x268] sm:$0xff]
    %v111 = vld [vmem:[%s1 + $0x270] sm:$0xff]
    %v112 = vld [vmem:[%s1 + $0x278] sm:$0xff]
    %v113 = vld [vmem:[%s1 + $0x280] sm:$0xff]
    %v114 = vld [vmem:[%s1 + $0x288] sm:$0xff]
    %v115 = vld [vmem:[%s1 + $0x290] sm:$0xff]
    %v116 = vld [vmem:[%s1 + $0x298] sm:$0xff]
    %v117 = vld [vmem:[%s1 + $0x2a0] sm:$0xff]
    %v118 = vld [vmem:[%s1 + $0x2a8] sm:$0xff]
    %v119 = vld [vmem:[%s1 + $0x2b0] sm:$0xff]
    %v120 = vld [vmem:[%s1 + $0x2b8] sm:$0xff]
    %v121 = vld [vmem:[%s1 + $0x2c0] sm:$0xff]
    %v122 = vld [vmem:[%s1 + $0x2c8] sm:$0xff]
    %v123 = vld [vmem:[%s1 + $0x2d0] sm:$0xff]
    %v124 = vld [vmem:[%s1 + $0x2d8] sm:$0xff]
    %v125 = vld [vmem:[%s1 + $0x2e0] sm:$0xff]
    %v126 = vld [vmem:[%s1 + $0x2e8] sm:$0xff]
    %v127 = vld [vmem:[%s1 + $0x2f0] sm:$0xff]
    %v128 = vld [vmem:[%s1 + $0x2f8] sm:$0xff]
    %v129 = vld [vmem:[%s1 + $0x300] sm:$0xff]
    %v130 = vld [vmem:[%s1 + $0x308] sm:$0xff]
    %v131 = vld [vmem:[%s1 + $0x310] sm:$0xff]
    %v132 = vld [vmem:[%s1 + $0x318] sm:$0xff]
    %v133 = vld [vmem:[%s1 + $0x320] sm:$0xff]
    %v134 = vld [vmem:[%s1 + $0x328] sm:$0xff]
    %v135 = vld [vmem:[%s1 + $0x330] sm:$0xff]
    %v136 = vld [vmem:[%s1 + $0x338] sm:$0xff]
    %v137 = vld [vmem:[%s1 + $0x340] sm:$0xff]
    %v138 = vld [vmem:[%s1 + $0x348] sm:$0xff]
    %v139 = vld [vmem:[%s1 + $0x350] sm:$0xff]
    %v140 = vld [vmem:[%s1 + $0x358] sm:$0xff]
    %v141 = vld [vmem:[%s1 + $0x360] sm:$0xff]
    %v142 = vld [vmem:[%s1 + $0x368] sm:$0xff]
    %v143 = vld [vmem:[%s1 + $0x370] sm:$0xff]
    %v144 = vld [vmem:[%s1 + $0x378] sm:$0xff]
    %v145 = vld [vmem:[%s1 + $0x380] sm:$0xff]
    %v146 = vld [vmem:[%s1 + $0x388] sm:$0xff]
    %v147 = vld [vmem:[%s1 + $0x390] sm:$0xff]
    %v148 = vld [vmem:[%s1 + $0x398] sm:$0xff]
    %v149 = vld [vmem:[%s1 + $0x3a0] sm:$0xff]
    %v150 = vld [vmem:[%s1 + $0x3a8] sm:$0xff]
    %v151 = vld [vmem:[%s1 + $0x3b0] sm:$0xff]
    %v152 = vld [vmem:[%s1 + $0x3b8] sm:$0xff]
    %v153 = vld [vmem:[%s1 + $0x3c0] sm:$0xff]
    %v154 = vld [vmem:[%s1 + $0x3c8] sm:$0xff]
    %v155 = vld [vmem:[%s1 + $0x3d0] sm:$0xff]
    %v156 = vld [vmem:[%s1 + $0x3d8] sm:$0xff]
    %v157 = vld [vmem:[%s1 + $0x3e0] sm:$0xff]
    %v158 = vld [vmem:[%s1 + $0x3e8] sm:$0xff]
    %v159 = vld [vmem:[%s1 + $0x3f0] sm:$0xff]
    %v160 = vld [vmem:[%s1 + $0x3f8] sm:$0xff]
    %v161 = vld [vmem:[%s1 + $0x400] sm:$0xff]
    %v162 = vld [vmem:[%s1 + $0x408] sm:$0xff]
    %v163 = vld [vmem:[%s1 + $0x410] sm:$0xff]
    %v164 = vld [vmem:[%s1 + $0x418] sm:$0xff]
    %v165 = vld [vmem:[%s1 + $0x420] sm:$0xff]
    %v166 = vld [vmem:[%s1 + $0x428] sm:$0xff]
    %v167 = vld [vmem:[%s1 + $0x430] sm:$0xff]
    %v168 = vld [vmem:[%s1 + $0x438] sm:$0xff]
    %v169 = vld [vmem:[%s1 + $0x440] sm:$0xff]
    %v170 = vld [vmem:[%s1 + $0x448] sm:$0xff]
    %v171 = vld [vmem:[%s1 + $0x450] sm:$0xff]
    %v172 = vld [vmem:[%s1 + $0x458] sm:$0xff]
    %v173 = vld [vmem:[%s1 + $0x460] sm:$0xff]
    %v174 = vld [vmem:[%s1 + $0x468] sm:$0xff]
    %v175 = vld [vmem:[%s1 + $0x470] sm:$0xff]
    %v176 = vld [vmem:[%s1 + $0x478] sm:$0xff]
    %v177 = vld [vmem:[%s1 + $0x480] sm:$0xff]
    %v178 = vld [vmem:[%s1 + $0x488] sm:$0xff]
    %v179 = vld [vmem:[%s1 + $0x490] sm:$0xff]
    %v180 = vld [vmem:[%s1 + $0x498] sm:$0xff]
    %v181 = vld [vmem:[%s1 + $0x4a0] sm:$0xff]
    %v182 = vld [vmem:[%s1 + $0x4a8] sm:$0xff]
    %v183 = vld [vmem:[%s1 + $0x4b0] sm:$0xff]
    %v184 = vld [vmem:[%s1 + $0x4b8] sm:$0xff]
    %v185 = vld [vmem:[%s1 + $0x4c0] sm:$0xff]
    %v186 = vld [vmem:[%s1 + $0x4c8] sm:$0xff]
    %v187 = vld [vmem:[%s1 + $0x4d0] sm:$0xff]
    %v188 = vld [vmem:[%s1 + $0x4d8] sm:$0xff]
    %v189 = vld [vmem:[%s1 + $0x4e0] sm:$0xff]
    %v190 = vld [vmem:[%s1 + $0x4e8] sm:$0xff]
    %v191 = vld [vmem:[%s1 + $0x4f0] sm:$0xff]
    %v192 = vld [vmem:[%s1 + $0x4f8] sm:$0xff]
    %v193 = vld [vmem:[%s1 + $0x500] sm:$0xff]
    %v194 = vld [vmem:[%s1 + $0x508] sm:$0xff]
    %v195 = vld [vmem:[%s1 + $0x510] sm:$0xff]
    %v196 = vld [vmem:[%s1 + $0x518] sm:$0xff]
    %v197 = vld [vmem:[%s1 + $0x520] sm:$0xff]
    %v198 = vld [vmem:[%s1 + $0x528] sm:$0xff]
    %v199 = vld [vmem:[%s1 + $0x530] sm:$0xff]
    %v200 = vld [vmem:[%s1 + $0x538] sm:$0xff]
    %v201 = vld [vmem:[%s1 + $0x540] sm:$0xff]
    %v202 = vld [vmem:[%s1 + $0x548] sm:$0xff]
    %v203 = vld [vmem:[%s1 + $0x550] sm:$0xff]
    %v204 = vld [vmem:[%s1 + $0x558] sm:$0xff]
    %v205 = vld [vmem:[%s1 + $0x560] sm:$0xff]
    %v206 = vld [vmem:[%s1 + $0x568] sm:$0xff]
    %v207 = vld [vmem:[%s1 + $0x570] sm:$0xff]
    %v208 = vld [vmem:[%s1 + $0x578] sm:$0xff]
    %v209 = vld [vmem:[%s1 + $0x580] sm:$0xff]
    %v210 = vld [vmem:[%s1 + $0x588] sm:$0xff]
    %v211 = vld [vmem:[%s1 + $0x590] sm:$0xff]
    %v212 = vld [vmem:[%s1 + $0x598] sm:$0xff]
    %v213 = vld [vmem:[%s1 + $0x5a0] sm:$0xff]
    %v214 = vld [vmem:[%s1 + $0x5a8] sm:$0xff]
    %v215 = vld [vmem:[%s1 + $0x5b0] sm:$0xff]
    %v216 = vld [vmem:[%s1 + $0x5b8] sm:$0xff]
    %v217 = vld [vmem:[%s1 + $0x5c0] sm:$0xff]
    %v218 = vld [vmem:[%s1 + $0x5c8] sm:$0xff]
    %v219 = vld [vmem:[%s1 + $0x5d0] sm:$0xff]
    %v220 = vld [vmem:[%s1 + $0x5d8] sm:$0xff]
    %v221 = vld [vmem:[%s1 + $0x5e0] sm:$0xff]
    %v222 = vld [vmem:[%s1 + $0x5e8] sm:$0xff]
    %v223 = vld [vmem:[%s1 + $0x5f0] sm:$0xff]
    %v224 = vld [vmem:[%s1 + $0x5f8] sm:$0xff]
    %v225 = vld [vmem:[%s1 + $0x600] sm:$0xff]
    %v226 = vld [vmem:[%s1 + $0x608] sm:$0xff]
    %v227 = vld [vmem:[%s1 + $0x610] sm:$0xff]
    %v228 = vld [vmem:[%s1 + $0x618] sm:$0xff]
    %v229 = vld [vmem:[%s1 + $0x620] sm:$0xff]
    %v230 = vld [vmem:[%s1 + $0x628] sm:$0xff]
    %v231 = vld [vmem:[%s1 + $0x630] sm:$0xff]
    %v232 = vld [vmem:[%s1 + $0x638] sm:$0xff]
    %v233 = vld [vmem:[%s1 + $0x640] sm:$0xff]
    %v234 = vld [vmem:[%s1 + $0x648] sm:$0xff]
    %v235 = vld [vmem:[%s1 + $0x650] sm:$0xff]
    %v236 = vld [vmem:[%s1 + $0x658] sm:$0xff]
    %v237 = vld [vmem:[%s1 + $0x660] sm:$0xff]
    %v238 = vld [vmem:[%s1 + $0x668] sm:$0xff]
    %v239 = vld [vmem:[%s1 + $0x670] sm:$0xff]
    %v240 = vld [vmem:[%s1 + $0x678] sm:$0xff]
    %v241 = vld [vmem:[%s1 + $0x680] sm:$0xff]
    %v242 = vld [vmem:[%s1 + $0x688] sm:$0xff]
    %v243 = vld [vmem:[%s1 + $0x690] sm:$0xff]
    %v244 = vld [vmem:[%s1 + $0x698] sm:$0xff]
    %v245 = vld [vmem:[%s1 + $0x6a0] sm:$0xff]
    %v246 = vld [vmem:[%s1 + $0x6a8] sm:$0xff]
    %v247 = vld [vmem:[%s1 + $0x6b0] sm:$0xff]
    %v248 = vld [vmem:[%s1 + $0x6b8] sm:$0xff]
    %v249 = vld [vmem:[%s1 + $0x6c0] sm:$0xff]
    %v250 = vld [vmem:[%s1 + $0x6c8] sm:$0xff]
    %v251 = vld [vmem:[%s1 + $0x6d0] sm:$0xff]
    %v252 = vld [vmem:[%s1 + $0x6d8] sm:$0xff]
    %v253 = vld [vmem:[%s1 + $0x6e0] sm:$0xff]
    %v254 = vld [vmem:[%s1 + $0x6e8] sm:$0xff]
    %v255 = vld [vmem:[%s1 + $0x6f0] sm:$0xff]
    %v256 = vld [vmem:[%s1 + $0x6f8] sm:$0xff]
    %v257 = vld [vmem:[%s1 + $0x700] sm:$0xff]
    %v258 = vld [vmem:[%s1 + $0x708] sm:$0xff]
    %v259 = vld [vmem:[%s1 + $0x710] sm:$0xff]
    %v260 = vld [vmem:[%s1 + $0x718] sm:$0xff]
    %v261 = vld [vmem:[%s1 + $0x720] sm:$0xff]
    %v262 = vld [vmem:[%s1 + $0x728] sm:$0xff]
    %v263 = vld [vmem:[%s1 + $0x730] sm:$0xff]
    %v264 = vld [vmem:[%s1 + $0x738] sm:$0xff]
    %v265 = vld [vmem:[%s1 + $0x740] sm:$0xff]
    %v266 = vld [vmem:[%s1 + $0x748] sm:$0xff]
    %v267 = vld [vmem:[%s1 + $0x750] sm:$0xff]
    %v268 = vld [vmem:[%s1 + $0x758] sm:$0xff]
    %v269 = vld [vmem:[%s1 + $0x760] sm:$0xff]
    %v270 = vld [vmem:[%s1 + $0x768] sm:$0xff]
    %v271 = vld [vmem:[%s1 + $0x770] sm:$0xff]
    %v272 = vld [vmem:[%s1 + $0x778] sm:$0xff]
    %v273 = vld [vmem:[%s1 + $0x780] sm:$0xff]
    %v274 = vld [vmem:[%s1 + $0x788] sm:$0xff]
    %v275 = vld [vmem:[%s1 + $0x790] sm:$0xff]
    %v276 = vld [vmem:[%s1 + $0x798] sm:$0xff]
    %v277 = vld [vmem:[%s1 + $0x7a0] sm:$0xff]
    %v278 = vld [vmem:[%s1 + $0x7a8] sm:$0xff]
    %v279 = vld [vmem:[%s1 + $0x7b0] sm:$0xff]
    %v280 = vld [vmem:[%s1 + $0x7b8] sm:$0xff]
    %v281 = vld [vmem:[%s1 + $0x7c0] sm:$0xff]
    %v282 = vld [vmem:[%s1 + $0x7c8] sm:$0xff]
    %v283 = vld [vmem:[%s1 + $0x7d0] sm:$0xff]
    %v284 = vld [vmem:[%s1 + $0x7d8] sm:$0xff]
    %v285 = vld [vmem:[%s1 + $0x7e0] sm:$0xff]
    %v286 = vld [vmem:[%s1 + $0x7e8] sm:$0xff]
    %v287 = vld [vmem:[%s1 + $0x7f0] sm:$0xff]
    %v288 = vld [vmem:[%s1 + $0x7f8] sm:$0xff]
    %v289 = vld [vmem:[%s1 + $0x800] sm:$0xff]
    %v290 = vld [vmem:[%s1 + $0x808] sm:$0xff]
    %v291 = vld [vmem:[%s1 + $0x810] sm:$0xff]
    %v292 = vld [vmem:[%s1 + $0x818] sm:$0xff]
    %v293 = vld [vmem:[%s1 + $0x820] sm:$0xff]
    %v294 = vld [vmem:[%s1 + $0x828] sm:$0xff]
    %v295 = vld [vmem:[%s1 + $0x830] sm:$0xff]
    %v296 = vld [vmem:[%s1 + $0x838] sm:$0xff]
    %v297 = vld [vmem:[%s1 + $0x840] sm:$0xff]
    %v298 = vld [vmem:[%s1 + $0x848] sm:$0xff]
    %v299 = vld [vmem:[%s1 + $0x850] sm:$0xff]
    %v300 = vld [vmem:[%s1 + $0x858] sm:$0xff]
    %v301 = vld [vmem:[%s1 + $0x860] sm:$0xff]
    %v302 = vld [vmem:[%s1 + $0x868] sm:$0xff]
    %v303 = vld [vmem:[%s1 + $0x870] sm:$0xff]
    %v304 = vld [vmem:[%s1 + $0x878] sm:$0xff]
    %v305 = vld [vmem:[%s1 + $0x880] sm:$0xff]
    %v306 = vld [vmem:[%s1 + $0x888] sm:$0xff]
    %v307 = vld [vmem:[%s1 + $0x890] sm:$0xff]
    %v308 = vld [vmem:[%s1 + $0x898] sm:$0xff]
    %v309 = vld [vmem:[%s1 + $0x8a0] sm:$0xff]
    %v310 = vld [vmem:[%s1 + $0x8a8] sm:$0xff]
    %v311 = vld [vmem:[%s1 + $0x8b0] sm:$0xff]
    %v312 = vld [vmem:[%s1 + $0x8b8] sm:$0xff]
    %v313 = vld [vmem:[%s1 + $0x8c0] sm:$0xff]
    %v314 = vld [vmem:[%s1 + $0x8c8] sm:$0xff]
    %v315 = vld [vmem:[%s1 + $0x8d0] sm:$0xff]
    %v316 = vld [vmem:[%s1 + $0x8d8] sm:$0xff]
    %v317 = vld [vmem:[%s1 + $0x8e0] sm:$0xff]
    %v318 = vld [vmem:[%s1 + $0x8e8] sm:$0xff]
    %v319 = vld [vmem:[%s1 + $0x8f0] sm:$0xff]
    %v320 = vld [vmem:[%s1 + $0x8f8] sm:$0xff]
    %v321 = vld [vmem:[%s1 + $0x900] sm:$0xff]
    %v322 = vld [vmem:[%s1 + $0x908] sm:$0xff]
    %v323 = vld [vmem:[%s1 + $0x910] sm:$0xff]
    %v324 = vld [vmem:[%s1 + $0x918] sm:$0xff]
    %v325 = vld [vmem:[%s1 + $0x920] sm:$0xff]
    %v326 = vld [vmem:[%s1 + $0x928] sm:$0xff]
    %v327 = vld [vmem:[%s1 + $0x930] sm:$0xff]
    %v328 = vld [vmem:[%s1 + $0x938] sm:$0xff]
    %v329 = vld [vmem:[%s1 + $0x940] sm:$0xff]
    %v330 = vld [vmem:[%s1 + $0x948] sm:$0xff]
    %v331 = vld [vmem:[%s1 + $0x950] sm:$0xff]
    %v332 = vld [vmem:[%s1 + $0x958] sm:$0xff]
    %v333 = vld [vmem:[%s1 + $0x960] sm:$0xff]
    %v334 = vld [vmem:[%s1 + $0x968] sm:$0xff]
    %v335 = vld [vmem:[%s1 + $0x970] sm:$0xff]
    %v336 = vld [vmem:[%s1 + $0x978] sm:$0xff]
    %v337 = vld [vmem:[%s1 + $0x980] sm:$0xff]
    %v338 = vld [vmem:[%s1 + $0x988] sm:$0xff]
    %v339 = vld [vmem:[%s1 + $0x990] sm:$0xff]
    %v340 = vld [vmem:[%s1 + $0x998] sm:$0xff]
    %v341 = vld [vmem:[%s1 + $0x9a0] sm:$0xff]
    %v342 = vld [vmem:[%s1 + $0x9a8] sm:$0xff]
    %v343 = vld [vmem:[%s1 + $0x9b0] sm:$0xff]
    %v344 = vld [vmem:[%s1 + $0x9b8] sm:$0xff]
    %v345 = vld [vmem:[%s1 + $0x9c0] sm:$0xff]
    %v346 = vld [vmem:[%s1 + $0x9c8] sm:$0xff]
    %v347 = vld [vmem:[%s1 + $0x9d0] sm:$0xff]
    %v348 = vld [vmem:[%s1 + $0x9d8] sm:$0xff]
    %v349 = vld [vmem:[%s1 + $0x9e0] sm:$0xff]
    %v350 = vld [vmem:[%s1 + $0x9e8] sm:$0xff]
    %v351 = vld [vmem:[%s1 + $0x9f0] sm:$0xff]
    %v352 = vld [vmem:[%s1 + $0x9f8] sm:$0xff]
    %v353 = vld [vmem:[%s1 + $0xa00] sm:$0xff]
    %v354 = vld [vmem:[%s1 + $0xa08] sm:$0xff]
    %v355 = vld [vmem:[%s1 + $0xa10] sm:$0xff]
    %v356 = vld [vmem:[%s1 + $0xa18] sm:$0xff]
    %v357 = vld [vmem:[%s1 + $0xa20] sm:$0xff]
    %v358 = vld [vmem:[%s1 + $0xa28] sm:$0xff]
    %v359 = vld [vmem:[%s1 + $0xa30] sm:$0xff]
    %v360 = vld [vmem:[%s1 + $0xa38] sm:$0xff]
    %v361 = vld [vmem:[%s1 + $0xa40] sm:$0xff]
    %v362 = vld [vmem:[%s1 + $0xa48] sm:$0xff]
    %v363 = vld [vmem:[%s1 + $0xa50] sm:$0xff]
    %v364 = vld [vmem:[%s1 + $0xa58] sm:$0xff]
    %v365 = vld [vmem:[%s1 + $0xa60] sm:$0xff]
    %v366 = vld [vmem:[%s1 + $0xa68] sm:$0xff]
    %v367 = vld [vmem:[%s1 + $0xa70] sm:$0xff]
    %v368 = vld [vmem:[%s1 + $0xa78] sm:$0xff]
    %v369 = vld [vmem:[%s1 + $0xa80] sm:$0xff]
    %v370 = vld [vmem:[%s1 + $0xa88] sm:$0xff]
    %v371 = vld [vmem:[%s1 + $0xa90] sm:$0xff]
    %v372 = vld [vmem:[%s1 + $0xa98] sm:$0xff]
    %v373 = vld [vmem:[%s1 + $0xaa0] sm:$0xff]
    %v374 = vld [vmem:[%s1 + $0xaa8] sm:$0xff]
    %v375 = vld [vmem:[%s1 + $0xab0] sm:$0xff]
    %v376 = vld [vmem:[%s1 + $0xab8] sm:$0xff]
    %v377 = vld [vmem:[%s1 + $0xac0] sm:$0xff]
    %v378 = vld [vmem:[%s1 + $0xac8] sm:$0xff]
    %v379 = vld [vmem:[%s1 + $0xad0] sm:$0xff]
    %v380 = vld [vmem:[%s1 + $0xad8] sm:$0xff]
    %v381 = vld [vmem:[%s1 + $0xae0] sm:$0xff]
    %v382 = vld [vmem:[%s1 + $0xae8] sm:$0xff]
    %v383 = vld [vmem:[%s1 + $0xaf0] sm:$0xff]
    %v384 = vld [vmem:[%s1 + $0xaf8] sm:$0xff]
    %v385 = vld [vmem:[%s1 + $0xb00] sm:$0xff]
    %v386 = vld [vmem:[%s1 + $0xb08] sm:$0xff]
    %v387 = vld [vmem:[%s1 + $0xb10] sm:$0xff]
    %v388 = vld [vmem:[%s1 + $0xb18] sm:$0xff]
    %v389 = vld [vmem:[%s1 + $0xb20] sm:$0xff]
    %v390 = vld [vmem:[%s1 + $0xb28] sm:$0xff]
    %v391 = vld [vmem:[%s1 + $0xb30] sm:$0xff]
    %v392 = vld [vmem:[%s1 + $0xb38] sm:$0xff]
    %v393 = vld [vmem:[%s1 + $0xb40] sm:$0xff]
    %v394 = vld [vmem:[%s1 + $0xb48] sm:$0xff]
    %v395 = vld [vmem:[%s1 + $0xb50] sm:$0xff]
    %v396 = vld [vmem:[%s1 + $0xb58] sm:$0xff]
    %v397 = vld [vmem:[%s1 + $0xb60] sm:$0xff]
    %v398 = vld [vmem:[%s1 + $0xb68] sm:$0xff]
    %v399 = vld [vmem:[%s1 + $0xb70] sm:$0xff]
    %v400 = vld [vmem:[%s1 + $0xb78] sm:$0xff]
    %v401 = vld [vmem:[%s1 + $0xb80] sm:$0xff]
    %v402 = vld [vmem:[%s1 + $0xb88] sm:$0xff]
    %v403 = vld [vmem:[%s1 + $0xb90] sm:$0xff]
    %v404 = vld [vmem:[%s1 + $0xb98] sm:$0xff]
    %v405 = vld [vmem:[%s1 + $0xba0] sm:$0xff]
    %v406 = vld [vmem:[%s1 + $0xba8] sm:$0xff]
    %v407 = vld [vmem:[%s1 + $0xbb0] sm:$0xff]
    %v408 = vld [vmem:[%s1 + $0xbb8] sm:$0xff]
    %v409 = vld [vmem:[%s1 + $0xbc0] sm:$0xff]
    %v410 = vld [vmem:[%s1 + $0xbc8] sm:$0xff]
    %v411 = vld [vmem:[%s1 + $0xbd0] sm:$0xff]
    %v412 = vld [vmem:[%s1 + $0xbd8] sm:$0xff]
    %v413 = vld [vmem:[%s1 + $0xbe0] sm:$0xff]
    %v414 = vld [vmem:[%s1 + $0xbe8] sm:$0xff]
    %v415 = vld [vmem:[%s1 + $0xbf0] sm:$0xff]
    %v416 = vld [vmem:[%s1 + $0xbf8] sm:$0xff]
    %v417 = vld [vmem:[%s1 + $0xc00] sm:$0xff]
    %v418 = vld [vmem:[%s1 + $0xc08] sm:$0xff]
    %v419 = vld [vmem:[%s1 + $0xc10] sm:$0xff]
    %v420 = vld [vmem:[%s1 + $0xc18] sm:$0xff]
    %v421 = vld [vmem:[%s1 + $0xc20] sm:$0xff]
    %v422 = vld [vmem:[%s1 + $0xc28] sm:$0xff]
    %v423 = vld [vmem:[%s1 + $0xc30] sm:$0xff]
    %v424 = vld [vmem:[%s1 + $0xc38] sm:$0xff]
    %v425 = vld [vmem:[%s1 + $0xc40] sm:$0xff]
    %v426 = vld [vmem:[%s1 + $0xc48] sm:$0xff]
    %v427 = vld [vmem:[%s1 + $0xc50] sm:$0xff]
    %v428 = vld [vmem:[%s1 + $0xc58] sm:$0xff]
    %v429 = vld [vmem:[%s1 + $0xc60] sm:$0xff]
    %v430 = vld [vmem:[%s1 + $0xc68] sm:$0xff]
    %v431 = vld [vmem:[%s1 + $0xc70] sm:$0xff]
    %v432 = vld [vmem:[%s1 + $0xc78] sm:$0xff]
    %v433 = vld [vmem:[%s1 + $0xc80] sm:$0xff]
    %v434 = vld [vmem:[%s1 + $0xc88] sm:$0xff]
    %v435 = vld [vmem:[%s1 + $0xc90] sm:$0xff]
    %v436 = vld [vmem:[%s1 + $0xc98] sm:$0xff]
    %v437 = vld [vmem:[%s1 + $0xca0] sm:$0xff]
    %v438 = vld [vmem:[%s1 + $0xca8] sm:$0xff]
    %v439 = vld [vmem:[%s1 + $0xcb0] sm:$0xff]
    %v440 = vld [vmem:[%s1 + $0xcb8] sm:$0xff]
    %v441 = vld [vmem:[%s1 + $0xcc0] sm:$0xff]
    %v442 = vld [vmem:[%s1 + $0xcc8] sm:$0xff]
    %v443 = vld [vmem:[%s1 + $0xcd0] sm:$0xff]
    %v444 = vld [vmem:[%s1 + $0xcd8] sm:$0xff]
    %v445 = vld [vmem:[%s1 + $0xce0] sm:$0xff]
    %v446 = vld [vmem:[%s1 + $0xce8] sm:$0xff]
    %v447 = vld [vmem:[%s1 + $0xcf0] sm:$0xff]
    %v448 = vld [vmem:[%s1 + $0xcf8] sm:$0xff]
    %v449 = vld [vmem:[%s1 + $0xd00] sm:$0xff]
    %v450 = vld [vmem:[%s1 + $0xd08] sm:$0xff]
    %v451 = vld [vmem:[%s1 + $0xd10] sm:$0xff]
    %v452 = vld [vmem:[%s1 + $0xd18] sm:$0xff]
    %v453 = vld [vmem:[%s1 + $0xd20] sm:$0xff]
    %v454 = vld [vmem:[%s1 + $0xd28] sm:$0xff]
    %v455 = vld [vmem:[%s1 + $0xd30] sm:$0xff]
    %v456 = vld [vmem:[%s1 + $0xd38] sm:$0xff]
    %v457 = vld [vmem:[%s1 + $0xd40] sm:$0xff]
    %v458 = vld [vmem:[%s1 + $0xd48] sm:$0xff]
    %v459 = vld [vmem:[%s1 + $0xd50] sm:$0xff]
    %v460 = vld [vmem:[%s1 + $0xd58] sm:$0xff]
    %v461 = vld [vmem:[%s1 + $0xd60] sm:$0xff]
    %v462 = vld [vmem:[%s1 + $0xd68] sm:$0xff]
    %v463 = vld [vmem:[%s1 + $0xd70] sm:$0xff]
    %v464 = vld [vmem:[%s1 + $0xd78] sm:$0xff]
    %v465 = vld [vmem:[%s1 + $0xd80] sm:$0xff]
    %v466 = vld [vmem:[%s1 + $0xd88] sm:$0xff]
    %v467 = vld [vmem:[%s1 + $0xd90] sm:$0xff]
    %v468 = vld [vmem:[%s1 + $0xd98] sm:$0xff]
    %v469 = vld [vmem:[%s1 + $0xda0] sm:$0xff]
    %v470 = vld [vmem:[%s1 + $0xda8] sm:$0xff]
    %v471 = vld [vmem:[%s1 + $0xdb0] sm:$0xff]
    %v472 = vld [vmem:[%s1 + $0xdb8] sm:$0xff]
    %v473 = vld [vmem:[%s1 + $0xdc0] sm:$0xff]
    %v474 = vld [vmem:[%s1 + $0xdc8] sm:$0xff]
    %v475 = vld [vmem:[%s1 + $0xdd0] sm:$0xff]
    %v476 = vld [vmem:[%s1 + $0xdd8] sm:$0xff]
    %v477 = vld [vmem:[%s1 + $0xde0] sm:$0xff]
    %v478 = vld [vmem:[%s1 + $0xde8] sm:$0xff]
    %v479 = vld [vmem:[%s1 + $0xdf0] sm:$0xff]
    %v480 = vld [vmem:[%s1 + $0xdf8] sm:$0xff]
    %v481 = vld [vmem:[%s1 + $0xe00] sm:$0xff]
    %v482 = vld [vmem:[%s1 + $0xe08] sm:$0xff]
    %v483 = vld [vmem:[%s1 + $0xe10] sm:$0xff]
    %v484 = vld [vmem:[%s1 + $0xe18] sm:$0xff]
    %v485 = vld [vmem:[%s1 + $0xe20] sm:$0xff]
    %v486 = vld [vmem:[%s1 + $0xe28] sm:$0xff]
    %v487 = vld [vmem:[%s1 + $0xe30] sm:$0xff]
    %v488 = vld [vmem:[%s1 + $0xe38] sm:$0xff]
    %v489 = vld [vmem:[%s1 + $0xe40] sm:$0xff]
    %v490 = vld [vmem:[%s1 + $0xe48] sm:$0xff]
    %v491 = vld [vmem:[%s1 + $0xe50] sm:$0xff]
    %v492 = vld [vmem:[%s1 + $0xe58] sm:$0xff]
    %v493 = vld [vmem:[%s1 + $0xe60] sm:$0xff]
    %v494 = vld [vmem:[%s1 + $0xe68] sm:$0xff]
    %v495 = vld [vmem:[%s1 + $0xe70] sm:$0xff]
    %v496 = vld [vmem:[%s1 + $0xe78] sm:$0xff]
    %v497 = vld [vmem:[%s1 + $0xe80] sm:$0xff]
    %v498 = vld [vmem:[%s1 + $0xe88] sm:$0xff]
    %v499 = vld [vmem:[%s1 + $0xe90] sm:$0xff]
    %v500 = vld [vmem:[%s1 + $0xe98] sm:$0xff]
    %v501 = vld [vmem:[%s1 + $0xea0] sm:$0xff]
    %v502 = vld [vmem:[%s1 + $0xea8] sm:$0xff]
    %v503 = vld [vmem:[%s1 + $0xeb0] sm:$0xff]
    %v504 = vld [vmem:[%s1 + $0xeb8] sm:$0xff]
    %v505 = vld [vmem:[%s1 + $0xec0] sm:$0xff]
    %v506 = vld [vmem:[%s1 + $0xec8] sm:$0xff]
    %v507 = vld [vmem:[%s1 + $0xed0] sm:$0xff]
    %v508 = vld [vmem:[%s1 + $0xed8] sm:$0xff]
    %v509 = vld [vmem:[%s1 + $0xee0] sm:$0xff]
    %v510 = vld [vmem:[%s1 + $0xee8] sm:$0xff]
    %v511 = vld [vmem:[%s1 + $0xef0] sm:$0xff]
    %v512 = vld [vmem:[%s1 + $0xef8] sm:$0xff]
    %v513 = vld [vmem:[%s1 + $0xf00] sm:$0xff]
    %v514 = vld [vmem:[%s1 + $0xf08] sm:$0xff]
    %v515 = vld [vmem:[%s1 + $0xf10] sm:$0xff]
    %v516 = vld [vmem:[%s1 + $0xf18] sm:$0xff]
    %v517 = vld [vmem:[%s1 + $0xf20] sm:$0xff]
    %v518 = vld [vmem:[%s1 + $0xf28] sm:$0xff]
    %v519 = vld [vmem:[%s1 + $0xf30] sm:$0xff]
    %v520 = vld [vmem:[%s1 + $0xf38] sm:$0xff]
    %v521 = vld [vmem:[%s1 + $0xf40] sm:$0xff]
    %v522 = vld [vmem:[%s1 + $0xf48] sm:$0xff]
    %v523 = vld [vmem:[%s1 + $0xf50] sm:$0xff]
    %v524 = vld [vmem:[%s1 + $0xf58] sm:$0xff]
    %v525 = vld [vmem:[%s1 + $0xf60] sm:$0xff]
    %v526 = vld [vmem:[%s1 + $0xf68] sm:$0xff]
    %v527 = vld [vmem:[%s1 + $0xf70] sm:$0xff]
    %v528 = vld [vmem:[%s1 + $0xf78] sm:$0xff]
    %v529 = vld [vmem:[%s1 + $0xf80] sm:$0xff]
    %v530 = vld [vmem:[%s1 + $0xf88] sm:$0xff]
    %v531 = vld [vmem:[%s1 + $0xf90] sm:$0xff]
    %v532 = vld [vmem:[%s1 + $0xf98] sm:$0xff]
    %v533 = vld [vmem:[%s1 + $0xfa0] sm:$0xff]
    %v534 = vld [vmem:[%s1 + $0xfa8] sm:$0xff]
    %v535 = vld [vmem:[%s1 + $0xfb0] sm:$0xff]
    %v536 = vld [vmem:[%s1 + $0xfb8] sm:$0xff]
    %v537 = vld [vmem:[%s1 + $0xfc0] sm:$0xff]
    %v538 = vld [vmem:[%s1 + $0xfc8] sm:$0xff]
    %v539 = vld [vmem:[%s1 + $0xfd0] sm:$0xff]
    %v540 = vld [vmem:[%s1 + $0xfd8] sm:$0xff]
    %v541 = vld [vmem:[%s1 + $0xfe0] sm:$0xff]
    %v542 = vld [vmem:[%s1 + $0xfe8] sm:$0xff]
    %v543 = vld [vmem:[%s1 + $0xff0] sm:$0xff]
    %v544 = vld [vmem:[%s1 + $0xff8] sm:$0xff]
    %v545 = vld [vmem:[%s1 + $0x1000] sm:$0xff]
    %v546 = vld [vmem:[%s1 + $0x1008] sm:$0xff]
    %v547 = vld [vmem:[%s1 + $0x1010] sm:$0xff]
    %v548 = vld [vmem:[%s1 + $0x1018] sm:$0xff]
    %v549 = vld [vmem:[%s1 + $0x1020] sm:$0xff]
    %v550 = vld [vmem:[%s1 + $0x1028] sm:$0xff]
    %v551 = vld [vmem:[%s1 + $0x1030] sm:$0xff]
    %v552 = vld [vmem:[%s1 + $0x1038] sm:$0xff]
    %v553 = vld [vmem:[%s1 + $0x1040] sm:$0xff]
    %v554 = vld [vmem:[%s1 + $0x1048] sm:$0xff]
    %v555 = vld [vmem:[%s1 + $0x1050] sm:$0xff]
    %v556 = vld [vmem:[%s1 + $0x1058] sm:$0xff]
    %v557 = vld [vmem:[%s1 + $0x1060] sm:$0xff]
    %v558 = vld [vmem:[%s1 + $0x1068] sm:$0xff]
    %v559 = vld [vmem:[%s1 + $0x1070] sm:$0xff]
    %v560 = vld [vmem:[%s1 + $0x1078] sm:$0xff]
    %v561 = vld [vmem:[%s1 + $0x1080] sm:$0xff]
    %v562 = vld [vmem:[%s1 + $0x1088] sm:$0xff]
    %v563 = vld [vmem:[%s1 + $0x1090] sm:$0xff]
    %v564 = vld [vmem:[%s1 + $0x1098] sm:$0xff]
    %v565 = vld [vmem:[%s1 + $0x10a0] sm:$0xff]
    %v566 = vld [vmem:[%s1 + $0x10a8] sm:$0xff]
    %v567 = vld [vmem:[%s1 + $0x10b0] sm:$0xff]
    %v568 = vld [vmem:[%s1 + $0x10b8] sm:$0xff]
    %v569 = vld [vmem:[%s1 + $0x10c0] sm:$0xff]
    %v570 = vld [vmem:[%s1 + $0x10c8] sm:$0xff]
    %v571 = vld [vmem:[%s1 + $0x10d0] sm:$0xff]
    %v572 = vld [vmem:[%s1 + $0x10d8] sm:$0xff]
    %v573 = vld [vmem:[%s1 + $0x10e0] sm:$0xff]
    %v574 = vld [vmem:[%s1 + $0x10e8] sm:$0xff]
    %v575 = vld [vmem:[%s1 + $0x10f0] sm:$0xff]
    %v576 = vld [vmem:[%s1 + $0x10f8] sm:$0xff]
    %v577 = vld [vmem:[%s1 + $0x1100] sm:$0xff]
    %v578 = vld [vmem:[%s1 + $0x1108] sm:$0xff]
    %v579 = vld [vmem:[%s1 + $0x1110] sm:$0xff]
    %v580 = vld [vmem:[%s1 + $0x1118] sm:$0xff]
    %v581 = vld [vmem:[%s1 + $0x1120] sm:$0xff]
    %v582 = vld [vmem:[%s1 + $0x1128] sm:$0xff]
    %v583 = vld [vmem:[%s1 + $0x1130] sm:$0xff]
    %v584 = vld [vmem:[%s1 + $0x1138] sm:$0xff]
    %v585 = vld [vmem:[%s1 + $0x1140] sm:$0xff]
    %v586 = vld [vmem:[%s1 + $0x1148] sm:$0xff]
    %v587 = vld [vmem:[%s1 + $0x1150] sm:$0xff]
    %v588 = vld [vmem:[%s1 + $0x1158] sm:$0xff]
    %v589 = vld [vmem:[%s1 + $0x1160] sm:$0xff]
    %v590 = vld [vmem:[%s1 + $0x1168] sm:$0xff]
    %v591 = vld [vmem:[%s1 + $0x1170] sm:$0xff]
    %v592 = vld [vmem:[%s1 + $0x1178] sm:$0xff]
    %v593 = vld [vmem:[%s1 + $0x1180] sm:$0xff]
    %v594 = vld [vmem:[%s1 + $0x1188] sm:$0xff]
    %v595 = vld [vmem:[%s1 + $0x1190] sm:$0xff]
    %v596 = vld [vmem:[%s1 + $0x1198] sm:$0xff]
    %v597 = vld [vmem:[%s1 + $0x11a0] sm:$0xff]
    %v598 = vld [vmem:[%s1 + $0x11a8] sm:$0xff]
    %v599 = vld [vmem:[%s1 + $0x11b0] sm:$0xff]
    %v600 = vld [vmem:[%s1 + $0x11b8] sm:$0xff]
    %v601 = vld [vmem:[%s1 + $0x11c0] sm:$0xff]
    %v602 = vld [vmem:[%s1 + $0x11c8] sm:$0xff]
    %v603 = vld [vmem:[%s1 + $0x11d0] sm:$0xff]
    %v604 = vld [vmem:[%s1 + $0x11d8] sm:$0xff]
    %v605 = vld [vmem:[%s1 + $0x11e0] sm:$0xff]
    %v606 = vld [vmem:[%s1 + $0x11e8] sm:$0xff]
    %v607 = vld [vmem:[%s1 + $0x11f0] sm:$0xff]
    %v608 = vld [vmem:[%s1 + $0x11f8] sm:$0xff]
    %v609 = vld [vmem:[%s1 + $0x1200] sm:$0xff]
    %v610 = vld [vmem:[%s1 + $0x1208] sm:$0xff]
    %v611 = vld [vmem:[%s1 + $0x1210] sm:$0xff]
    %v612 = vld [vmem:[%s1 + $0x1218] sm:$0xff]
    %v613 = vld [vmem:[%s1 + $0x1220] sm:$0xff]
    %v614 = vld [vmem:[%s1 + $0x1228] sm:$0xff]
    %v615 = vld [vmem:[%s1 + $0x1230] sm:$0xff]
    %v616 = vld [vmem:[%s1 + $0x1238] sm:$0xff]
    %v617 = vld [vmem:[%s1 + $0x1240] sm:$0xff]
    %v618 = vld [vmem:[%s1 + $0x1248] sm:$0xff]
    %v619 = vld [vmem:[%s1 + $0x1250] sm:$0xff]
    %v620 = vld [vmem:[%s1 + $0x1258] sm:$0xff]
    %v621 = vld [vmem:[%s1 + $0x1260] sm:$0xff]
    %v622 = vld [vmem:[%s1 + $0x1268] sm:$0xff]
    %v623 = vld [vmem:[%s1 + $0x1270] sm:$0xff]
    %v624 = vld [vmem:[%s1 + $0x1278] sm:$0xff]
    %v625 = vld [vmem:[%s1 + $0x1280] sm:$0xff]
    %v626 = vld [vmem:[%s1 + $0x1288] sm:$0xff]
    %v627 = vld [vmem:[%s1 + $0x1290] sm:$0xff]
    %v628 = vld [vmem:[%s1 + $0x1298] sm:$0xff]
    %v629 = vld [vmem:[%s1 + $0x12a0] sm:$0xff]
    %v630 = vld [vmem:[%s1 + $0x12a8] sm:$0xff]
    %v631 = vld [vmem:[%s1 + $0x12b0] sm:$0xff]
    %v632 = vld [vmem:[%s1 + $0x12b8] sm:$0xff]
    %v633 = vld [vmem:[%s1 + $0x12c0] sm:$0xff]
    %v634 = vld [vmem:[%s1 + $0x12c8] sm:$0xff]
    %v635 = vld [vmem:[%s1 + $0x12d0] sm:$0xff]
    %v636 = vld [vmem:[%s1 + $0x12d8] sm:$0xff]
    %v637 = vld [vmem:[%s1 + $0x12e0] sm:$0xff]
    %v638 = vld [vmem:[%s1 + $0x12e8] sm:$0xff]
    %v639 = vld [vmem:[%s1 + $0x12f0] sm:$0xff]
    %v640 = vld [vmem:[%s1 + $0x12f8] sm:$0xff]
    %v641 = vld [vmem:[%s1 + $0x1300] sm:$0xff]
    %v642 = vld [vmem:[%s1 + $0x1308] sm:$0xff]
    %v643 = vld [vmem:[%s1 + $0x1310] sm:$0xff]
    %v644 = vld [vmem:[%s1 + $0x1318] sm:$0xff]
    %v645 = vld [vmem:[%s1 + $0x1320] sm:$0xff]
    %v646 = vld [vmem:[%s1 + $0x1328] sm:$0xff]
    %v647 = vld [vmem:[%s1 + $0x1330] sm:$0xff]
    %v648 = vld [vmem:[%s1 + $0x1338] sm:$0xff]
    %v649 = vld [vmem:[%s1 + $0x1340] sm:$0xff]
    %v650 = vld [vmem:[%s1 + $0x1348] sm:$0xff]
    %v651 = vld [vmem:[%s1 + $0x1350] sm:$0xff]
    %v652 = vld [vmem:[%s1 + $0x1358] sm:$0xff]
    %v653 = vld [vmem:[%s1 + $0x1360] sm:$0xff]
    %v654 = vld [vmem:[%s1 + $0x1368] sm:$0xff]
    %v655 = vld [vmem:[%s1 + $0x1370] sm:$0xff]
    %v656 = vld [vmem:[%s1 + $0x1378] sm:$0xff]
    %v657 = vld [vmem:[%s1 + $0x1380] sm:$0xff]
    %v658 = vld [vmem:[%s1 + $0x1388] sm:$0xff]
    %v659 = vld [vmem:[%s1 + $0x1390] sm:$0xff]
    %v660 = vld [vmem:[%s1 + $0x1398] sm:$0xff]
    %v661 = vld [vmem:[%s1 + $0x13a0] sm:$0xff]
    %v662 = vld [vmem:[%s1 + $0x13a8] sm:$0xff]
    %v663 = vld [vmem:[%s1 + $0x13b0] sm:$0xff]
    %v664 = vld [vmem:[%s1 + $0x13b8] sm:$0xff]
    %v665 = vld [vmem:[%s1 + $0x13c0] sm:$0xff]
    %v666 = vld [vmem:[%s1 + $0x13c8] sm:$0xff]
    %v667 = vld [vmem:[%s1 + $0x13d0] sm:$0xff]
    %v668 = vld [vmem:[%s1 + $0x13d8] sm:$0xff]
    %v669 = vld [vmem:[%s1 + $0x13e0] sm:$0xff]
    %v670 = vld [vmem:[%s1 + $0x13e8] sm:$0xff]
    %v671 = vld [vmem:[%s1 + $0x13f0] sm:$0xff]
    %v672 = vld [vmem:[%s1 + $0x13f8] sm:$0xff]
    %v673 = vld [vmem:[%s1 + $0x1400] sm:$0xff]
    %v674 = vld [vmem:[%s1 + $0x1408] sm:$0xff]
    %v675 = vld [vmem:[%s1 + $0x1410] sm:$0xff]
    %v676 = vld [vmem:[%s1 + $0x1418] sm:$0xff]
    %v677 = vld [vmem:[%s1 + $0x1420] sm:$0xff]
    %v678 = vld [vmem:[%s1 + $0x1428] sm:$0xff]
    %v679 = vld [vmem:[%s1 + $0x1430] sm:$0xff]
    %v680 = vld [vmem:[%s1 + $0x1438] sm:$0xff]
    %v681 = vld [vmem:[%s1 + $0x1440] sm:$0xff]
    %v682 = vld [vmem:[%s1 + $0x1448] sm:$0xff]
    %v683 = vld [vmem:[%s1 + $0x1450] sm:$0xff]
    %v684 = vld [vmem:[%s1 + $0x1458] sm:$0xff]
    %v685 = vld [vmem:[%s1 + $0x1460] sm:$0xff]
    %v686 = vld [vmem:[%s1 + $0x1468] sm:$0xff]
    %v687 = vld [vmem:[%s1 + $0x1470] sm:$0xff]
    %v688 = vld [vmem:[%s1 + $0x1478] sm:$0xff]
    %v689 = vld [vmem:[%s1 + $0x1480] sm:$0xff]
    %v690 = vld [vmem:[%s1 + $0x1488] sm:$0xff]
    %v691 = vld [vmem:[%s1 + $0x1490] sm:$0xff]
    %v692 = vld [vmem:[%s1 + $0x1498] sm:$0xff]
    %v693 = vld [vmem:[%s1 + $0x14a0] sm:$0xff]
    %v694 = vld [vmem:[%s1 + $0x14a8] sm:$0xff]
    %v695 = vld [vmem:[%s1 + $0x14b0] sm:$0xff]
    %v696 = vld [vmem:[%s1 + $0x14b8] sm:$0xff]
    %v697 = vld [vmem:[%s1 + $0x14c0] sm:$0xff]
    %v698 = vld [vmem:[%s1 + $0x14c8] sm:$0xff]
    %v699 = vld [vmem:[%s1 + $0x14d0] sm:$0xff]
    %v700 = vld [vmem:[%s1 + $0x14d8] sm:$0xff]
    %v701 = vld [vmem:[%s1 + $0x14e0] sm:$0xff]
    %v702 = vld [vmem:[%s1 + $0x14e8] sm:$0xff]
    %v703 = vld [vmem:[%s1 + $0x14f0] sm:$0xff]
    %v704 = vld [vmem:[%s1 + $0x14f8] sm:$0xff]
    %v705 = vld [vmem:[%s1 + $0x1500] sm:$0xff]
    %v706 = vld [vmem:[%s1 + $0x1508] sm:$0xff]
    %v707 = vld [vmem:[%s1 + $0x1510] sm:$0xff]
    %v708 = vld [vmem:[%s1 + $0x1518] sm:$0xff]
    %v709 = vld [vmem:[%s2] sm:$0x3]
    %v711 = vlaneseq
    %v712 = vshrl.u32 %v711, 7
    %v713 = vsub.s32 0, %v712
    %v714 = vrot.slane %v709, %v713
    %v715 = vlaneseq
    %v716 = vshrl.u32 %v715, 7
    %v717 = vsub.s32 1, %v716
    %v718 = vrot.slane %v709, %v717
    %v727 = vcombine.high %v27, %v27
    %v729 = vunpack.c.l.s4 1983009808
    %v730 = vunpack.c.0.s8 %v729
    %v731 = vlaneseq
    %v732 = vshrl.u32 %v731, 7
    %v733 = vsub.s32 %v730, %v732
    %v734 = vrot.slane %v27, %v733
    %v736 = vunpack.c.l.s4 1983009808
    %v737 = vunpack.c.0.s8 %v736
    %v738 = vlaneseq
    %v739 = vshrl.u32 %v738, 7
    %v740 = vsub.s32 %v737, %v739
    %v741 = vrot.slane %v727, %v740
    %v742 = vcombine.high %v734, %v734
    %v743 = vcombine.high %v741, %v741
    %v744 = vcombine.high %v28, %v28
    %v746 = vunpack.c.l.s4 1983009808
    %v747 = vunpack.c.0.s8 %v746
    %v748 = vlaneseq
    %v749 = vshrl.u32 %v748, 7
    %v750 = vsub.s32 %v747, %v749
    %v751 = vrot.slane %v28, %v750
    %v753 = vunpack.c.l.s4 1983009808
    %v754 = vunpack.c.0.s8 %v753
    %v755 = vlaneseq
    %v756 = vshrl.u32 %v755, 7
    %v757 = vsub.s32 %v754, %v756
    %v758 = vrot.slane %v744, %v757
    %v759 = vcombine.high %v751, %v751
    %v760 = vcombine.high %v758, %v758
    %v761 = vcombine.high %v29, %v29
    %v763 = vunpack.c.l.s4 1983009808
    %v764 = vunpack.c.0.s8 %v763
    %v765 = vlaneseq
    %v766 = vshrl.u32 %v765, 7
    %v767 = vsub.s32 %v764, %v766
    %v768 = vrot.slane %v29, %v767
    %v770 = vunpack.c.l.s4 1983009808
    %v771 = vunpack.c.0.s8 %v770
    %v772 = vlaneseq
    %v773 = vshrl.u32 %v772, 7
    %v774 = vsub.s32 %v771, %v773
    %v775 = vrot.slane %v761, %v774
    %v776 = vcombine.high %v768, %v768
    %v777 = vcombine.high %v775, %v775
    %v778 = vcombine.high %v30, %v30
    %v780 = vunpack.c.l.s4 1983009808
    %v781 = vunpack.c.0.s8 %v780
    %v782 = vlaneseq
    %v783 = vshrl.u32 %v782, 7
    %v784 = vsub.s32 %v781, %v783
    %v785 = vrot.slane %v30, %v784
    %v787 = vunpack.c.l.s4 1983009808
    %v788 = vunpack.c.0.s8 %v787
    %v789 = vlaneseq
    %v790 = vshrl.u32 %v789, 7
    %v791 = vsub.s32 %v788, %v790
    %v792 = vrot.slane %v778, %v791
    %v793 = vcombine.high %v785, %v785
    %v794 = vcombine.high %v792, %v792
    %v795 = vcombine.high %v31, %v31
    %v797 = vunpack.c.l.s4 1983009808
    %v798 = vunpack.c.0.s8 %v797
    %v799 = vlaneseq
    %v800 = vshrl.u32 %v799, 7
    %v801 = vsub.s32 %v798, %v800
    %v802 = vrot.slane %v31, %v801
    %v804 = vunpack.c.l.s4 1983009808
    %v805 = vunpack.c.0.s8 %v804
    %v806 = vlaneseq
    %v807 = vshrl.u32 %v806, 7
    %v808 = vsub.s32 %v805, %v807
    %v809 = vrot.slane %v795, %v808
    %v810 = vcombine.high %v802, %v802
    %v811 = vcombine.high %v809, %v809
    %v813 = vunpack.c.l.s4 1983009808
    %v814 = vunpack.c.0.s8 %v813
    %v815 = vlaneseq
    %v816 = vshrl.u32 %v815, 7
    %v817 = vsub.s32 %v814, %v816
    %v818 = vrot.slane %v32, %v817
    %v819 = vcombine.high %v818, %v818
    %vm841 = vcmask 130048
    %v842 = vsel %vm841, %v819, 0
    %844 = vmatprep.subr.mxu0 %v64
    %845 = vmatpush1.msra.mxu0 %v63
    %846 = vmatprep.subr.mxu0 %v62
    %847 = vmatpush1.msra.mxu0 %v61
    %848 = vmatprep.subr.mxu0 %v60
    %849 = vmatpush1.msra.mxu0 %v59
    %850 = vmatprep.subr.mxu0 %v58
    %851 = vmatpush1.msra.mxu0 %v57
    %852 = vmatprep.subr.mxu0 %v56
    %853 = vmatpush1.msra.mxu0 %v55
    %854 = vmatprep.subr.mxu0 %v54
    %855 = vmatpush1.msra.mxu0 %v53
    %856 = vmatprep.subr.mxu0 %v52
    %857 = vmatpush1.msra.mxu0 %v51
    %858 = vmatprep.subr.mxu0 %v50
    %859 = vmatpush1.msra.mxu0 %v49
    %860 = vmatprep.subr.mxu0 %v48
    %861 = vmatpush1.msra.mxu0 %v47
    %862 = vmatprep.subr.mxu0 %v46
    %863 = vmatpush1.msra.mxu0 %v45
    %864 = vmatprep.subr.mxu0 %v44
    %865 = vmatpush1.msra.mxu0 %v43
    %866 = vmatprep.subr.mxu0 %v42
    %867 = vmatpush1.msra.mxu0 %v41
    %868 = vmatprep.subr.mxu0 %v40
    %869 = vmatpush1.msra.mxu0 %v39
    %870 = vmatprep.subr.mxu0 %v38
    %871 = vmatpush1.msra.mxu0 %v37
    %872 = vmatprep.subr.mxu0 %v36
    %873 = vmatpush1.msra.mxu0 %v35
    %874 = vmatprep.subr.mxu0 %v34
    %875 = vmatpush1.msra.mxu0 %v33
    %876 = vmatprep.subr.mxu0 %v96
    %877 = vmatpush2.msra.mxu0 %v95
    %878 = vmatprep.subr.mxu0 %v94
    %879 = vmatpush2.msra.mxu0 %v93
    %880 = vmatprep.subr.mxu0 %v92
    %881 = vmatpush2.msra.mxu0 %v91
    %882 = vmatprep.subr.mxu0 %v90
    %883 = vmatpush2.msra.mxu0 %v89
    %884 = vmatprep.subr.mxu0 %v88
    %885 = vmatpush2.msra.mxu0 %v87
    %886 = vmatprep.subr.mxu0 %v86
    %887 = vmatpush2.msra.mxu0 %v85
    %888 = vmatprep.subr.mxu0 %v84
    %889 = vmatpush2.msra.mxu0 %v83
    %890 = vmatprep.subr.mxu0 %v82
    %891 = vmatpush2.msra.mxu0 %v81
    %892 = vmatprep.subr.mxu0 %v80
    %893 = vmatpush2.msra.mxu0 %v79
    %894 = vmatprep.subr.mxu0 %v78
    %895 = vmatpush2.msra.mxu0 %v77
    %896 = vmatprep.subr.mxu0 %v76
    %897 = vmatpush2.msra.mxu0 %v75
    %898 = vmatprep.subr.mxu0 %v74
    %899 = vmatpush2.msra.mxu0 %v73
    %900 = vmatprep.subr.mxu0 %v72
    %901 = vmatpush2.msra.mxu0 %v71
    %902 = vmatprep.subr.mxu0 %v70
    %903 = vmatpush2.msra.mxu0 %v69
    %904 = vmatprep.subr.mxu0 %v68
    %905 = vmatpush2.msra.mxu0 %v67
    %906 = vmatprep.subr.mxu0 %v66
    %907 = vmatpush2.msra.mxu0 %v65
    %908 = vmatprep.mubr.f32.mxu0 %v742
    %909 = vmatmul.mubr.f32.gmra.mxu0 %v734
    %v910 = vpop.f32.mrf.mxu0
    %v911 = vadd.f32 %v714, %v910
    %v912 = vpop.f32.mrf.mxu0
    %v913 = vadd.f32 %v718, %v912
    %914 = vdwg.mxu0
    %915 = vmatprep.subr.mxu0 %v128
    %916 = vmatpush1.msra.mxu0 %v127
    %917 = vmatprep.subr.mxu0 %v126
    %918 = vmatpush1.msra.mxu0 %v125
    %919 = vmatprep.subr.mxu0 %v124
    %920 = vmatpush1.msra.mxu0 %v123
    %921 = vmatprep.subr.mxu0 %v122
    %922 = vmatpush1.msra.mxu0 %v121
    %923 = vmatprep.subr.mxu0 %v120
    %924 = vmatpush1.msra.mxu0 %v119
    %925 = vmatprep.subr.mxu0 %v118
    %926 = vmatpush1.msra.mxu0 %v117
    %927 = vmatprep.subr.mxu0 %v116
    %928 = vmatpush1.msra.mxu0 %v115
    %929 = vmatprep.subr.mxu0 %v114
    %930 = vmatpush1.msra.mxu0 %v113
    %931 = vmatprep.subr.mxu0 %v112
    %932 = vmatpush1.msra.mxu0 %v111
    %933 = vmatprep.subr.mxu0 %v110
    %934 = vmatpush1.msra.mxu0 %v109
    %935 = vmatprep.subr.mxu0 %v108
    %936 = vmatpush1.msra.mxu0 %v107
    %937 = vmatprep.subr.mxu0 %v106
    %938 = vmatpush1.msra.mxu0 %v105
    %939 = vmatprep.subr.mxu0 %v104
    %940 = vmatpush1.msra.mxu0 %v103
    %941 = vmatprep.subr.mxu0 %v102
    %942 = vmatpush1.msra.mxu0 %v101
    %943 = vmatprep.subr.mxu0 %v100
    %944 = vmatpush1.msra.mxu0 %v99
    %945 = vmatprep.subr.mxu0 %v98
    %946 = vmatpush1.msra.mxu0 %v97
    %947 = vmatprep.subr.mxu0 %v160
    %948 = vmatpush2.msra.mxu0 %v159
    %949 = vmatprep.subr.mxu0 %v158
    %950 = vmatpush2.msra.mxu0 %v157
    %951 = vmatprep.subr.mxu0 %v156
    %952 = vmatpush2.msra.mxu0 %v155
    %953 = vmatprep.subr.mxu0 %v154
    %954 = vmatpush2.msra.mxu0 %v153
    %955 = vmatprep.subr.mxu0 %v152
    %956 = vmatpush2.msra.mxu0 %v151
    %957 = vmatprep.subr.mxu0 %v150
    %958 = vmatpush2.msra.mxu0 %v149
    %959 = vmatprep.subr.mxu0 %v148
    %960 = vmatpush2.msra.mxu0 %v147
    %961 = vmatprep.subr.mxu0 %v146
    %962 = vmatpush2.msra.mxu0 %v145
    %963 = vmatprep.subr.mxu0 %v144
    %964 = vmatpush2.msra.mxu0 %v143
    %965 = vmatprep.subr.mxu0 %v142
    %966 = vmatpush2.msra.mxu0 %v141
    %967 = vmatprep.subr.mxu0 %v140
    %968 = vmatpush2.msra.mxu0 %v139
    %969 = vmatprep.subr.mxu0 %v138
    %970 = vmatpush2.msra.mxu0 %v137
    %971 = vmatprep.subr.mxu0 %v136
    %972 = vmatpush2.msra.mxu0 %v135
    %973 = vmatprep.subr.mxu0 %v134
    %974 = vmatpush2.msra.mxu0 %v133
    %975 = vmatprep.subr.mxu0 %v132
    %976 = vmatpush2.msra.mxu0 %v131
    %977 = vmatprep.subr.mxu0 %v130
    %978 = vmatpush2.msra.mxu0 %v129
    %979 = vmatprep.mubr.f32.mxu0 %v743
    %980 = vmatmul.mubr.f32.gmra.mxu0 %v741
    %v981 = vpop.f32.mrf.mxu0
    %v982 = vadd.f32 %v911, %v981
    %v983 = vpop.f32.mrf.mxu0
    %v984 = vadd.f32 %v913, %v983
    %985 = vdwg.mxu0
    %986 = vmatprep.subr.mxu0 %v192
    %987 = vmatpush1.msra.mxu0 %v191
    %988 = vmatprep.subr.mxu0 %v190
    %989 = vmatpush1.msra.mxu0 %v189
    %990 = vmatprep.subr.mxu0 %v188
    %991 = vmatpush1.msra.mxu0 %v187
    %992 = vmatprep.subr.mxu0 %v186
    %993 = vmatpush1.msra.mxu0 %v185
    %994 = vmatprep.subr.mxu0 %v184
    %995 = vmatpush1.msra.mxu0 %v183
    %996 = vmatprep.subr.mxu0 %v182
    %997 = vmatpush1.msra.mxu0 %v181
    %998 = vmatprep.subr.mxu0 %v180
    %999 = vmatpush1.msra.mxu0 %v179
    %1000 = vmatprep.subr.mxu0 %v178
    %1001 = vmatpush1.msra.mxu0 %v177
    %1002 = vmatprep.subr.mxu0 %v176
    %1003 = vmatpush1.msra.mxu0 %v175
    %1004 = vmatprep.subr.mxu0 %v174
    %1005 = vmatpush1.msra.mxu0 %v173
    %1006 = vmatprep.subr.mxu0 %v172
    %1007 = vmatpush1.msra.mxu0 %v171
    %1008 = vmatprep.subr.mxu0 %v170
    %1009 = vmatpush1.msra.mxu0 %v169
    %1010 = vmatprep.subr.mxu0 %v168
    %1011 = vmatpush1.msra.mxu0 %v167
    %1012 = vmatprep.subr.mxu0 %v166
    %1013 = vmatpush1.msra.mxu0 %v165
    %1014 = vmatprep.subr.mxu0 %v164
    %1015 = vmatpush1.msra.mxu0 %v163
    %1016 = vmatprep.subr.mxu0 %v162
    %1017 = vmatpush1.msra.mxu0 %v161
    %1018 = vmatprep.subr.mxu0 %v224
    %1019 = vmatpush2.msra.mxu0 %v223
    %1020 = vmatprep.subr.mxu0 %v222
    %1021 = vmatpush2.msra.mxu0 %v221
    %1022 = vmatprep.subr.mxu0 %v220
    %1023 = vmatpush2.msra.mxu0 %v219
    %1024 = vmatprep.subr.mxu0 %v218
    %1025 = vmatpush2.msra.mxu0 %v217
    %1026 = vmatprep.subr.mxu0 %v216
    %1027 = vmatpush2.msra.mxu0 %v215
    %1028 = vmatprep.subr.mxu0 %v214
    %1029 = vmatpush2.msra.mxu0 %v213
    %1030 = vmatprep.subr.mxu0 %v212
    %1031 = vmatpush2.msra.mxu0 %v211
    %1032 = vmatprep.subr.mxu0 %v210
    %1033 = vmatpush2.msra.mxu0 %v209
    %1034 = vmatprep.subr.mxu0 %v208
    %1035 = vmatpush2.msra.mxu0 %v207
    %1036 = vmatprep.subr.mxu0 %v206
    %1037 = vmatpush2.msra.mxu0 %v205
    %1038 = vmatprep.subr.mxu0 %v204
    %1039 = vmatpush2.msra.mxu0 %v203
    %1040 = vmatprep.subr.mxu0 %v202
    %1041 = vmatpush2.msra.mxu0 %v201
    %1042 = vmatprep.subr.mxu0 %v200
    %1043 = vmatpush2.msra.mxu0 %v199
    %1044 = vmatprep.subr.mxu0 %v198
    %1045 = vmatpush2.msra.mxu0 %v197
    %1046 = vmatprep.subr.mxu0 %v196
    %1047 = vmatpush2.msra.mxu0 %v195
    %1048 = vmatprep.subr.mxu0 %v194
    %1049 = vmatpush2.msra.mxu0 %v193
    %1050 = vmatprep.mubr.f32.mxu0 %v759
    %1051 = vmatmul.mubr.f32.gmra.mxu0 %v751
    %v1052 = vpop.f32.mrf.mxu0
    %v1053 = vadd.f32 %v982, %v1052
    %v1054 = vpop.f32.mrf.mxu0
    %v1055 = vadd.f32 %v984, %v1054
    %1056 = vdwg.mxu0
    %1057 = vmatprep.subr.mxu0 %v256
    %1058 = vmatpush1.msra.mxu0 %v255
    %1059 = vmatprep.subr.mxu0 %v254
    %1060 = vmatpush1.msra.mxu0 %v253
    %1061 = vmatprep.subr.mxu0 %v252
    %1062 = vmatpush1.msra.mxu0 %v251
    %1063 = vmatprep.subr.mxu0 %v250
    %1064 = vmatpush1.msra.mxu0 %v249
    %1065 = vmatprep.subr.mxu0 %v248
    %1066 = vmatpush1.msra.mxu0 %v247
    %1067 = vmatprep.subr.mxu0 %v246
    %1068 = vmatpush1.msra.mxu0 %v245
    %1069 = vmatprep.subr.mxu0 %v244
    %1070 = vmatpush1.msra.mxu0 %v243
    %1071 = vmatprep.subr.mxu0 %v242
    %1072 = vmatpush1.msra.mxu0 %v241
    %1073 = vmatprep.subr.mxu0 %v240
    %1074 = vmatpush1.msra.mxu0 %v239
    %1075 = vmatprep.subr.mxu0 %v238
    %1076 = vmatpush1.msra.mxu0 %v237
    %1077 = vmatprep.subr.mxu0 %v236
    %1078 = vmatpush1.msra.mxu0 %v235
    %1079 = vmatprep.subr.mxu0 %v234
    %1080 = vmatpush1.msra.mxu0 %v233
    %1081 = vmatprep.subr.mxu0 %v232
    %1082 = vmatpush1.msra.mxu0 %v231
    %1083 = vmatprep.subr.mxu0 %v230
    %1084 = vmatpush1.msra.mxu0 %v229
    %1085 = vmatprep.subr.mxu0 %v228
    %1086 = vmatpush1.msra.mxu0 %v227
    %1087 = vmatprep.subr.mxu0 %v226
    %1088 = vmatpush1.msra.mxu0 %v225
    %1089 = vmatprep.subr.mxu0 %v288
    %1090 = vmatpush2.msra.mxu0 %v287
    %1091 = vmatprep.subr.mxu0 %v286
    %1092 = vmatpush2.msra.mxu0 %v285
    %1093 = vmatprep.subr.mxu0 %v284
    %1094 = vmatpush2.msra.mxu0 %v283
    %1095 = vmatprep.subr.mxu0 %v282
    %1096 = vmatpush2.msra.mxu0 %v281
    %1097 = vmatprep.subr.mxu0 %v280
    %1098 = vmatpush2.msra.mxu0 %v279
    %1099 = vmatprep.subr.mxu0 %v278
    %1100 = vmatpush2.msra.mxu0 %v277
    %1101 = vmatprep.subr.mxu0 %v276
    %1102 = vmatpush2.msra.mxu0 %v275
    %1103 = vmatprep.subr.mxu0 %v274
    %1104 = vmatpush2.msra.mxu0 %v273
    %1105 = vmatprep.subr.mxu0 %v272
    %1106 = vmatpush2.msra.mxu0 %v271
    %1107 = vmatprep.subr.mxu0 %v270
    %1108 = vmatpush2.msra.mxu0 %v269
    %1109 = vmatprep.subr.mxu0 %v268
    %1110 = vmatpush2.msra.mxu0 %v267
    %1111 = vmatprep.subr.mxu0 %v266
    %1112 = vmatpush2.msra.mxu0 %v265
    %1113 = vmatprep.subr.mxu0 %v264
    %1114 = vmatpush2.msra.mxu0 %v263
    %1115 = vmatprep.subr.mxu0 %v262
    %1116 = vmatpush2.msra.mxu0 %v261
    %1117 = vmatprep.subr.mxu0 %v260
    %1118 = vmatpush2.msra.mxu0 %v259
    %1119 = vmatprep.subr.mxu0 %v258
    %1120 = vmatpush2.msra.mxu0 %v257
    %1121 = vmatprep.mubr.f32.mxu0 %v760
    %1122 = vmatmul.mubr.f32.gmra.mxu0 %v758
    %v1123 = vpop.f32.mrf.mxu0
    %v1124 = vadd.f32 %v1053, %v1123
    %v1125 = vpop.f32.mrf.mxu0
    %v1126 = vadd.f32 %v1055, %v1125
    %1127 = vdwg.mxu0
    %1128 = vmatprep.subr.mxu0 %v320
    %1129 = vmatpush1.msra.mxu0 %v319
    %1130 = vmatprep.subr.mxu0 %v318
    %1131 = vmatpush1.msra.mxu0 %v317
    %1132 = vmatprep.subr.mxu0 %v316
    %1133 = vmatpush1.msra.mxu0 %v315
    %1134 = vmatprep.subr.mxu0 %v314
    %1135 = vmatpush1.msra.mxu0 %v313
    %1136 = vmatprep.subr.mxu0 %v312
    %1137 = vmatpush1.msra.mxu0 %v311
    %1138 = vmatprep.subr.mxu0 %v310
    %1139 = vmatpush1.msra.mxu0 %v309
    %1140 = vmatprep.subr.mxu0 %v308
    %1141 = vmatpush1.msra.mxu0 %v307
    %1142 = vmatprep.subr.mxu0 %v306
    %1143 = vmatpush1.msra.mxu0 %v305
    %1144 = vmatprep.subr.mxu0 %v304
    %1145 = vmatpush1.msra.mxu0 %v303
    %1146 = vmatprep.subr.mxu0 %v302
    %1147 = vmatpush1.msra.mxu0 %v301
    %1148 = vmatprep.subr.mxu0 %v300
    %1149 = vmatpush1.msra.mxu0 %v299
    %1150 = vmatprep.subr.mxu0 %v298
    %1151 = vmatpush1.msra.mxu0 %v297
    %1152 = vmatprep.subr.mxu0 %v296
    %1153 = vmatpush1.msra.mxu0 %v295
    %1154 = vmatprep.subr.mxu0 %v294
    %1155 = vmatpush1.msra.mxu0 %v293
    %1156 = vmatprep.subr.mxu0 %v292
    %1157 = vmatpush1.msra.mxu0 %v291
    %1158 = vmatprep.subr.mxu0 %v290
    %1159 = vmatpush1.msra.mxu0 %v289
    %1160 = vmatprep.subr.mxu0 %v352
    %1161 = vmatpush2.msra.mxu0 %v351
    %1162 = vmatprep.subr.mxu0 %v350
    %1163 = vmatpush2.msra.mxu0 %v349
    %1164 = vmatprep.subr.mxu0 %v348
    %1165 = vmatpush2.msra.mxu0 %v347
    %1166 = vmatprep.subr.mxu0 %v346
    %1167 = vmatpush2.msra.mxu0 %v345
    %1168 = vmatprep.subr.mxu0 %v344
    %1169 = vmatpush2.msra.mxu0 %v343
    %1170 = vmatprep.subr.mxu0 %v342
    %1171 = vmatpush2.msra.mxu0 %v341
    %1172 = vmatprep.subr.mxu0 %v340
    %1173 = vmatpush2.msra.mxu0 %v339
    %1174 = vmatprep.subr.mxu0 %v338
    %1175 = vmatpush2.msra.mxu0 %v337
    %1176 = vmatprep.subr.mxu0 %v336
    %1177 = vmatpush2.msra.mxu0 %v335
    %1178 = vmatprep.subr.mxu0 %v334
    %1179 = vmatpush2.msra.mxu0 %v333
    %1180 = vmatprep.subr.mxu0 %v332
    %1181 = vmatpush2.msra.mxu0 %v331
    %1182 = vmatprep.subr.mxu0 %v330
    %1183 = vmatpush2.msra.mxu0 %v329
    %1184 = vmatprep.subr.mxu0 %v328
    %1185 = vmatpush2.msra.mxu0 %v327
    %1186 = vmatprep.subr.mxu0 %v326
    %1187 = vmatpush2.msra.mxu0 %v325
    %1188 = vmatprep.subr.mxu0 %v324
    %1189 = vmatpush2.msra.mxu0 %v323
    %1190 = vmatprep.subr.mxu0 %v322
    %1191 = vmatpush2.msra.mxu0 %v321
    %1192 = vmatprep.mubr.f32.mxu0 %v776
    %1193 = vmatmul.mubr.f32.gmra.mxu0 %v768
    %v1194 = vpop.f32.mrf.mxu0
    %v1195 = vadd.f32 %v1124, %v1194
    %v1196 = vpop.f32.mrf.mxu0
    %v1197 = vadd.f32 %v1126, %v1196
    %1198 = vdwg.mxu0
    %1199 = vmatprep.subr.mxu0 %v384
    %1200 = vmatpush1.msra.mxu0 %v383
    %1201 = vmatprep.subr.mxu0 %v382
    %1202 = vmatpush1.msra.mxu0 %v381
    %1203 = vmatprep.subr.mxu0 %v380
    %1204 = vmatpush1.msra.mxu0 %v379
    %1205 = vmatprep.subr.mxu0 %v378
    %1206 = vmatpush1.msra.mxu0 %v377
    %1207 = vmatprep.subr.mxu0 %v376
    %1208 = vmatpush1.msra.mxu0 %v375
    %1209 = vmatprep.subr.mxu0 %v374
    %1210 = vmatpush1.msra.mxu0 %v373
    %1211 = vmatprep.subr.mxu0 %v372
    %1212 = vmatpush1.msra.mxu0 %v371
    %1213 = vmatprep.subr.mxu0 %v370
    %1214 = vmatpush1.msra.mxu0 %v369
    %1215 = vmatprep.subr.mxu0 %v368
    %1216 = vmatpush1.msra.mxu0 %v367
    %1217 = vmatprep.subr.mxu0 %v366
    %1218 = vmatpush1.msra.mxu0 %v365
    %1219 = vmatprep.subr.mxu0 %v364
    %1220 = vmatpush1.msra.mxu0 %v363
    %1221 = vmatprep.subr.mxu0 %v362
    %1222 = vmatpush1.msra.mxu0 %v361
    %1223 = vmatprep.subr.mxu0 %v360
    %1224 = vmatpush1.msra.mxu0 %v359
    %1225 = vmatprep.subr.mxu0 %v358
    %1226 = vmatpush1.msra.mxu0 %v357
    %1227 = vmatprep.subr.mxu0 %v356
    %1228 = vmatpush1.msra.mxu0 %v355
    %1229 = vmatprep.subr.mxu0 %v354
    %1230 = vmatpush1.msra.mxu0 %v353
    %1231 = vmatprep.subr.mxu0 %v416
    %1232 = vmatpush2.msra.mxu0 %v415
    %1233 = vmatprep.subr.mxu0 %v414
    %1234 = vmatpush2.msra.mxu0 %v413
    %1235 = vmatprep.subr.mxu0 %v412
    %1236 = vmatpush2.msra.mxu0 %v411
    %1237 = vmatprep.subr.mxu0 %v410
    %1238 = vmatpush2.msra.mxu0 %v409
    %1239 = vmatprep.subr.mxu0 %v408
    %1240 = vmatpush2.msra.mxu0 %v407
    %1241 = vmatprep.subr.mxu0 %v406
    %1242 = vmatpush2.msra.mxu0 %v405
    %1243 = vmatprep.subr.mxu0 %v404
    %1244 = vmatpush2.msra.mxu0 %v403
    %1245 = vmatprep.subr.mxu0 %v402
    %1246 = vmatpush2.msra.mxu0 %v401
    %1247 = vmatprep.subr.mxu0 %v400
    %1248 = vmatpush2.msra.mxu0 %v399
    %1249 = vmatprep.subr.mxu0 %v398
    %1250 = vmatpush2.msra.mxu0 %v397
    %1251 = vmatprep.subr.mxu0 %v396
    %1252 = vmatpush2.msra.mxu0 %v395
    %1253 = vmatprep.subr.mxu0 %v394
    %1254 = vmatpush2.msra.mxu0 %v393
    %1255 = vmatprep.subr.mxu0 %v392
    %1256 = vmatpush2.msra.mxu0 %v391
    %1257 = vmatprep.subr.mxu0 %v390
    %1258 = vmatpush2.msra.mxu0 %v389
    %1259 = vmatprep.subr.mxu0 %v388
    %1260 = vmatpush2.msra.mxu0 %v387
    %1261 = vmatprep.subr.mxu0 %v386
    %1262 = vmatpush2.msra.mxu0 %v385
    %1263 = vmatprep.mubr.f32.mxu0 %v777
    %1264 = vmatmul.mubr.f32.gmra.mxu0 %v775
    %v1265 = vpop.f32.mrf.mxu0
    %v1266 = vadd.f32 %v1195, %v1265
    %v1267 = vpop.f32.mrf.mxu0
    %v1268 = vadd.f32 %v1197, %v1267
    %1269 = vdwg.mxu0
    %1270 = vmatprep.subr.mxu0 %v448
    %1271 = vmatpush1.msra.mxu0 %v447
    %1272 = vmatprep.subr.mxu0 %v446
    %1273 = vmatpush1.msra.mxu0 %v445
    %1274 = vmatprep.subr.mxu0 %v444
    %1275 = vmatpush1.msra.mxu0 %v443
    %1276 = vmatprep.subr.mxu0 %v442
    %1277 = vmatpush1.msra.mxu0 %v441
    %1278 = vmatprep.subr.mxu0 %v440
    %1279 = vmatpush1.msra.mxu0 %v439
    %1280 = vmatprep.subr.mxu0 %v438
    %1281 = vmatpush1.msra.mxu0 %v437
    %1282 = vmatprep.subr.mxu0 %v436
    %1283 = vmatpush1.msra.mxu0 %v435
    %1284 = vmatprep.subr.mxu0 %v434
    %1285 = vmatpush1.msra.mxu0 %v433
    %1286 = vmatprep.subr.mxu0 %v432
    %1287 = vmatpush1.msra.mxu0 %v431
    %1288 = vmatprep.subr.mxu0 %v430
    %1289 = vmatpush1.msra.mxu0 %v429
    %1290 = vmatprep.subr.mxu0 %v428
    %1291 = vmatpush1.msra.mxu0 %v427
    %1292 = vmatprep.subr.mxu0 %v426
    %1293 = vmatpush1.msra.mxu0 %v425
    %1294 = vmatprep.subr.mxu0 %v424
    %1295 = vmatpush1.msra.mxu0 %v423
    %1296 = vmatprep.subr.mxu0 %v422
    %1297 = vmatpush1.msra.mxu0 %v421
    %1298 = vmatprep.subr.mxu0 %v420
    %1299 = vmatpush1.msra.mxu0 %v419
    %1300 = vmatprep.subr.mxu0 %v418
    %1301 = vmatpush1.msra.mxu0 %v417
    %1302 = vmatprep.subr.mxu0 %v480
    %1303 = vmatpush2.msra.mxu0 %v479
    %1304 = vmatprep.subr.mxu0 %v478
    %1305 = vmatpush2.msra.mxu0 %v477
    %1306 = vmatprep.subr.mxu0 %v476
    %1307 = vmatpush2.msra.mxu0 %v475
    %1308 = vmatprep.subr.mxu0 %v474
    %1309 = vmatpush2.msra.mxu0 %v473
    %1310 = vmatprep.subr.mxu0 %v472
    %1311 = vmatpush2.msra.mxu0 %v471
    %1312 = vmatprep.subr.mxu0 %v470
    %1313 = vmatpush2.msra.mxu0 %v469
    %1314 = vmatprep.subr.mxu0 %v468
    %1315 = vmatpush2.msra.mxu0 %v467
    %1316 = vmatprep.subr.mxu0 %v466
    %1317 = vmatpush2.msra.mxu0 %v465
    %1318 = vmatprep.subr.mxu0 %v464
    %1319 = vmatpush2.msra.mxu0 %v463
    %1320 = vmatprep.subr.mxu0 %v462
    %1321 = vmatpush2.msra.mxu0 %v461
    %1322 = vmatprep.subr.mxu0 %v460
    %1323 = vmatpush2.msra.mxu0 %v459
    %1324 = vmatprep.subr.mxu0 %v458
    %1325 = vmatpush2.msra.mxu0 %v457
    %1326 = vmatprep.subr.mxu0 %v456
    %1327 = vmatpush2.msra.mxu0 %v455
    %1328 = vmatprep.subr.mxu0 %v454
    %1329 = vmatpush2.msra.mxu0 %v453
    %1330 = vmatprep.subr.mxu0 %v452
    %1331 = vmatpush2.msra.mxu0 %v451
    %1332 = vmatprep.subr.mxu0 %v450
    %1333 = vmatpush2.msra.mxu0 %v449
    %1334 = vmatprep.mubr.f32.mxu0 %v793
    %1335 = vmatmul.mubr.f32.gmra.mxu0 %v785
    %v1336 = vpop.f32.mrf.mxu0
    %v1337 = vadd.f32 %v1266, %v1336
    %v1338 = vpop.f32.mrf.mxu0
    %v1339 = vadd.f32 %v1268, %v1338
    %1340 = vdwg.mxu0
    %1341 = vmatprep.subr.mxu0 %v512
    %1342 = vmatpush1.msra.mxu0 %v511
    %1343 = vmatprep.subr.mxu0 %v510
    %1344 = vmatpush1.msra.mxu0 %v509
    %1345 = vmatprep.subr.mxu0 %v508
    %1346 = vmatpush1.msra.mxu0 %v507
    %1347 = vmatprep.subr.mxu0 %v506
    %1348 = vmatpush1.msra.mxu0 %v505
    %1349 = vmatprep.subr.mxu0 %v504
    %1350 = vmatpush1.msra.mxu0 %v503
    %1351 = vmatprep.subr.mxu0 %v502
    %1352 = vmatpush1.msra.mxu0 %v501
    %1353 = vmatprep.subr.mxu0 %v500
    %1354 = vmatpush1.msra.mxu0 %v499
    %1355 = vmatprep.subr.mxu0 %v498
    %1356 = vmatpush1.msra.mxu0 %v497
    %1357 = vmatprep.subr.mxu0 %v496
    %1358 = vmatpush1.msra.mxu0 %v495
    %1359 = vmatprep.subr.mxu0 %v494
    %1360 = vmatpush1.msra.mxu0 %v493
    %1361 = vmatprep.subr.mxu0 %v492
    %1362 = vmatpush1.msra.mxu0 %v491
    %1363 = vmatprep.subr.mxu0 %v490
    %1364 = vmatpush1.msra.mxu0 %v489
    %1365 = vmatprep.subr.mxu0 %v488
    %1366 = vmatpush1.msra.mxu0 %v487
    %1367 = vmatprep.subr.mxu0 %v486
    %1368 = vmatpush1.msra.mxu0 %v485
    %1369 = vmatprep.subr.mxu0 %v484
    %1370 = vmatpush1.msra.mxu0 %v483
    %1371 = vmatprep.subr.mxu0 %v482
    %1372 = vmatpush1.msra.mxu0 %v481
    %1373 = vmatprep.subr.mxu0 %v544
    %1374 = vmatpush2.msra.mxu0 %v543
    %1375 = vmatprep.subr.mxu0 %v542
    %1376 = vmatpush2.msra.mxu0 %v541
    %1377 = vmatprep.subr.mxu0 %v540
    %1378 = vmatpush2.msra.mxu0 %v539
    %1379 = vmatprep.subr.mxu0 %v538
    %1380 = vmatpush2.msra.mxu0 %v537
    %1381 = vmatprep.subr.mxu0 %v536
    %1382 = vmatpush2.msra.mxu0 %v535
    %1383 = vmatprep.subr.mxu0 %v534
    %1384 = vmatpush2.msra.mxu0 %v533
    %1385 = vmatprep.subr.mxu0 %v532
    %1386 = vmatpush2.msra.mxu0 %v531
    %1387 = vmatprep.subr.mxu0 %v530
    %1388 = vmatpush2.msra.mxu0 %v529
    %1389 = vmatprep.subr.mxu0 %v528
    %1390 = vmatpush2.msra.mxu0 %v527
    %1391 = vmatprep.subr.mxu0 %v526
    %1392 = vmatpush2.msra.mxu0 %v525
    %1393 = vmatprep.subr.mxu0 %v524
    %1394 = vmatpush2.msra.mxu0 %v523
    %1395 = vmatprep.subr.mxu0 %v522
    %1396 = vmatpush2.msra.mxu0 %v521
    %1397 = vmatprep.subr.mxu0 %v520
    %1398 = vmatpush2.msra.mxu0 %v519
    %1399 = vmatprep.subr.mxu0 %v518
    %1400 = vmatpush2.msra.mxu0 %v517
    %1401 = vmatprep.subr.mxu0 %v516
    %1402 = vmatpush2.msra.mxu0 %v515
    %1403 = vmatprep.subr.mxu0 %v514
    %1404 = vmatpush2.msra.mxu0 %v513
    %1405 = vmatprep.mubr.f32.mxu0 %v794
    %1406 = vmatmul.mubr.f32.gmra.mxu0 %v792
    %v1407 = vpop.f32.mrf.mxu0
    %v1408 = vadd.f32 %v1337, %v1407
    %v1409 = vpop.f32.mrf.mxu0
    %v1410 = vadd.f32 %v1339, %v1409
    %1411 = vdwg.mxu0
    %1412 = vmatprep.subr.mxu0 %v576
    %1413 = vmatpush1.msra.mxu0 %v575
    %1414 = vmatprep.subr.mxu0 %v574
    %1415 = vmatpush1.msra.mxu0 %v573
    %1416 = vmatprep.subr.mxu0 %v572
    %1417 = vmatpush1.msra.mxu0 %v571
    %1418 = vmatprep.subr.mxu0 %v570
    %1419 = vmatpush1.msra.mxu0 %v569
    %1420 = vmatprep.subr.mxu0 %v568
    %1421 = vmatpush1.msra.mxu0 %v567
    %1422 = vmatprep.subr.mxu0 %v566
    %1423 = vmatpush1.msra.mxu0 %v565
    %1424 = vmatprep.subr.mxu0 %v564
    %1425 = vmatpush1.msra.mxu0 %v563
    %1426 = vmatprep.subr.mxu0 %v562
    %1427 = vmatpush1.msra.mxu0 %v561
    %1428 = vmatprep.subr.mxu0 %v560
    %1429 = vmatpush1.msra.mxu0 %v559
    %1430 = vmatprep.subr.mxu0 %v558
    %1431 = vmatpush1.msra.mxu0 %v557
    %1432 = vmatprep.subr.mxu0 %v556
    %1433 = vmatpush1.msra.mxu0 %v555
    %1434 = vmatprep.subr.mxu0 %v554
    %1435 = vmatpush1.msra.mxu0 %v553
    %1436 = vmatprep.subr.mxu0 %v552
    %1437 = vmatpush1.msra.mxu0 %v551
    %1438 = vmatprep.subr.mxu0 %v550
    %1439 = vmatpush1.msra.mxu0 %v549
    %1440 = vmatprep.subr.mxu0 %v548
    %1441 = vmatpush1.msra.mxu0 %v547
    %1442 = vmatprep.subr.mxu0 %v546
    %1443 = vmatpush1.msra.mxu0 %v545
    %1444 = vmatprep.subr.mxu0 %v608
    %1445 = vmatpush2.msra.mxu0 %v607
    %1446 = vmatprep.subr.mxu0 %v606
    %1447 = vmatpush2.msra.mxu0 %v605
    %1448 = vmatprep.subr.mxu0 %v604
    %1449 = vmatpush2.msra.mxu0 %v603
    %1450 = vmatprep.subr.mxu0 %v602
    %1451 = vmatpush2.msra.mxu0 %v601
    %1452 = vmatprep.subr.mxu0 %v600
    %1453 = vmatpush2.msra.mxu0 %v599
    %1454 = vmatprep.subr.mxu0 %v598
    %1455 = vmatpush2.msra.mxu0 %v597
    %1456 = vmatprep.subr.mxu0 %v596
    %1457 = vmatpush2.msra.mxu0 %v595
    %1458 = vmatprep.subr.mxu0 %v594
    %1459 = vmatpush2.msra.mxu0 %v593
    %1460 = vmatprep.subr.mxu0 %v592
    %1461 = vmatpush2.msra.mxu0 %v591
    %1462 = vmatprep.subr.mxu0 %v590
    %1463 = vmatpush2.msra.mxu0 %v589
    %1464 = vmatprep.subr.mxu0 %v588
    %1465 = vmatpush2.msra.mxu0 %v587
    %1466 = vmatprep.subr.mxu0 %v586
    %1467 = vmatpush2.msra.mxu0 %v585
    %1468 = vmatprep.subr.mxu0 %v584
    %1469 = vmatpush2.msra.mxu0 %v583
    %1470 = vmatprep.subr.mxu0 %v582
    %1471 = vmatpush2.msra.mxu0 %v581
    %1472 = vmatprep.subr.mxu0 %v580
    %1473 = vmatpush2.msra.mxu0 %v579
    %1474 = vmatprep.subr.mxu0 %v578
    %1475 = vmatpush2.msra.mxu0 %v577
    %1476 = vmatprep.mubr.f32.mxu0 %v810
    %1477 = vmatmul.mubr.f32.gmra.mxu0 %v802
    %v1478 = vpop.f32.mrf.mxu0
    %v1479 = vadd.f32 %v1408, %v1478
    %v1480 = vpop.f32.mrf.mxu0
    %v1481 = vadd.f32 %v1410, %v1480
    %1482 = vdwg.mxu0
    %1483 = vmatprep.subr.mxu0 %v640
    %1484 = vmatpush1.msra.mxu0 %v639
    %1485 = vmatprep.subr.mxu0 %v638
    %1486 = vmatpush1.msra.mxu0 %v637
    %1487 = vmatprep.subr.mxu0 %v636
    %1488 = vmatpush1.msra.mxu0 %v635
    %1489 = vmatprep.subr.mxu0 %v634
    %1490 = vmatpush1.msra.mxu0 %v633
    %1491 = vmatprep.subr.mxu0 %v632
    %1492 = vmatpush1.msra.mxu0 %v631
    %1493 = vmatprep.subr.mxu0 %v630
    %1494 = vmatpush1.msra.mxu0 %v629
    %1495 = vmatprep.subr.mxu0 %v628
    %1496 = vmatpush1.msra.mxu0 %v627
    %1497 = vmatprep.subr.mxu0 %v626
    %1498 = vmatpush1.msra.mxu0 %v625
    %1499 = vmatprep.subr.mxu0 %v624
    %1500 = vmatpush1.msra.mxu0 %v623
    %1501 = vmatprep.subr.mxu0 %v622
    %1502 = vmatpush1.msra.mxu0 %v621
    %1503 = vmatprep.subr.mxu0 %v620
    %1504 = vmatpush1.msra.mxu0 %v619
    %1505 = vmatprep.subr.mxu0 %v618
    %1506 = vmatpush1.msra.mxu0 %v617
    %1507 = vmatprep.subr.mxu0 %v616
    %1508 = vmatpush1.msra.mxu0 %v615
    %1509 = vmatprep.subr.mxu0 %v614
    %1510 = vmatpush1.msra.mxu0 %v613
    %1511 = vmatprep.subr.mxu0 %v612
    %1512 = vmatpush1.msra.mxu0 %v611
    %1513 = vmatprep.subr.mxu0 %v610
    %1514 = vmatpush1.msra.mxu0 %v609
    %1515 = vmatprep.subr.mxu0 %v672
    %1516 = vmatpush2.msra.mxu0 %v671
    %1517 = vmatprep.subr.mxu0 %v670
    %1518 = vmatpush2.msra.mxu0 %v669
    %1519 = vmatprep.subr.mxu0 %v668
    %1520 = vmatpush2.msra.mxu0 %v667
    %1521 = vmatprep.subr.mxu0 %v666
    %1522 = vmatpush2.msra.mxu0 %v665
    %1523 = vmatprep.subr.mxu0 %v664
    %1524 = vmatpush2.msra.mxu0 %v663
    %1525 = vmatprep.subr.mxu0 %v662
    %1526 = vmatpush2.msra.mxu0 %v661
    %1527 = vmatprep.subr.mxu0 %v660
    %1528 = vmatpush2.msra.mxu0 %v659
    %1529 = vmatprep.subr.mxu0 %v658
    %1530 = vmatpush2.msra.mxu0 %v657
    %1531 = vmatprep.subr.mxu0 %v656
    %1532 = vmatpush2.msra.mxu0 %v655
    %1533 = vmatprep.subr.mxu0 %v654
    %1534 = vmatpush2.msra.mxu0 %v653
    %1535 = vmatprep.subr.mxu0 %v652
    %1536 = vmatpush2.msra.mxu0 %v651
    %1537 = vmatprep.subr.mxu0 %v650
    %1538 = vmatpush2.msra.mxu0 %v649
    %1539 = vmatprep.subr.mxu0 %v648
    %1540 = vmatpush2.msra.mxu0 %v647
    %1541 = vmatprep.subr.mxu0 %v646
    %1542 = vmatpush2.msra.mxu0 %v645
    %1543 = vmatprep.subr.mxu0 %v644
    %1544 = vmatpush2.msra.mxu0 %v643
    %1545 = vmatprep.subr.mxu0 %v642
    %1546 = vmatpush2.msra.mxu0 %v641
    %1547 = vmatprep.mubr.f32.mxu0 %v811
    %1548 = vmatmul.mubr.f32.gmra.mxu0 %v809
    %v1549 = vpop.f32.mrf.mxu0
    %v1550 = vadd.f32 %v1479, %v1549
    %v1551 = vpop.f32.mrf.mxu0
    %v1552 = vadd.f32 %v1481, %v1551
    %1553 = vdwg.mxu0
    %1554 = vmatprep.subr.mxu0 %v704
    %1555 = vmatpush1.msra.mxu0 %v703
    %1556 = vmatprep.subr.mxu0 %v702
    %1557 = vmatpush1.msra.mxu0 %v701
    %1558 = vmatprep.subr.mxu0 %v700
    %1559 = vmatpush1.msra.mxu0 %v699
    %1560 = vmatprep.subr.mxu0 %v698
    %1561 = vmatpush1.msra.mxu0 %v697
    %1562 = vmatprep.subr.mxu0 %v696
    %1563 = vmatpush1.msra.mxu0 %v695
    %1564 = vmatprep.subr.mxu0 %v694
    %1565 = vmatpush1.msra.mxu0 %v693
    %1566 = vmatprep.subr.mxu0 %v692
    %1567 = vmatpush1.msra.mxu0 %v691
    %1568 = vmatprep.subr.mxu0 %v690
    %1569 = vmatpush1.msra.mxu0 %v689
    %1570 = vmatprep.subr.mxu0 %v688
    %1571 = vmatpush1.msra.mxu0 %v687
    %1572 = vmatprep.subr.mxu0 %v686
    %1573 = vmatpush1.msra.mxu0 %v685
    %1574 = vmatprep.subr.mxu0 %v684
    %1575 = vmatpush1.msra.mxu0 %v683
    %1576 = vmatprep.subr.mxu0 %v682
    %1577 = vmatpush1.msra.mxu0 %v681
    %1578 = vmatprep.subr.mxu0 %v680
    %1579 = vmatpush1.msra.mxu0 %v679
    %1580 = vmatprep.subr.mxu0 %v678
    %1581 = vmatpush1.msra.mxu0 %v677
    %1582 = vmatprep.subr.mxu0 %v676
    %1583 = vmatpush1.msra.mxu0 %v675
    %1584 = vmatprep.subr.mxu0 %v674
    %1585 = vmatpush1.msra.mxu0 %v673
    %1586 = vmatprep.subr.mxu0 0.0
    %1587 = vmatpush2.msra.mxu0 0.0
    %1588 = vmatprep.subr.mxu0 0.0
    %1589 = vmatpush2.msra.mxu0 0.0
    %1590 = vmatprep.subr.mxu0 0.0
    %1591 = vmatpush2.msra.mxu0 0.0
    %1592 = vmatprep.subr.mxu0 0.0
    %1593 = vmatpush2.msra.mxu0 0.0
    %1594 = vmatprep.subr.mxu0 0.0
    %1595 = vmatpush2.msra.mxu0 0.0
    %1596 = vmatprep.subr.mxu0 0.0
    %1597 = vmatpush2.msra.mxu0 0.0
    %1598 = vmatprep.subr.mxu0 0.0
    %1599 = vmatpush2.msra.mxu0 0.0
    %1600 = vmatprep.subr.mxu0 0.0
    %1601 = vmatpush2.msra.mxu0 0.0
    %1602 = vmatprep.subr.mxu0 0.0
    %1603 = vmatpush2.msra.mxu0 0.0
    %1604 = vmatprep.subr.mxu0 0.0
    %1605 = vmatpush2.msra.mxu0 0.0
    %1606 = vmatprep.subr.mxu0 0.0
    %1607 = vmatpush2.msra.mxu0 0.0
    %1608 = vmatprep.subr.mxu0 0.0
    %1609 = vmatpush2.msra.mxu0 0.0
    %1610 = vmatprep.subr.mxu0 0.0
    %1611 = vmatpush2.msra.mxu0 0.0
    %1612 = vmatprep.subr.mxu0 0.0
    %1613 = vmatpush2.msra.mxu0 0.0
    %1614 = vmatprep.subr.mxu0 %v708
    %1615 = vmatpush2.msra.mxu0 %v707
    %1616 = vmatprep.subr.mxu0 %v706
    %1617 = vmatpush2.msra.mxu0 %v705
    %1618 = vmatprep.mubr.f32.mxu0 %v842
    %1619 = vmatmul.mubr.f32.gmra.mxu0 %v818
    %v1620 = vpop.f32.mrf.mxu0
    %v1621 = vadd.f32 %v1550, %v1620
    %v1622 = vpop.f32.mrf.mxu0
    %v1623 = vadd.f32 %v1552, %v1622
    %1624 = vdwg.mxu0
    %v1625 = vmax.f32 %v1621, 0.0
    %v1626 = vmax.f32 %v1623, 0.0
    %v1627 = vld [vmem:[%s3] sm:$0xff]
    %v1628 = vld [vmem:[%s3 + $0x8] sm:$0xff]
    %v1629 = vld [vmem:[%s3 + $0x10] sm:$0xff]
    %v1630 = vld [vmem:[%s3 + $0x18] sm:$0xff]
    %v1631 = vld [vmem:[%s3 + $0x20] sm:$0xff]
    %v1632 = vld [vmem:[%s3 + $0x28] sm:$0xff]
    %v1633 = vld [vmem:[%s3 + $0x30] sm:$0xff]
    %v1634 = vld [vmem:[%s3 + $0x38] sm:$0xff]
    %v1635 = vld [vmem:[%s3 + $0x40] sm:$0xff]
    %v1636 = vld [vmem:[%s3 + $0x48] sm:$0xff]
    %v1637 = vld [vmem:[%s3 + $0x50] sm:$0xff]
    %v1638 = vld [vmem:[%s3 + $0x58] sm:$0xff]
    %v1639 = vld [vmem:[%s3 + $0x60] sm:$0xff]
    %v1640 = vld [vmem:[%s3 + $0x68] sm:$0xff]
    %v1641 = vld [vmem:[%s3 + $0x70] sm:$0xff]
    %v1642 = vld [vmem:[%s3 + $0x78] sm:$0xff]
    %v1643 = vld [vmem:[%s3 + $0x80] sm:$0x3]
    %v1644 = vld [vmem:[%s4] sm:$0x1]
    %v1646 = vlaneseq
    %v1647 = vshrl.u32 %v1646, 7
    %v1648 = vsub.s32 0, %v1647
    %v1649 = vrot.slane %v1644, %v1648
    %vm1651 = vcmask 15360
    %v1653 = vsel %vm1651, %v1626, 0
    %vm1655 = vcmask 1041408
    %v1657 = vsel %vm1655, %v1643, 0
    %1659 = vmatprep.subr.mxu0 0.0
    %1660 = vmatpush1.msra.mxu0 %v1642
    %1661 = vmatprep.subr.mxu0 0.0
    %1662 = vmatpush1.msra.mxu0 %v1641
    %1663 = vmatprep.subr.mxu0 0.0
    %1664 = vmatpush1.msra.mxu0 %v1640
    %1665 = vmatprep.subr.mxu0 0.0
    %1666 = vmatpush1.msra.mxu0 %v1639
    %1667 = vmatprep.subr.mxu0 0.0
    %1668 = vmatpush1.msra.mxu0 %v1638
    %1669 = vmatprep.subr.mxu0 0.0
    %1670 = vmatpush1.msra.mxu0 %v1637
    %1671 = vmatprep.subr.mxu0 0.0
    %1672 = vmatpush1.msra.mxu0 %v1636
    %1673 = vmatprep.subr.mxu0 0.0
    %1674 = vmatpush1.msra.mxu0 %v1635
    %1675 = vmatprep.subr.mxu0 0.0
    %1676 = vmatpush1.msra.mxu0 %v1634
    %1677 = vmatprep.subr.mxu0 0.0
    %1678 = vmatpush1.msra.mxu0 %v1633
    %1679 = vmatprep.subr.mxu0 0.0
    %1680 = vmatpush1.msra.mxu0 %v1632
    %1681 = vmatprep.subr.mxu0 0.0
    %1682 = vmatpush1.msra.mxu0 %v1631
    %1683 = vmatprep.subr.mxu0 0.0
    %1684 = vmatpush1.msra.mxu0 %v1630
    %1685 = vmatprep.subr.mxu0 0.0
    %1686 = vmatpush1.msra.mxu0 %v1629
    %1687 = vmatprep.subr.mxu0 0.0
    %1688 = vmatpush1.msra.mxu0 %v1628
    %1689 = vmatprep.subr.mxu0 0.0
    %1690 = vmatpush1.msra.mxu0 %v1627
    %1691 = vmatprep.subr.mxu0 0.0
    %1692 = vmatpush2.msra.mxu0 0.0
    %1693 = vmatprep.subr.mxu0 0.0
    %1694 = vmatpush2.msra.mxu0 0.0
    %1695 = vmatprep.subr.mxu0 0.0
    %1696 = vmatpush2.msra.mxu0 0.0
    %1697 = vmatprep.subr.mxu0 0.0
    %1698 = vmatpush2.msra.mxu0 0.0
    %1699 = vmatprep.subr.mxu0 0.0
    %1700 = vmatpush2.msra.mxu0 0.0
    %1701 = vmatprep.subr.mxu0 0.0
    %1702 = vmatpush2.msra.mxu0 0.0
    %1703 = vmatprep.subr.mxu0 0.0
    %1704 = vmatpush2.msra.mxu0 0.0
    %1705 = vmatprep.subr.mxu0 0.0
    %1706 = vmatpush2.msra.mxu0 0.0
    %1707 = vmatprep.subr.mxu0 0.0
    %1708 = vmatpush2.msra.mxu0 0.0
    %1709 = vmatprep.subr.mxu0 0.0
    %1710 = vmatpush2.msra.mxu0 0.0
    %1711 = vmatprep.subr.mxu0 0.0
    %1712 = vmatpush2.msra.mxu0 0.0
    %1713 = vmatprep.subr.mxu0 0.0
    %1714 = vmatpush2.msra.mxu0 0.0
    %1715 = vmatprep.subr.mxu0 0.0
    %1716 = vmatpush2.msra.mxu0 0.0
    %1717 = vmatprep.subr.mxu0 0.0
    %1718 = vmatpush2.msra.mxu0 0.0
    %1719 = vmatprep.subr.mxu0 0.0
    %1720 = vmatpush2.msra.mxu0 0.0
    %1721 = vmatprep.subr.mxu0 0.0
    %1722 = vmatpush2.msra.mxu0 %v1657
    %1723 = vmatprep.mubr.f32.mxu0 %v1653
    %1724 = vmatmul.mubr.f32.gmra.mxu0 %v1625
    %v1725 = vpop.f32.mrf.mxu0
    %v1726 = vadd.f32 %v1649, %v1725
    %v1727 = vpop.f32.mrf.mxu0
    %1728 = vdwg.mxu0
    %v1729 = vmax.f32 %v1726, 0.0
    %v1730 = vld [vmem:[%s5] sm:$0xff]
    %v1731 = vld [vmem:[%s5 + $0x8] sm:$0xff]
    %v1732 = vld [vmem:[%s5 + $0x10] sm:$0xff]
    %v1733 = vld [vmem:[%s5 + $0x18] sm:$0xff]
    %v1734 = vld [vmem:[%s5 + $0x20] sm:$0xff]
    %v1735 = vld [vmem:[%s5 + $0x28] sm:$0xff]
    %v1736 = vld [vmem:[%s5 + $0x30] sm:$0xff]
    %v1737 = vld [vmem:[%s5 + $0x38] sm:$0xff]
    %v1738 = vld [vmem:[%s5 + $0x40] sm:$0xff]
    %v1739 = vld [vmem:[%s6] sm:$0x1]
    %v1741 = vlaneseq
    %v1742 = vshrl.u32 %v1741, 7
    %v1743 = vsub.s32 0, %v1742
    %v1744 = vrot.slane %v1739, %v1743
    %vm1746 = vcmask 588800
    %v1748 = vsel %vm1746, %v1729, 0
    %1750 = vmatprep.subr.mxu0 0.0
    %1751 = vmatpush1.msra.mxu0 0.0
    %1752 = vmatprep.subr.mxu0 0.0
    %1753 = vmatpush1.msra.mxu0 0.0
    %1754 = vmatprep.subr.mxu0 0.0
    %1755 = vmatpush1.msra.mxu0 0.0
    %1756 = vmatprep.subr.mxu0 0.0
    %1757 = vmatpush1.msra.mxu0 0.0
    %1758 = vmatprep.subr.mxu0 0.0
    %1759 = vmatpush1.msra.mxu0 0.0
    %1760 = vmatprep.subr.mxu0 0.0
    %1761 = vmatpush1.msra.mxu0 0.0
    %1762 = vmatprep.subr.mxu0 0.0
    %1763 = vmatpush1.msra.mxu0 0.0
    %1764 = vmatprep.subr.mxu0 0.0
    %1765 = vmatpush1.msra.mxu0 %v1738
    %1766 = vmatprep.subr.mxu0 0.0
    %1767 = vmatpush1.msra.mxu0 %v1737
    %1768 = vmatprep.subr.mxu0 0.0
    %1769 = vmatpush1.msra.mxu0 %v1736
    %1770 = vmatprep.subr.mxu0 0.0
    %1771 = vmatpush1.msra.mxu0 %v1735
    %1772 = vmatprep.subr.mxu0 0.0
    %1773 = vmatpush1.msra.mxu0 %v1734
    %1774 = vmatprep.subr.mxu0 0.0
    %1775 = vmatpush1.msra.mxu0 %v1733
    %1776 = vmatprep.subr.mxu0 0.0
    %1777 = vmatpush1.msra.mxu0 %v1732
    %1778 = vmatprep.subr.mxu0 0.0
    %1779 = vmatpush1.msra.mxu0 %v1731
    %1780 = vmatprep.subr.mxu0 0.0
    %1781 = vmatpush1.msra.mxu0 %v1730
    %1782 = vmatprep.subr.mxu0 0.0
    %1783 = vmatpush2.msra.mxu0 0.0
    %1784 = vmatprep.subr.mxu0 0.0
    %1785 = vmatpush2.msra.mxu0 0.0
    %1786 = vmatprep.subr.mxu0 0.0
    %1787 = vmatpush2.msra.mxu0 0.0
    %1788 = vmatprep.subr.mxu0 0.0
    %1789 = vmatpush2.msra.mxu0 0.0
    %1790 = vmatprep.subr.mxu0 0.0
    %1791 = vmatpush2.msra.mxu0 0.0
    %1792 = vmatprep.subr.mxu0 0.0
    %1793 = vmatpush2.msra.mxu0 0.0
    %1794 = vmatprep.subr.mxu0 0.0
    %1795 = vmatpush2.msra.mxu0 0.0
    %1796 = vmatprep.subr.mxu0 0.0
    %1797 = vmatpush2.msra.mxu0 0.0
    %1798 = vmatprep.subr.mxu0 0.0
    %1799 = vmatpush2.msra.mxu0 0.0
    %1800 = vmatprep.subr.mxu0 0.0
    %1801 = vmatpush2.msra.mxu0 0.0
    %1802 = vmatprep.subr.mxu0 0.0
    %1803 = vmatpush2.msra.mxu0 0.0
    %1804 = vmatprep.subr.mxu0 0.0
    %1805 = vmatpush2.msra.mxu0 0.0
    %1806 = vmatprep.subr.mxu0 0.0
    %1807 = vmatpush2.msra.mxu0 0.0
    %1808 = vmatprep.subr.mxu0 0.0
    %1809 = vmatpush2.msra.mxu0 0.0
    %1810 = vmatprep.subr.mxu0 0.0
    %1811 = vmatpush2.msra.mxu0 0.0
    %1812 = vmatprep.subr.mxu0 0.0
    %1813 = vmatpush2.msra.mxu0 0.0
    %1814 = vmatprep.mubr.f32.mxu0 0.0
    %1815 = vmatmul.mubr.f32.gmra.mxu0 %v1748
    %v1816 = vpop.f32.mrf.mxu0
    %v1817 = vadd.f32 %v1744, %v1816
    %v1818 = vpop.f32.mrf.mxu0
    %1819 = vdwg.mxu0
    %v1820 = vxor.u32 %v1817, 2147483648
    %v1821 = vmul.f32 %v1820, 1.442695
    %v1822 = vpow.pop %v1821
    %v1823 = vadd.f32 %v1822, 1.0
    %v1824 = vrcp.pop %v1823
    %v1825 = vmul.f32 1.0, %v1824
    %vm1826 = vcmask 74752
    %1827 = vst.msk [vmem:[#allocation2] sm:$0x3] %vm1826, %v1825
    // Predicated region
    $region30: #{conv_nn_forward.3} parent=1 // pred_check
      _
    $region31: #{conv_nn_forward.3} parent=1 // pred_check_branch
      %1829 = sbr.rel (0) target = $region33
    $region32: #{conv_nn_forward.3} parent=1 // pred_region
      %s1831 = ssub.s32 32, 32
      %1832 = vsyncadd [#allocation3], %s1831
      %s1834 = sshll.u32 [#allocation2], 4
      %s1835 = int_to_ptr.vmem [resolvable:$true] %s1834
      %1837 = dma.vmem_to_hbm [thread:$0]  %s1835, 32, %s7, [#allocation3]
    $region33: #{conv_nn_forward.3} parent=1 // pred_fallthru
      _
    // Predicated region
    $region34: #{conv_nn_forward.3} parent=1 // pred_check
      _
    $region35: #{conv_nn_forward.3} parent=1 // pred_check_branch
      %1839 = sbr.rel (0) target = $region37
    $region36: #{conv_nn_forward.3} parent=1 // pred_region
      %1840 = dma.done [#allocation3], 32
    $region37: #{conv_nn_forward.3} parent=1 // pred_fallthru
      _
    %1841 = vsyncpa [#allocation3], 1

</llo_original>
